<compile_context>
chip_gen: v7x
topology: tpu7x:2x2x1
jax: 0.10.0
libtpu: 0.0.40
codegen_flags: <defaults>
</compile_context>

<pallas_src>
import functools

import jax
import jax.numpy as jnp
from jax import lax
from jax.experimental import pallas as pl
from jax.experimental.pallas import tpu as pltpu


def _ceil128(n):
    return ((n + 127) // 128) * 128


def nmr_gcn_kernel(a_ref, x_ref, pk_ref, out_ref, *, in_size, h1, out_size):
    f32 = jnp.float32
    G, N, _ = a_ref.shape

    # raw 0/1 adjacency streamed as bf16 (exact), upcast once for f32 math
    a = a_ref[...].astype(f32)                            # (G, N, N)
    x = x_ref[...]                                        # (G, N, in_size) f32

    # ---- unpack the single constant operand (fused weights + biases) ----
    r0 = in_size
    r1 = in_size + h1
    w1g = pk_ref[0:r0, 0:h1]                              # (in, h1)  = w1 @ wg1
    wf = pk_ref[r0:r1, 0:out_size]                        # (h1, out) = wg2 @ w3 @ w4
    b1g = pk_ref[r1:r1 + 1, 0:h1]                         # (1, h1)   = b1 @ wg1
    bg1 = pk_ref[r1 + 1:r1 + 2, 0:h1]                     # (1, h1)
    bfo = pk_ref[r1 + 2:r1 + 3, 0:out_size]               # (1, out)

    # ---- norm='both': D^-1/2 on both sides; A_hat is never materialized ----
    # adjacency is symmetric, so row/col degrees coincide; computing both
    # orientations avoids any transpose of the scaling vectors.
    deg_r = jnp.sum(a, axis=2, keepdims=True)             # (G, N, 1)
    deg_c = jnp.sum(a, axis=1, keepdims=True)             # (G, 1, N)
    inv_r = jnp.where(deg_r > 0, lax.rsqrt(jnp.maximum(deg_r, 1e-30)), 0.0)
    inv_c = jnp.where(deg_c > 0, lax.rsqrt(jnp.maximum(deg_c, 1e-30)), 0.0)

    # ---- fused front_dense1 + GraphConv1 feature transform (M-stacked) ----
    t1 = jnp.dot(x.reshape(G * N, in_size), w1g,
                 preferred_element_type=f32) + b1g        # (G*N, h1)
    t1 = t1.reshape(G, N, h1)

    # ---- GraphConv1 aggregation + bias + ReLU ----
    h = jnp.einsum('gij,gjk->gik', a, inv_r * t1,
                   preferred_element_type=f32)            # (G, N, h1)
    h = jnp.maximum(inv_r * h + bg1, 0.0)

    # dropout(0.5) in eval mode == identity
    # ---- fused GraphConv2 feat-xform + back_dense1 + back_dense2 ----
    t2 = jnp.dot(h.reshape(G * N, h1), wf,
                 preferred_element_type=f32)              # (G*N, out)
    t2 = inv_r * t2.reshape(G, N, out_size)               # right-side D^-1/2 on H

    # second aggregation computed transposed so the store is lane-dense:
    #   out^T = ((D^-1/2 t2)^T @ A) * D^-1/2 + bf^T          (A symmetric)
    if out_size == 1:
        t2t = t2.reshape(G, 1, N)                         # pure reindex (size-1 dim)
    else:
        t2t = jnp.swapaxes(t2, 1, 2)                      # (G, out, N)
    o = jnp.einsum('gon,gnm->gom', t2t, a,
                   preferred_element_type=f32)            # (G, out, N)
    out_ref[...] = o * inv_c + bfo.reshape(1, out_size, 1)


def _default_num_blocks(batch):
    """One grid step on single-TC chips (v5e/v6e); 2 steps (one per TC) on v7x."""
    try:
        kind = jax.devices()[0].device_kind.lower()
    except Exception:
        kind = ""
    if ("v7" in kind or "7x" in kind) and batch > 1:
        return 2
    return 1


def nmr_gcn_forward(adj, features, params, *, num_blocks=None):
    """adj: (B, N, N) or (N, N) raw 0/1 symmetric adjacency (no self-loops), f32 or bf16.
       features: (B, N, in_size) or (N, in_size).
       Returns the PyTorch h.view(-1) layout: (B, N*out_size) or (N*out_size,)."""
    single = adj.ndim == 2
    if single:
        adj = adj[None]
        features = features[None]

    B, N, _ = adj.shape
    in_size = features.shape[-1]
    (w1, b1, wg1, bg1, wg2, bg2, w3, b3, w4, b4) = params
    h1 = wg1.shape[1]
    out_size = w4.shape[1]

    # ---- algebraic fusion of all activation-free dense layers (f32, in JAX) ----
    w1g = w1 @ wg1                                  # (in, h1)
    b1g = b1 @ wg1                                  # (1, h1)
    w34 = w3 @ w4                                   # (h2, out)
    wf = wg2 @ w34                                  # (h1, out)
    bf = bg2 @ w34 + b3 @ w4 + b4                   # (1, out)

    # ---- pack ALL constant operands into one 128-lane-aligned array (1 DMA) ----
    lane_w = _ceil128(max(h1, out_size))
    rows = in_size + h1 + 3
    pack = jnp.zeros((rows, lane_w), jnp.float32)
    pack = pack.at[0:in_size, 0:h1].set(w1g)
    pack = pack.at[in_size:in_size + h1, 0:out_size].set(wf)
    pack = pack.at[in_size + h1, 0:h1].set(b1g[0])
    pack = pack.at[in_size + h1 + 1, 0:h1].set(bg1[0])
    pack = pack.at[in_size + h1 + 2, 0:out_size].set(bf[0])

    # ---- adjacency streamed as bf16 (0/1 entries are exact in bf16) ----
    adj_b = adj if adj.dtype == jnp.bfloat16 else adj.astype(jnp.bfloat16)
    feats = features.astype(jnp.float32)

    # ---- batch blocking: whole batch per step on v5e/v6e, 2 blocks on v7x ----
    if num_blocks is None:
        num_blocks = _default_num_blocks(B)
    num_blocks = max(1, min(num_blocks, B))
    G = -(-B // num_blocks)                         # graphs per grid step
    B_pad = G * num_blocks
    if B_pad != B:
        adj_b = jnp.pad(adj_b, ((0, B_pad - B), (0, 0), (0, 0)))
        feats = jnp.pad(feats, ((0, B_pad - B), (0, 0), (0, 0)))

    kernel = functools.partial(nmr_gcn_kernel, in_size=in_size, h1=h1,
                               out_size=out_size)

    flops = 2 * B_pad * (N * in_size * h1 + N * N * h1
                         + N * h1 * out_size + N * N * out_size)
    bytes_accessed = (2 * B_pad * N * N             # bf16 adjacency
                      + 4 * B_pad * N * in_size     # f32 features
                      + 4 * rows * lane_w           # packed fused weights/biases
                      + 4 * B_pad * out_size * N)   # f32 output
    cost = pl.CostEstimate(flops=flops, transcendentals=2 * B_pad * N,
                           bytes_accessed=bytes_accessed)

    out = pl.pallas_call(
        kernel,
        out_shape=jax.ShapeDtypeStruct((B_pad, out_size, N), jnp.float32),
        grid=(num_blocks,),
        in_specs=[
            pl.BlockSpec((G, N, N), lambda b: (b, 0, 0)),         # adjacency (bf16)
            pl.BlockSpec((G, N, in_size), lambda b: (b, 0, 0)),   # features
            pl.BlockSpec((rows, lane_w), lambda b: (0, 0)),       # packed constants
        ],
        out_specs=pl.BlockSpec((G, out_size, N), lambda b: (b, 0, 0)),
        compiler_params=pltpu.CompilerParams(
            dimension_semantics=("parallel",)),
        cost_estimate=cost,
    )(adj_b, feats, pack)

    out = out[:B]                                   # drop batch padding
    # back to PyTorch's h.view(-1) layout: per-graph (N, out) row-major, flattened
    out = jnp.swapaxes(out, 1, 2).reshape(B, N * out_size)
    if single:
        out = out[0]
    return out


def init_params(key, in_size, hid_size, out_size):
    """Deterministic init; Linear/GraphConv weights stored as (in, out)."""
    dims = [
        (in_size, hid_size[0]),      # front_dense1
        (hid_size[0], hid_size[1]),  # GraphConv 1
        (hid_size[1], hid_size[2]),  # GraphConv 2
        (hid_size[2], hid_size[3]),  # back_dense1
        (hid_size[3], out_size),     # back_dense2
    ]
    params = []
    keys = jax.random.split(key, len(dims))
    for k, (din, dout) in zip(keys, dims):
        kw, kb = jax.random.split(k)
        scale = 1.0 / jnp.sqrt(jnp.float32(din))
        w = jax.random.uniform(kw, (din, dout), jnp.float32, -scale, scale)
        b = jax.random.uniform(kb, (1, dout), jnp.float32, -scale, scale)
        params += [w, b]
    return tuple(params)


def reference_forward(adj, features, params):
    """Plain-JAX single-graph reference using the ORIGINAL (unfused) params."""
    deg = jnp.sum(adj, axis=1)
    inv_sqrt = jnp.where(deg > 0, 1.0 / jnp.sqrt(jnp.maximum(deg, 1e-30)), 0.0)
    a_hat = adj * inv_sqrt[:, None] * inv_sqrt[None, :]
    (w1, b1, wg1, bg1, wg2, bg2, w3, b3, w4, b4) = params
    h = features @ w1 + b1
    h = jnp.maximum(a_hat @ (h @ wg1) + bg1, 0.0)
    h = a_hat @ (h @ wg2) + bg2
    h = h @ w3 + b3
    h = h @ w4 + b4
    return h.reshape(-1)


if __name__ == "__main__":
    key = jax.random.PRNGKey(0)
    k_feat, k_adj, k_param = jax.random.split(key, 3)

    B = 4            # graphs in the batch
    N = 128          # nodes per graph (fills MXU sublanes / lanes)
    in_size = 32
    hid_size = [64, 64, 32, 16]
    out_size = 1

    features = jax.random.normal(k_feat, (B, N, in_size), jnp.float32)

    # symmetric random adjacency per graph, no self-loops (0/1 values)
    rnd = jax.random.uniform(k_adj, (B, N, N))
    upper = jnp.triu((rnd > 0.9).astype(jnp.float32), k=1)
    adj = upper + jnp.swapaxes(upper, -1, -2)

    params = init_params(k_param, in_size, hid_size, out_size)

    out = nmr_gcn_forward(adj, features, params)
    out = jax.block_until_ready(out)

    ref = jax.vmap(lambda a, x: reference_forward(a, x, params))(adj, features)
    assert out.shape == (B, N * out_size)
    err = float(jnp.max(jnp.abs(out - ref)))
    assert jnp.allclose(out, ref, atol=1e-3, rtol=1e-3), err

    print("KERNEL_OK")
</pallas_src>

<mosaic_0001>
module attributes {stable_mosaic.version = 11 : i64} {
  func.func @nmr_gcn_kernel(%arg0: i32, %arg1: memref<4x128x128xbf16, #tpu.memory_space<vmem>>, %arg2: memref<4x128x32xf32, #tpu.memory_space<vmem>>, %arg3: memref<99x128xf32, #tpu.memory_space<vmem>>, %arg4: memref<4x1x128xf32, #tpu.memory_space<vmem>>) attributes {dimension_semantics = [#tpu.dimension_semantics<parallel>], iteration_bounds = array<i64: 1>, scalar_prefetch = 0 : i64, scratch_operands = 0 : i64, tpu.core_type = #tpu.core_type<tc>, window_params = [{transform_indices = @transform_0, window_bounds = array<i64: 4, 128, 128>}, {transform_indices = @transform_1, window_bounds = array<i64: 4, 128, 32>}, {pipeline_mode = #tpu.pipeline_mode<synchronous>, transform_indices = @transform_2, window_bounds = array<i64: 99, 128>}, {transform_indices = @transform_3, window_bounds = array<i64: 4, 1, 128>}]} {
    %c0 = arith.constant 0 : index
    %c0_0 = arith.constant 0 : index
    %c0_1 = arith.constant 0 : index
    %0 = vector.load %arg1[%c0, %c0_0, %c0_1] : memref<4x128x128xbf16, #tpu.memory_space<vmem>>, vector<4x128x128xbf16>
    %1 = arith.extf %0 : vector<4x128x128xbf16> to vector<4x128x128xf32>
    %c0_2 = arith.constant 0 : index
    %c0_3 = arith.constant 0 : index
    %c0_4 = arith.constant 0 : index
    %2 = vector.load %arg2[%c0_2, %c0_3, %c0_4] : memref<4x128x32xf32, #tpu.memory_space<vmem>>, vector<4x128x32xf32>
    %c0_5 = arith.constant 0 : index
    %c0_6 = arith.constant 0 : index
    %3 = vector.load %arg3[%c0_5, %c0_6] : memref<99x128xf32, #tpu.memory_space<vmem>>, vector<32x64xf32>
    %c32 = arith.constant 32 : index
    %c0_7 = arith.constant 0 : index
    %4 = vector.load %arg3[%c32, %c0_7] : memref<99x128xf32, #tpu.memory_space<vmem>>, vector<64x1xf32>
    %c96 = arith.constant 96 : index
    %c0_8 = arith.constant 0 : index
    %5 = vector.load %arg3[%c96, %c0_8] : memref<99x128xf32, #tpu.memory_space<vmem>>, vector<1x64xf32>
    %c97 = arith.constant 97 : index
    %c0_9 = arith.constant 0 : index
    %6 = vector.load %arg3[%c97, %c0_9] : memref<99x128xf32, #tpu.memory_space<vmem>>, vector<1x64xf32>
    %c98 = arith.constant 98 : index
    %c0_10 = arith.constant 0 : index
    %7 = vector.load %arg3[%c98, %c0_10] : memref<99x128xf32, #tpu.memory_space<vmem>>, vector<1x1xf32>
    %cst = arith.constant dense<0.000000e+00> : vector<4x128xf32>
    %8 = vector.multi_reduction <add>, %1, %cst [2] : vector<4x128x128xf32> to vector<4x128xf32>
    %9 = vector.shape_cast %8 : vector<4x128xf32> to vector<4x128x1xf32>
    %cst_11 = arith.constant dense<0.000000e+00> : vector<4x128xf32>
    %10 = vector.multi_reduction <add>, %1, %cst_11 [1] : vector<4x128x128xf32> to vector<4x128xf32>
    %11 = vector.shape_cast %10 : vector<4x128xf32> to vector<4x1x128xf32>
    %cst_12 = arith.constant 0.000000e+00 : f32
    %12 = vector.broadcast %cst_12 : f32 to vector<4x128x1xf32>
    %13 = arith.cmpf ogt, %9, %12 : vector<4x128x1xf32>
    %cst_13 = arith.constant 1.000000e-30 : f32
    %14 = vector.broadcast %cst_13 : f32 to vector<4x128x1xf32>
    %15 = arith.maximumf %9, %14 : vector<4x128x1xf32>
    %16 = math.rsqrt %15 : vector<4x128x1xf32>
    %cst_14 = arith.constant 0.000000e+00 : f32
    %17 = vector.broadcast %cst_14 : f32 to vector<4x128x1xf32>
    %18 = arith.select %13, %16, %17 : vector<4x128x1xi1>, vector<4x128x1xf32>
    %cst_15 = arith.constant 0.000000e+00 : f32
    %19 = vector.broadcast %cst_15 : f32 to vector<4x1x128xf32>
    %20 = arith.cmpf ogt, %11, %19 : vector<4x1x128xf32>
    %cst_16 = arith.constant 1.000000e-30 : f32
    %21 = vector.broadcast %cst_16 : f32 to vector<4x1x128xf32>
    %22 = arith.maximumf %11, %21 : vector<4x1x128xf32>
    %23 = math.rsqrt %22 : vector<4x1x128xf32>
    %cst_17 = arith.constant 0.000000e+00 : f32
    %24 = vector.broadcast %cst_17 : f32 to vector<4x1x128xf32>
    %25 = arith.select %20, %23, %24 : vector<4x1x128xi1>, vector<4x1x128xf32>
    %26 = vector.shape_cast %2 : vector<4x128x32xf32> to vector<512x32xf32>
    %cst_18 = arith.constant dense<0.000000e+00> : vector<512x64xf32>
    %27 = tpu.matmul %26, %3, %cst_18 {dimension_numbers = #tpu.dot_dimension_numbers<[1], [0], [0], [1], [0, 0, 1, 1], [], []>} : vector<512x32xf32>, vector<32x64xf32>, vector<512x64xf32> -> vector<512x64xf32>
    %28 = vector.broadcast %5 : vector<1x64xf32> to vector<512x64xf32>
    %29 = arith.addf %27, %28 : vector<512x64xf32>
    %30 = vector.shape_cast %29 : vector<512x64xf32> to vector<4x128x64xf32>
    %31 = vector.broadcast %18 : vector<4x128x1xf32> to vector<4x128x64xf32>
    %32 = arith.mulf %31, %30 : vector<4x128x64xf32>
    "tpu.trace_start"() <{level = 10 : i32, message = "gij,gjk->gik"}> : () -> ()
    %cst_19 = arith.constant dense<0.000000e+00> : vector<4x128x64xf32>
    %33 = tpu.matmul %1, %32, %cst_19 {dimension_numbers = #tpu.dot_dimension_numbers<[2], [1], [1], [2], [0, 0, 0, 1, 1, 2], [0], [0]>} : vector<4x128x128xf32>, vector<4x128x64xf32>, vector<4x128x64xf32> -> vector<4x128x64xf32>
    "tpu.trace_stop"() : () -> ()
    %34 = vector.broadcast %18 : vector<4x128x1xf32> to vector<4x128x64xf32>
    %35 = arith.mulf %34, %33 : vector<4x128x64xf32>
    %36 = vector.shape_cast %6 : vector<1x64xf32> to vector<1x1x64xf32>
    %37 = vector.broadcast %36 : vector<1x1x64xf32> to vector<4x128x64xf32>
    %38 = arith.addf %35, %37 : vector<4x128x64xf32>
    %cst_20 = arith.constant 0.000000e+00 : f32
    %39 = vector.broadcast %cst_20 : f32 to vector<4x128x64xf32>
    %40 = arith.maximumf %38, %39 : vector<4x128x64xf32>
    %41 = vector.shape_cast %40 : vector<4x128x64xf32> to vector<512x64xf32>
    %cst_21 = arith.constant dense<0.000000e+00> : vector<512x1xf32>
    %42 = tpu.matmul %41, %4, %cst_21 {dimension_numbers = #tpu.dot_dimension_numbers<[1], [0], [0], [1], [0, 0, 1, 1], [], []>} : vector<512x64xf32>, vector<64x1xf32>, vector<512x1xf32> -> vector<512x1xf32>
    %43 = vector.shape_cast %42 : vector<512x1xf32> to vector<4x128x1xf32>
    %44 = arith.mulf %18, %43 : vector<4x128x1xf32>
    %45 = vector.shape_cast %44 : vector<4x128x1xf32> to vector<4x1x128xf32>
    "tpu.trace_start"() <{level = 10 : i32, message = "gon,gnm->gom"}> : () -> ()
    %cst_22 = arith.constant dense<0.000000e+00> : vector<4x1x128xf32>
    %46 = tpu.matmul %45, %1, %cst_22 {dimension_numbers = #tpu.dot_dimension_numbers<[2], [1], [1], [2], [0, 0, 0, 1, 1, 2], [0], [0]>} : vector<4x1x128xf32>, vector<4x128x128xf32>, vector<4x1x128xf32> -> vector<4x1x128xf32>
    "tpu.trace_stop"() : () -> ()
    %47 = arith.mulf %46, %25 : vector<4x1x128xf32>
    %48 = vector.shape_cast %7 : vector<1x1xf32> to vector<1x1x1xf32>
    %49 = vector.broadcast %48 : vector<1x1x1xf32> to vector<4x1x128xf32>
    %50 = arith.addf %47, %49 : vector<4x1x128xf32>
    %c0_23 = arith.constant 0 : index
    %c0_24 = arith.constant 0 : index
    %c0_25 = arith.constant 0 : index
    %51 = vector.load %arg4[%c0_23, %c0_24, %c0_25] : memref<4x1x128xf32, #tpu.memory_space<vmem>>, vector<4x1x128xf32>
    tpu.vector_store %arg4[%c0_23, %c0_24, %c0_25], %50 {strides = array<i32>} : memref<4x1x128xf32, #tpu.memory_space<vmem>>, vector<4x1x128xf32>,
    return
  }
  func.func @transform_0(%arg0: i32) -> (i32, i32, i32) {
    %c0_i32 = arith.constant 0 : i32
    %c0_i32_0 = arith.constant 0 : i32
    %c0_i32_1 = arith.constant 0 : i32
    return %arg0, %c0_i32, %c0_i32_0 : i32, i32, i32
  }
  func.func @transform_1(%arg0: i32) -> (i32, i32, i32) {
    %c0_i32 = arith.constant 0 : i32
    %c0_i32_0 = arith.constant 0 : i32
    %c0_i32_1 = arith.constant 0 : i32
    return %arg0, %c0_i32, %c0_i32_0 : i32, i32, i32
  }
  func.func @transform_2(%arg0: i32) -> (i32, i32) {
    %c0_i32 = arith.constant 0 : i32
    %c0_i32_0 = arith.constant 0 : i32
    %c0_i32_1 = arith.constant 0 : i32
    return %c0_i32, %c0_i32_0 : i32, i32
  }
  func.func @transform_3(%arg0: i32) -> (i32, i32, i32) {
    %c0_i32 = arith.constant 0 : i32
    %c0_i32_0 = arith.constant 0 : i32
    %c0_i32_1 = arith.constant 0 : i32
    return %arg0, %c0_i32, %c0_i32_0 : i32, i32, i32
  }
}

</mosaic_0001>

<llo_original>
// kernel: tpu_custom_call.1
$region0: #{tpu_custom_call.1}
  #allocation0 [shape = 'u32[]', space=smem, size = 0x4, offset = 0x4, fixed_abs, tag = 'smem constant byte address 0x4 - core index']
  #allocation1 [shape = 'u32[144,128]{1,0:T(1,128)}', space=vmem, size = 0x12000, scoped, tag = 'internal scratch']
  %s0 = inlined_call_operand.vmem [shape: bf16[4,128,128], index: 0, kind: input, shape index: {}]
  %s1 = inlined_call_operand.vmem [shape: f32[4,128,32], index: 1, kind: input, shape index: {}]
  %s2 = inlined_call_operand.vmem [shape: f32[99,128], index: 2, kind: input, shape index: {}]
  %s3 = inlined_call_operand.hbm [shape: f32[4,1,128], index: 3, kind: output, shape index: {}]
  %s4 = sld [smem:[#allocation0]]
  $region22: #{tpu_custom_call.1} parent=0
    _
  %s6 = ssub.s32 1, %s4
  %s7 = scalar_select 0, %s6, %s4
  $region1: #{tpu_custom_call.1} parent=0
    #allocation2 [shape = 'u8[2048]{0}', space=vmem, size = 0x800, scoped, tag = 'output window, operand 0, single buffered']
    #allocation3 [shape = 's32[1]{0}', space=sflag, size = 0x4, scoped, tag = 'scoped memory for tpu_custom_call.1']
    %8 = vsyncpa [#allocation3], 0
    // Predicated region
    $region2: #{tpu_custom_call.1} parent=1 // pred_check
      _
    $region3: #{tpu_custom_call.1} parent=1 // pred_check_branch
      %10 = sbr.rel (0) target = $region5
    $region4: #{tpu_custom_call.1} parent=1 // pred_region
      _
    $region5: #{tpu_custom_call.1} parent=1 // pred_fallthru
      _
    // Predicated region
    $region6: #{tpu_custom_call.1} parent=1 // pred_check
      _
    $region7: #{tpu_custom_call.1} parent=1 // pred_check_branch
      %12 = sbr.rel (0) target = $region9
    $region8: #{tpu_custom_call.1} parent=1 // pred_region
      _
    $region9: #{tpu_custom_call.1} parent=1 // pred_fallthru
      _
    // Predicated region
    $region10: #{tpu_custom_call.1} parent=1 // pred_check
      _
    $region11: #{tpu_custom_call.1} parent=1 // pred_check_branch
      %14 = sbr.rel (0) target = $region13
    $region12: #{tpu_custom_call.1} parent=1 // pred_region
      _
    $region13: #{tpu_custom_call.1} parent=1 // pred_fallthru
      _
    %v15 = vld [vmem:[%s0] sm:$0xf]
    %v16 = vld [vmem:[%s0 + $0x4] sm:$0xf]
    %v17 = vld [vmem:[%s0 + $0x8] sm:$0xf]
    %v18 = vld [vmem:[%s0 + $0xc] sm:$0xf]
    %v19 = vld [vmem:[%s0 + $0x10] sm:$0xf]
    %v20 = vld [vmem:[%s0 + $0x14] sm:$0xf]
    %v21 = vld [vmem:[%s0 + $0x18] sm:$0xf]
    %v22 = vld [vmem:[%s0 + $0x1c] sm:$0xf]
    %v23 = vld [vmem:[%s0 + $0x20] sm:$0xf]
    %v24 = vld [vmem:[%s0 + $0x24] sm:$0xf]
    %v25 = vld [vmem:[%s0 + $0x28] sm:$0xf]
    %v26 = vld [vmem:[%s0 + $0x2c] sm:$0xf]
    %v27 = vld [vmem:[%s0 + $0x30] sm:$0xf]
    %v28 = vld [vmem:[%s0 + $0x34] sm:$0xf]
    %v29 = vld [vmem:[%s0 + $0x38] sm:$0xf]
    %v30 = vld [vmem:[%s0 + $0x3c] sm:$0xf]
    %v31 = vld [vmem:[%s0 + $0x40] sm:$0xf]
    %v32 = vld [vmem:[%s0 + $0x44] sm:$0xf]
    %v33 = vld [vmem:[%s0 + $0x48] sm:$0xf]
    %v34 = vld [vmem:[%s0 + $0x4c] sm:$0xf]
    %v35 = vld [vmem:[%s0 + $0x50] sm:$0xf]
    %v36 = vld [vmem:[%s0 + $0x54] sm:$0xf]
    %v37 = vld [vmem:[%s0 + $0x58] sm:$0xf]
    %v38 = vld [vmem:[%s0 + $0x5c] sm:$0xf]
    %v39 = vld [vmem:[%s0 + $0x60] sm:$0xf]
    %v40 = vld [vmem:[%s0 + $0x64] sm:$0xf]
    %v41 = vld [vmem:[%s0 + $0x68] sm:$0xf]
    %v42 = vld [vmem:[%s0 + $0x6c] sm:$0xf]
    %v43 = vld [vmem:[%s0 + $0x70] sm:$0xf]
    %v44 = vld [vmem:[%s0 + $0x74] sm:$0xf]
    %v45 = vld [vmem:[%s0 + $0x78] sm:$0xf]
    %v46 = vld [vmem:[%s0 + $0x7c] sm:$0xf]
    %v47 = vld [vmem:[%s0 + $0x80] sm:$0xf]
    %v48 = vld [vmem:[%s0 + $0x84] sm:$0xf]
    %v49 = vld [vmem:[%s0 + $0x88] sm:$0xf]
    %v50 = vld [vmem:[%s0 + $0x8c] sm:$0xf]
    %v51 = vld [vmem:[%s0 + $0x90] sm:$0xf]
    %v52 = vld [vmem:[%s0 + $0x94] sm:$0xf]
    %v53 = vld [vmem:[%s0 + $0x98] sm:$0xf]
    %v54 = vld [vmem:[%s0 + $0x9c] sm:$0xf]
    %v55 = vld [vmem:[%s0 + $0xa0] sm:$0xf]
    %v56 = vld [vmem:[%s0 + $0xa4] sm:$0xf]
    %v57 = vld [vmem:[%s0 + $0xa8] sm:$0xf]
    %v58 = vld [vmem:[%s0 + $0xac] sm:$0xf]
    %v59 = vld [vmem:[%s0 + $0xb0] sm:$0xf]
    %v60 = vld [vmem:[%s0 + $0xb4] sm:$0xf]
    %v61 = vld [vmem:[%s0 + $0xb8] sm:$0xf]
    %v62 = vld [vmem:[%s0 + $0xbc] sm:$0xf]
    %v63 = vld [vmem:[%s0 + $0xc0] sm:$0xf]
    %v64 = vld [vmem:[%s0 + $0xc4] sm:$0xf]
    %v65 = vld [vmem:[%s0 + $0xc8] sm:$0xf]
    %v66 = vld [vmem:[%s0 + $0xcc] sm:$0xf]
    %v67 = vld [vmem:[%s0 + $0xd0] sm:$0xf]
    %v68 = vld [vmem:[%s0 + $0xd4] sm:$0xf]
    %v69 = vld [vmem:[%s0 + $0xd8] sm:$0xf]
    %v70 = vld [vmem:[%s0 + $0xdc] sm:$0xf]
    %v71 = vld [vmem:[%s0 + $0xe0] sm:$0xf]
    %v72 = vld [vmem:[%s0 + $0xe4] sm:$0xf]
    %v73 = vld [vmem:[%s0 + $0xe8] sm:$0xf]
    %v74 = vld [vmem:[%s0 + $0xec] sm:$0xf]
    %v75 = vld [vmem:[%s0 + $0xf0] sm:$0xf]
    %v76 = vld [vmem:[%s0 + $0xf4] sm:$0xf]
    %v77 = vld [vmem:[%s0 + $0xf8] sm:$0xf]
    %v78 = vld [vmem:[%s0 + $0xfc] sm:$0xf]
    %v79 = vunpack.c.l.bf16 %v15
    %v80 = vunpack.c.l.bf16 %v16
    %v81 = vunpack.c.l.bf16 %v17
    %v82 = vunpack.c.l.bf16 %v18
    %v83 = vunpack.c.l.bf16 %v19
    %v84 = vunpack.c.l.bf16 %v20
    %v85 = vunpack.c.l.bf16 %v21
    %v86 = vunpack.c.l.bf16 %v22
    %v87 = vunpack.c.l.bf16 %v23
    %v88 = vunpack.c.l.bf16 %v24
    %v89 = vunpack.c.l.bf16 %v25
    %v90 = vunpack.c.l.bf16 %v26
    %v91 = vunpack.c.l.bf16 %v27
    %v92 = vunpack.c.l.bf16 %v28
    %v93 = vunpack.c.l.bf16 %v29
    %v94 = vunpack.c.l.bf16 %v30
    %v95 = vunpack.c.l.bf16 %v31
    %v96 = vunpack.c.l.bf16 %v32
    %v97 = vunpack.c.l.bf16 %v33
    %v98 = vunpack.c.l.bf16 %v34
    %v99 = vunpack.c.l.bf16 %v35
    %v100 = vunpack.c.l.bf16 %v36
    %v101 = vunpack.c.l.bf16 %v37
    %v102 = vunpack.c.l.bf16 %v38
    %v103 = vunpack.c.l.bf16 %v39
    %v104 = vunpack.c.l.bf16 %v40
    %v105 = vunpack.c.l.bf16 %v41
    %v106 = vunpack.c.l.bf16 %v42
    %v107 = vunpack.c.l.bf16 %v43
    %v108 = vunpack.c.l.bf16 %v44
    %v109 = vunpack.c.l.bf16 %v45
    %v110 = vunpack.c.l.bf16 %v46
    %v111 = vunpack.c.l.bf16 %v47
    %v112 = vunpack.c.l.bf16 %v48
    %v113 = vunpack.c.l.bf16 %v49
    %v114 = vunpack.c.l.bf16 %v50
    %v115 = vunpack.c.l.bf16 %v51
    %v116 = vunpack.c.l.bf16 %v52
    %v117 = vunpack.c.l.bf16 %v53
    %v118 = vunpack.c.l.bf16 %v54
    %v119 = vunpack.c.l.bf16 %v55
    %v120 = vunpack.c.l.bf16 %v56
    %v121 = vunpack.c.l.bf16 %v57
    %v122 = vunpack.c.l.bf16 %v58
    %v123 = vunpack.c.l.bf16 %v59
    %v124 = vunpack.c.l.bf16 %v60
    %v125 = vunpack.c.l.bf16 %v61
    %v126 = vunpack.c.l.bf16 %v62
    %v127 = vunpack.c.l.bf16 %v63
    %v128 = vunpack.c.l.bf16 %v64
    %v129 = vunpack.c.l.bf16 %v65
    %v130 = vunpack.c.l.bf16 %v66
    %v131 = vunpack.c.l.bf16 %v67
    %v132 = vunpack.c.l.bf16 %v68
    %v133 = vunpack.c.l.bf16 %v69
    %v134 = vunpack.c.l.bf16 %v70
    %v135 = vunpack.c.l.bf16 %v71
    %v136 = vunpack.c.l.bf16 %v72
    %v137 = vunpack.c.l.bf16 %v73
    %v138 = vunpack.c.l.bf16 %v74
    %v139 = vunpack.c.l.bf16 %v75
    %v140 = vunpack.c.l.bf16 %v76
    %v141 = vunpack.c.l.bf16 %v77
    %v142 = vunpack.c.l.bf16 %v78
    %v143 = vld [vmem:[%s1] sm:$0xff]
    %v144 = vld [vmem:[%s1 + $0x8] sm:$0xff]
    %v145 = vld [vmem:[%s1 + $0x10] sm:$0xff]
    %v146 = vld [vmem:[%s1 + $0x18] sm:$0xff]
    %v147 = vld [vmem:[%s1 + $0x20] sm:$0xff]
    %v148 = vld [vmem:[%s1 + $0x28] sm:$0xff]
    %v149 = vld [vmem:[%s1 + $0x30] sm:$0xff]
    %v150 = vld [vmem:[%s1 + $0x38] sm:$0xff]
    %v151 = vld [vmem:[%s1 + $0x40] sm:$0xff]
    %v152 = vld [vmem:[%s1 + $0x48] sm:$0xff]
    %v153 = vld [vmem:[%s1 + $0x50] sm:$0xff]
    %v154 = vld [vmem:[%s1 + $0x58] sm:$0xff]
    %v155 = vld [vmem:[%s1 + $0x60] sm:$0xff]
    %v156 = vld [vmem:[%s1 + $0x68] sm:$0xff]
    %v157 = vld [vmem:[%s1 + $0x70] sm:$0xff]
    %v158 = vld [vmem:[%s1 + $0x78] sm:$0xff]
    %v159 = vld [vmem:[%s1 + $0x80] sm:$0xff]
    %v160 = vld [vmem:[%s1 + $0x88] sm:$0xff]
    %v161 = vld [vmem:[%s1 + $0x90] sm:$0xff]
    %v162 = vld [vmem:[%s1 + $0x98] sm:$0xff]
    %v163 = vld [vmem:[%s1 + $0xa0] sm:$0xff]
    %v164 = vld [vmem:[%s1 + $0xa8] sm:$0xff]
    %v165 = vld [vmem:[%s1 + $0xb0] sm:$0xff]
    %v166 = vld [vmem:[%s1 + $0xb8] sm:$0xff]
    %v167 = vld [vmem:[%s1 + $0xc0] sm:$0xff]
    %v168 = vld [vmem:[%s1 + $0xc8] sm:$0xff]
    %v169 = vld [vmem:[%s1 + $0xd0] sm:$0xff]
    %v170 = vld [vmem:[%s1 + $0xd8] sm:$0xff]
    %v171 = vld [vmem:[%s1 + $0xe0] sm:$0xff]
    %v172 = vld [vmem:[%s1 + $0xe8] sm:$0xff]
    %v173 = vld [vmem:[%s1 + $0xf0] sm:$0xff]
    %v174 = vld [vmem:[%s1 + $0xf8] sm:$0xff]
    %v175 = vld [vmem:[%s1 + $0x100] sm:$0xff]
    %v176 = vld [vmem:[%s1 + $0x108] sm:$0xff]
    %v177 = vld [vmem:[%s1 + $0x110] sm:$0xff]
    %v178 = vld [vmem:[%s1 + $0x118] sm:$0xff]
    %v179 = vld [vmem:[%s1 + $0x120] sm:$0xff]
    %v180 = vld [vmem:[%s1 + $0x128] sm:$0xff]
    %v181 = vld [vmem:[%s1 + $0x130] sm:$0xff]
    %v182 = vld [vmem:[%s1 + $0x138] sm:$0xff]
    %v183 = vld [vmem:[%s1 + $0x140] sm:$0xff]
    %v184 = vld [vmem:[%s1 + $0x148] sm:$0xff]
    %v185 = vld [vmem:[%s1 + $0x150] sm:$0xff]
    %v186 = vld [vmem:[%s1 + $0x158] sm:$0xff]
    %v187 = vld [vmem:[%s1 + $0x160] sm:$0xff]
    %v188 = vld [vmem:[%s1 + $0x168] sm:$0xff]
    %v189 = vld [vmem:[%s1 + $0x170] sm:$0xff]
    %v190 = vld [vmem:[%s1 + $0x178] sm:$0xff]
    %v191 = vld [vmem:[%s1 + $0x180] sm:$0xff]
    %v192 = vld [vmem:[%s1 + $0x188] sm:$0xff]
    %v193 = vld [vmem:[%s1 + $0x190] sm:$0xff]
    %v194 = vld [vmem:[%s1 + $0x198] sm:$0xff]
    %v195 = vld [vmem:[%s1 + $0x1a0] sm:$0xff]
    %v196 = vld [vmem:[%s1 + $0x1a8] sm:$0xff]
    %v197 = vld [vmem:[%s1 + $0x1b0] sm:$0xff]
    %v198 = vld [vmem:[%s1 + $0x1b8] sm:$0xff]
    %v199 = vld [vmem:[%s1 + $0x1c0] sm:$0xff]
    %v200 = vld [vmem:[%s1 + $0x1c8] sm:$0xff]
    %v201 = vld [vmem:[%s1 + $0x1d0] sm:$0xff]
    %v202 = vld [vmem:[%s1 + $0x1d8] sm:$0xff]
    %v203 = vld [vmem:[%s1 + $0x1e0] sm:$0xff]
    %v204 = vld [vmem:[%s1 + $0x1e8] sm:$0xff]
    %v205 = vld [vmem:[%s1 + $0x1f0] sm:$0xff]
    %v206 = vld [vmem:[%s1 + $0x1f8] sm:$0xff]
    %v207 = vld [vmem:[%s2] sm:$0xff]
    %v208 = vld [vmem:[%s2 + $0x8] sm:$0xff]
    %v209 = vld [vmem:[%s2 + $0x10] sm:$0xff]
    %v210 = vld [vmem:[%s2 + $0x18] sm:$0xff]
    %v211 = vld [vmem:[%s2 + $0x20] sm:$0xff]
    %v212 = vld [vmem:[%s2 + $0x28] sm:$0xff]
    %v213 = vld [vmem:[%s2 + $0x30] sm:$0xff]
    %v214 = vld [vmem:[%s2 + $0x38] sm:$0xff]
    %v215 = vld [vmem:[%s2 + $0x40] sm:$0xff]
    %v216 = vld [vmem:[%s2 + $0x48] sm:$0xff]
    %v217 = vld [vmem:[%s2 + $0x50] sm:$0xff]
    %v218 = vld [vmem:[%s2 + $0x58] sm:$0xff]
    %v219 = vld [vmem:[%s2 + $0x60] sm:$0x1]
    %v220 = vld [vmem:[%s2 + $0x61] sm:$0x1]
    %v221 = vld [vmem:[%s2 + $0x62] sm:$0x1]
    %222 = vadd.xlane.f32.xlu0 %v79
    %v223 = vpop.xlane.xlu0 %222
    %224 = vadd.xlane.f32.xlu0 %v80
    %v225 = vpop.xlane.xlu0 %224
    %226 = vadd.xlane.f32.xlu0 %v81
    %v227 = vpop.xlane.xlu0 %226
    %228 = vadd.xlane.f32.xlu0 %v82
    %v229 = vpop.xlane.xlu0 %228
    %230 = vadd.xlane.f32.xlu0 %v83
    %v231 = vpop.xlane.xlu0 %230
    %232 = vadd.xlane.f32.xlu0 %v84
    %v233 = vpop.xlane.xlu0 %232
    %234 = vadd.xlane.f32.xlu0 %v85
    %v235 = vpop.xlane.xlu0 %234
    %236 = vadd.xlane.f32.xlu0 %v86
    %v237 = vpop.xlane.xlu0 %236
    %238 = vadd.xlane.f32.xlu0 %v87
    %v239 = vpop.xlane.xlu0 %238
    %240 = vadd.xlane.f32.xlu0 %v88
    %v241 = vpop.xlane.xlu0 %240
    %242 = vadd.xlane.f32.xlu0 %v89
    %v243 = vpop.xlane.xlu0 %242
    %244 = vadd.xlane.f32.xlu0 %v90
    %v245 = vpop.xlane.xlu0 %244
    %246 = vadd.xlane.f32.xlu0 %v91
    %v247 = vpop.xlane.xlu0 %246
    %248 = vadd.xlane.f32.xlu0 %v92
    %v249 = vpop.xlane.xlu0 %248
    %250 = vadd.xlane.f32.xlu0 %v93
    %v251 = vpop.xlane.xlu0 %250
    %252 = vadd.xlane.f32.xlu0 %v94
    %v253 = vpop.xlane.xlu0 %252
    %254 = vadd.xlane.f32.xlu0 %v95
    %v255 = vpop.xlane.xlu0 %254
    %256 = vadd.xlane.f32.xlu0 %v96
    %v257 = vpop.xlane.xlu0 %256
    %258 = vadd.xlane.f32.xlu0 %v97
    %v259 = vpop.xlane.xlu0 %258
    %260 = vadd.xlane.f32.xlu0 %v98
    %v261 = vpop.xlane.xlu0 %260
    %262 = vadd.xlane.f32.xlu0 %v99
    %v263 = vpop.xlane.xlu0 %262
    %264 = vadd.xlane.f32.xlu0 %v100
    %v265 = vpop.xlane.xlu0 %264
    %266 = vadd.xlane.f32.xlu0 %v101
    %v267 = vpop.xlane.xlu0 %266
    %268 = vadd.xlane.f32.xlu0 %v102
    %v269 = vpop.xlane.xlu0 %268
    %270 = vadd.xlane.f32.xlu0 %v103
    %v271 = vpop.xlane.xlu0 %270
    %272 = vadd.xlane.f32.xlu0 %v104
    %v273 = vpop.xlane.xlu0 %272
    %274 = vadd.xlane.f32.xlu0 %v105
    %v275 = vpop.xlane.xlu0 %274
    %276 = vadd.xlane.f32.xlu0 %v106
    %v277 = vpop.xlane.xlu0 %276
    %278 = vadd.xlane.f32.xlu0 %v107
    %v279 = vpop.xlane.xlu0 %278
    %280 = vadd.xlane.f32.xlu0 %v108
    %v281 = vpop.xlane.xlu0 %280
    %282 = vadd.xlane.f32.xlu0 %v109
    %v283 = vpop.xlane.xlu0 %282
    %284 = vadd.xlane.f32.xlu0 %v110
    %v285 = vpop.xlane.xlu0 %284
    %286 = vadd.xlane.f32.xlu0 %v111
    %v287 = vpop.xlane.xlu0 %286
    %288 = vadd.xlane.f32.xlu0 %v112
    %v289 = vpop.xlane.xlu0 %288
    %290 = vadd.xlane.f32.xlu0 %v113
    %v291 = vpop.xlane.xlu0 %290
    %292 = vadd.xlane.f32.xlu0 %v114
    %v293 = vpop.xlane.xlu0 %292
    %294 = vadd.xlane.f32.xlu0 %v115
    %v295 = vpop.xlane.xlu0 %294
    %296 = vadd.xlane.f32.xlu0 %v116
    %v297 = vpop.xlane.xlu0 %296
    %298 = vadd.xlane.f32.xlu0 %v117
    %v299 = vpop.xlane.xlu0 %298
    %300 = vadd.xlane.f32.xlu0 %v118
    %v301 = vpop.xlane.xlu0 %300
    %302 = vadd.xlane.f32.xlu0 %v119
    %v303 = vpop.xlane.xlu0 %302
    %304 = vadd.xlane.f32.xlu0 %v120
    %v305 = vpop.xlane.xlu0 %304
    %306 = vadd.xlane.f32.xlu0 %v121
    %v307 = vpop.xlane.xlu0 %306
    %308 = vadd.xlane.f32.xlu0 %v122
    %v309 = vpop.xlane.xlu0 %308
    %310 = vadd.xlane.f32.xlu0 %v123
    %v311 = vpop.xlane.xlu0 %310
    %312 = vadd.xlane.f32.xlu0 %v124
    %v313 = vpop.xlane.xlu0 %312
    %314 = vadd.xlane.f32.xlu0 %v125
    %v315 = vpop.xlane.xlu0 %314
    %316 = vadd.xlane.f32.xlu0 %v126
    %v317 = vpop.xlane.xlu0 %316
    %318 = vadd.xlane.f32.xlu0 %v127
    %v319 = vpop.xlane.xlu0 %318
    %320 = vadd.xlane.f32.xlu0 %v128
    %v321 = vpop.xlane.xlu0 %320
    %322 = vadd.xlane.f32.xlu0 %v129
    %v323 = vpop.xlane.xlu0 %322
    %324 = vadd.xlane.f32.xlu0 %v130
    %v325 = vpop.xlane.xlu0 %324
    %326 = vadd.xlane.f32.xlu0 %v131
    %v327 = vpop.xlane.xlu0 %326
    %328 = vadd.xlane.f32.xlu0 %v132
    %v329 = vpop.xlane.xlu0 %328
    %330 = vadd.xlane.f32.xlu0 %v133
    %v331 = vpop.xlane.xlu0 %330
    %332 = vadd.xlane.f32.xlu0 %v134
    %v333 = vpop.xlane.xlu0 %332
    %334 = vadd.xlane.f32.xlu0 %v135
    %v335 = vpop.xlane.xlu0 %334
    %336 = vadd.xlane.f32.xlu0 %v136
    %v337 = vpop.xlane.xlu0 %336
    %338 = vadd.xlane.f32.xlu0 %v137
    %v339 = vpop.xlane.xlu0 %338
    %340 = vadd.xlane.f32.xlu0 %v138
    %v341 = vpop.xlane.xlu0 %340
    %342 = vadd.xlane.f32.xlu0 %v139
    %v343 = vpop.xlane.xlu0 %342
    %344 = vadd.xlane.f32.xlu0 %v140
    %v345 = vpop.xlane.xlu0 %344
    %346 = vadd.xlane.f32.xlu0 %v141
    %v347 = vpop.xlane.xlu0 %346
    %348 = vadd.xlane.f32.xlu0 %v142
    %v349 = vpop.xlane.xlu0 %348
    %v350 = vadd.f32 %v79, %v80
    %v351 = vadd.f32 %v350, %v81
    %v352 = vadd.f32 %v351, %v82
    %v353 = vadd.f32 %v352, %v83
    %v354 = vadd.f32 %v353, %v84
    %v355 = vadd.f32 %v354, %v85
    %v356 = vadd.f32 %v355, %v86
    %v357 = vadd.f32 %v356, %v87
    %v358 = vadd.f32 %v357, %v88
    %v359 = vadd.f32 %v358, %v89
    %v360 = vadd.f32 %v359, %v90
    %v361 = vadd.f32 %v360, %v91
    %v362 = vadd.f32 %v361, %v92
    %v363 = vadd.f32 %v362, %v93
    %v364 = vadd.f32 %v363, %v94
    %v365 = vrot.slane %v364, 4
    %v366 = vadd.f32 %v364, %v365
    %v367 = vrot.slane %v366, 2
    %v368 = vadd.f32 %v366, %v367
    %v369 = vrot.slane %v368, 1
    %v370 = vadd.f32 %v368, %v369
    %v371 = vadd.f32 %v95, %v96
    %v372 = vadd.f32 %v371, %v97
    %v373 = vadd.f32 %v372, %v98
    %v374 = vadd.f32 %v373, %v99
    %v375 = vadd.f32 %v374, %v100
    %v376 = vadd.f32 %v375, %v101
    %v377 = vadd.f32 %v376, %v102
    %v378 = vadd.f32 %v377, %v103
    %v379 = vadd.f32 %v378, %v104
    %v380 = vadd.f32 %v379, %v105
    %v381 = vadd.f32 %v380, %v106
    %v382 = vadd.f32 %v381, %v107
    %v383 = vadd.f32 %v382, %v108
    %v384 = vadd.f32 %v383, %v109
    %v385 = vadd.f32 %v384, %v110
    %v386 = vrot.slane %v385, 4
    %v387 = vadd.f32 %v385, %v386
    %v388 = vrot.slane %v387, 2
    %v389 = vadd.f32 %v387, %v388
    %v390 = vrot.slane %v389, 1
    %v391 = vadd.f32 %v389, %v390
    %v392 = vadd.f32 %v111, %v112
    %v393 = vadd.f32 %v392, %v113
    %v394 = vadd.f32 %v393, %v114
    %v395 = vadd.f32 %v394, %v115
    %v396 = vadd.f32 %v395, %v116
    %v397 = vadd.f32 %v396, %v117
    %v398 = vadd.f32 %v397, %v118
    %v399 = vadd.f32 %v398, %v119
    %v400 = vadd.f32 %v399, %v120
    %v401 = vadd.f32 %v400, %v121
    %v402 = vadd.f32 %v401, %v122
    %v403 = vadd.f32 %v402, %v123
    %v404 = vadd.f32 %v403, %v124
    %v405 = vadd.f32 %v404, %v125
    %v406 = vadd.f32 %v405, %v126
    %v407 = vrot.slane %v406, 4
    %v408 = vadd.f32 %v406, %v407
    %v409 = vrot.slane %v408, 2
    %v410 = vadd.f32 %v408, %v409
    %v411 = vrot.slane %v410, 1
    %v412 = vadd.f32 %v410, %v411
    %v413 = vadd.f32 %v127, %v128
    %v414 = vadd.f32 %v413, %v129
    %v415 = vadd.f32 %v414, %v130
    %v416 = vadd.f32 %v415, %v131
    %v417 = vadd.f32 %v416, %v132
    %v418 = vadd.f32 %v417, %v133
    %v419 = vadd.f32 %v418, %v134
    %v420 = vadd.f32 %v419, %v135
    %v421 = vadd.f32 %v420, %v136
    %v422 = vadd.f32 %v421, %v137
    %v423 = vadd.f32 %v422, %v138
    %v424 = vadd.f32 %v423, %v139
    %v425 = vadd.f32 %v424, %v140
    %v426 = vadd.f32 %v425, %v141
    %v427 = vadd.f32 %v426, %v142
    %v428 = vrot.slane %v427, 4
    %v429 = vadd.f32 %v427, %v428
    %v430 = vrot.slane %v429, 2
    %v431 = vadd.f32 %v429, %v430
    %v432 = vrot.slane %v431, 1
    %v433 = vadd.f32 %v431, %v432
    %vm434 = vcmp.gt.f32.partialorder %v223, 0.0
    %vm435 = vcmp.gt.f32.partialorder %v225, 0.0
    %vm436 = vcmp.gt.f32.partialorder %v227, 0.0
    %vm437 = vcmp.gt.f32.partialorder %v229, 0.0
    %vm438 = vcmp.gt.f32.partialorder %v231, 0.0
    %vm439 = vcmp.gt.f32.partialorder %v233, 0.0
    %vm440 = vcmp.gt.f32.partialorder %v235, 0.0
    %vm441 = vcmp.gt.f32.partialorder %v237, 0.0
    %vm442 = vcmp.gt.f32.partialorder %v239, 0.0
    %vm443 = vcmp.gt.f32.partialorder %v241, 0.0
    %vm444 = vcmp.gt.f32.partialorder %v243, 0.0
    %vm445 = vcmp.gt.f32.partialorder %v245, 0.0
    %vm446 = vcmp.gt.f32.partialorder %v247, 0.0
    %vm447 = vcmp.gt.f32.partialorder %v249, 0.0
    %vm448 = vcmp.gt.f32.partialorder %v251, 0.0
    %vm449 = vcmp.gt.f32.partialorder %v253, 0.0
    %vm450 = vcmp.gt.f32.partialorder %v255, 0.0
    %vm451 = vcmp.gt.f32.partialorder %v257, 0.0
    %vm452 = vcmp.gt.f32.partialorder %v259, 0.0
    %vm453 = vcmp.gt.f32.partialorder %v261, 0.0
    %vm454 = vcmp.gt.f32.partialorder %v263, 0.0
    %vm455 = vcmp.gt.f32.partialorder %v265, 0.0
    %vm456 = vcmp.gt.f32.partialorder %v267, 0.0
    %vm457 = vcmp.gt.f32.partialorder %v269, 0.0
    %vm458 = vcmp.gt.f32.partialorder %v271, 0.0
    %vm459 = vcmp.gt.f32.partialorder %v273, 0.0
    %vm460 = vcmp.gt.f32.partialorder %v275, 0.0
    %vm461 = vcmp.gt.f32.partialorder %v277, 0.0
    %vm462 = vcmp.gt.f32.partialorder %v279, 0.0
    %vm463 = vcmp.gt.f32.partialorder %v281, 0.0
    %vm464 = vcmp.gt.f32.partialorder %v283, 0.0
    %vm465 = vcmp.gt.f32.partialorder %v285, 0.0
    %vm466 = vcmp.gt.f32.partialorder %v287, 0.0
    %vm467 = vcmp.gt.f32.partialorder %v289, 0.0
    %vm468 = vcmp.gt.f32.partialorder %v291, 0.0
    %vm469 = vcmp.gt.f32.partialorder %v293, 0.0
    %vm470 = vcmp.gt.f32.partialorder %v295, 0.0
    %vm471 = vcmp.gt.f32.partialorder %v297, 0.0
    %vm472 = vcmp.gt.f32.partialorder %v299, 0.0
    %vm473 = vcmp.gt.f32.partialorder %v301, 0.0
    %vm474 = vcmp.gt.f32.partialorder %v303, 0.0
    %vm475 = vcmp.gt.f32.partialorder %v305, 0.0
    %vm476 = vcmp.gt.f32.partialorder %v307, 0.0
    %vm477 = vcmp.gt.f32.partialorder %v309, 0.0
    %vm478 = vcmp.gt.f32.partialorder %v311, 0.0
    %vm479 = vcmp.gt.f32.partialorder %v313, 0.0
    %vm480 = vcmp.gt.f32.partialorder %v315, 0.0
    %vm481 = vcmp.gt.f32.partialorder %v317, 0.0
    %vm482 = vcmp.gt.f32.partialorder %v319, 0.0
    %vm483 = vcmp.gt.f32.partialorder %v321, 0.0
    %vm484 = vcmp.gt.f32.partialorder %v323, 0.0
    %vm485 = vcmp.gt.f32.partialorder %v325, 0.0
    %vm486 = vcmp.gt.f32.partialorder %v327, 0.0
    %vm487 = vcmp.gt.f32.partialorder %v329, 0.0
    %vm488 = vcmp.gt.f32.partialorder %v331, 0.0
    %vm489 = vcmp.gt.f32.partialorder %v333, 0.0
    %vm490 = vcmp.gt.f32.partialorder %v335, 0.0
    %vm491 = vcmp.gt.f32.partialorder %v337, 0.0
    %vm492 = vcmp.gt.f32.partialorder %v339, 0.0
    %vm493 = vcmp.gt.f32.partialorder %v341, 0.0
    %vm494 = vcmp.gt.f32.partialorder %v343, 0.0
    %vm495 = vcmp.gt.f32.partialorder %v345, 0.0
    %vm496 = vcmp.gt.f32.partialorder %v347, 0.0
    %vm497 = vcmp.gt.f32.partialorder %v349, 0.0
    %v498 = vmax.f32 %v223, 1e-30
    %v499 = vmax.f32 %v225, 1e-30
    %v500 = vmax.f32 %v227, 1e-30
    %v501 = vmax.f32 %v229, 1e-30
    %v502 = vmax.f32 %v231, 1e-30
    %v503 = vmax.f32 %v233, 1e-30
    %v504 = vmax.f32 %v235, 1e-30
    %v505 = vmax.f32 %v237, 1e-30
    %v506 = vmax.f32 %v239, 1e-30
    %v507 = vmax.f32 %v241, 1e-30
    %v508 = vmax.f32 %v243, 1e-30
    %v509 = vmax.f32 %v245, 1e-30
    %v510 = vmax.f32 %v247, 1e-30
    %v511 = vmax.f32 %v249, 1e-30
    %v512 = vmax.f32 %v251, 1e-30
    %v513 = vmax.f32 %v253, 1e-30
    %v514 = vmax.f32 %v255, 1e-30
    %v515 = vmax.f32 %v257, 1e-30
    %v516 = vmax.f32 %v259, 1e-30
    %v517 = vmax.f32 %v261, 1e-30
    %v518 = vmax.f32 %v263, 1e-30
    %v519 = vmax.f32 %v265, 1e-30
    %v520 = vmax.f32 %v267, 1e-30
    %v521 = vmax.f32 %v269, 1e-30
    %v522 = vmax.f32 %v271, 1e-30
    %v523 = vmax.f32 %v273, 1e-30
    %v524 = vmax.f32 %v275, 1e-30
    %v525 = vmax.f32 %v277, 1e-30
    %v526 = vmax.f32 %v279, 1e-30
    %v527 = vmax.f32 %v281, 1e-30
    %v528 = vmax.f32 %v283, 1e-30
    %v529 = vmax.f32 %v285, 1e-30
    %v530 = vmax.f32 %v287, 1e-30
    %v531 = vmax.f32 %v289, 1e-30
    %v532 = vmax.f32 %v291, 1e-30
    %v533 = vmax.f32 %v293, 1e-30
    %v534 = vmax.f32 %v295, 1e-30
    %v535 = vmax.f32 %v297, 1e-30
    %v536 = vmax.f32 %v299, 1e-30
    %v537 = vmax.f32 %v301, 1e-30
    %v538 = vmax.f32 %v303, 1e-30
    %v539 = vmax.f32 %v305, 1e-30
    %v540 = vmax.f32 %v307, 1e-30
    %v541 = vmax.f32 %v309, 1e-30
    %v542 = vmax.f32 %v311, 1e-30
    %v543 = vmax.f32 %v313, 1e-30
    %v544 = vmax.f32 %v315, 1e-30
    %v545 = vmax.f32 %v317, 1e-30
    %v546 = vmax.f32 %v319, 1e-30
    %v547 = vmax.f32 %v321, 1e-30
    %v548 = vmax.f32 %v323, 1e-30
    %v549 = vmax.f32 %v325, 1e-30
    %v550 = vmax.f32 %v327, 1e-30
    %v551 = vmax.f32 %v329, 1e-30
    %v552 = vmax.f32 %v331, 1e-30
    %v553 = vmax.f32 %v333, 1e-30
    %v554 = vmax.f32 %v335, 1e-30
    %v555 = vmax.f32 %v337, 1e-30
    %v556 = vmax.f32 %v339, 1e-30
    %v557 = vmax.f32 %v341, 1e-30
    %v558 = vmax.f32 %v343, 1e-30
    %v559 = vmax.f32 %v345, 1e-30
    %v560 = vmax.f32 %v347, 1e-30
    %v561 = vmax.f32 %v349, 1e-30
    %v562 = vrsqrt.pop %v498
    %v563 = vrsqrt.pop %v499
    %v564 = vrsqrt.pop %v500
    %v565 = vrsqrt.pop %v501
    %v566 = vrsqrt.pop %v502
    %v567 = vrsqrt.pop %v503
    %v568 = vrsqrt.pop %v504
    %v569 = vrsqrt.pop %v505
    %v570 = vrsqrt.pop %v506
    %v571 = vrsqrt.pop %v507
    %v572 = vrsqrt.pop %v508
    %v573 = vrsqrt.pop %v509
    %v574 = vrsqrt.pop %v510
    %v575 = vrsqrt.pop %v511
    %v576 = vrsqrt.pop %v512
    %v577 = vrsqrt.pop %v513
    %v578 = vrsqrt.pop %v514
    %v579 = vrsqrt.pop %v515
    %v580 = vrsqrt.pop %v516
    %v581 = vrsqrt.pop %v517
    %v582 = vrsqrt.pop %v518
    %v583 = vrsqrt.pop %v519
    %v584 = vrsqrt.pop %v520
    %v585 = vrsqrt.pop %v521
    %v586 = vrsqrt.pop %v522
    %v587 = vrsqrt.pop %v523
    %v588 = vrsqrt.pop %v524
    %v589 = vrsqrt.pop %v525
    %v590 = vrsqrt.pop %v526
    %v591 = vrsqrt.pop %v527
    %v592 = vrsqrt.pop %v528
    %v593 = vrsqrt.pop %v529
    %v594 = vrsqrt.pop %v530
    %v595 = vrsqrt.pop %v531
    %v596 = vrsqrt.pop %v532
    %v597 = vrsqrt.pop %v533
    %v598 = vrsqrt.pop %v534
    %v599 = vrsqrt.pop %v535
    %v600 = vrsqrt.pop %v536
    %v601 = vrsqrt.pop %v537
    %v602 = vrsqrt.pop %v538
    %v603 = vrsqrt.pop %v539
    %v604 = vrsqrt.pop %v540
    %v605 = vrsqrt.pop %v541
    %v606 = vrsqrt.pop %v542
    %v607 = vrsqrt.pop %v543
    %v608 = vrsqrt.pop %v544
    %v609 = vrsqrt.pop %v545
    %v610 = vrsqrt.pop %v546
    %v611 = vrsqrt.pop %v547
    %v612 = vrsqrt.pop %v548
    %v613 = vrsqrt.pop %v549
    %v614 = vrsqrt.pop %v550
    %v615 = vrsqrt.pop %v551
    %v616 = vrsqrt.pop %v552
    %v617 = vrsqrt.pop %v553
    %v618 = vrsqrt.pop %v554
    %v619 = vrsqrt.pop %v555
    %v620 = vrsqrt.pop %v556
    %v621 = vrsqrt.pop %v557
    %v622 = vrsqrt.pop %v558
    %v623 = vrsqrt.pop %v559
    %v624 = vrsqrt.pop %v560
    %v625 = vrsqrt.pop %v561
    %v626 = vsel %vm434, %v562, 0.0
    %v627 = vsel %vm435, %v563, 0.0
    %v628 = vsel %vm436, %v564, 0.0
    %v629 = vsel %vm437, %v565, 0.0
    %v630 = vsel %vm438, %v566, 0.0
    %v631 = vsel %vm439, %v567, 0.0
    %v632 = vsel %vm440, %v568, 0.0
    %v633 = vsel %vm441, %v569, 0.0
    %v634 = vsel %vm442, %v570, 0.0
    %v635 = vsel %vm443, %v571, 0.0
    %v636 = vsel %vm444, %v572, 0.0
    %v637 = vsel %vm445, %v573, 0.0
    %v638 = vsel %vm446, %v574, 0.0
    %v639 = vsel %vm447, %v575, 0.0
    %v640 = vsel %vm448, %v576, 0.0
    %v641 = vsel %vm449, %v577, 0.0
    %v642 = vsel %vm450, %v578, 0.0
    %v643 = vsel %vm451, %v579, 0.0
    %v644 = vsel %vm452, %v580, 0.0
    %v645 = vsel %vm453, %v581, 0.0
    %v646 = vsel %vm454, %v582, 0.0
    %v647 = vsel %vm455, %v583, 0.0
    %v648 = vsel %vm456, %v584, 0.0
    %v649 = vsel %vm457, %v585, 0.0
    %v650 = vsel %vm458, %v586, 0.0
    %v651 = vsel %vm459, %v587, 0.0
    %v652 = vsel %vm460, %v588, 0.0
    %v653 = vsel %vm461, %v589, 0.0
    %v654 = vsel %vm462, %v590, 0.0
    %v655 = vsel %vm463, %v591, 0.0
    %v656 = vsel %vm464, %v592, 0.0
    %v657 = vsel %vm465, %v593, 0.0
    %v658 = vsel %vm466, %v594, 0.0
    %v659 = vsel %vm467, %v595, 0.0
    %v660 = vsel %vm468, %v596, 0.0
    %v661 = vsel %vm469, %v597, 0.0
    %v662 = vsel %vm470, %v598, 0.0
    %v663 = vsel %vm471, %v599, 0.0
    %v664 = vsel %vm472, %v600, 0.0
    %v665 = vsel %vm473, %v601, 0.0
    %v666 = vsel %vm474, %v602, 0.0
    %v667 = vsel %vm475, %v603, 0.0
    %v668 = vsel %vm476, %v604, 0.0
    %v669 = vsel %vm477, %v605, 0.0
    %v670 = vsel %vm478, %v606, 0.0
    %v671 = vsel %vm479, %v607, 0.0
    %v672 = vsel %vm480, %v608, 0.0
    %v673 = vsel %vm481, %v609, 0.0
    %v674 = vsel %vm482, %v610, 0.0
    %v675 = vsel %vm483, %v611, 0.0
    %v676 = vsel %vm484, %v612, 0.0
    %v677 = vsel %vm485, %v613, 0.0
    %v678 = vsel %vm486, %v614, 0.0
    %v679 = vsel %vm487, %v615, 0.0
    %v680 = vsel %vm488, %v616, 0.0
    %v681 = vsel %vm489, %v617, 0.0
    %v682 = vsel %vm490, %v618, 0.0
    %v683 = vsel %vm491, %v619, 0.0
    %v684 = vsel %vm492, %v620, 0.0
    %v685 = vsel %vm493, %v621, 0.0
    %v686 = vsel %vm494, %v622, 0.0
    %v687 = vsel %vm495, %v623, 0.0
    %v688 = vsel %vm496, %v624, 0.0
    %v689 = vsel %vm497, %v625, 0.0
    %vm690 = vcmp.gt.f32.partialorder %v370, 0.0
    %vm691 = vcmp.gt.f32.partialorder %v391, 0.0
    %vm692 = vcmp.gt.f32.partialorder %v412, 0.0
    %vm693 = vcmp.gt.f32.partialorder %v433, 0.0
    %v694 = vmax.f32 %v370, 1e-30
    %v695 = vmax.f32 %v391, 1e-30
    %v696 = vmax.f32 %v412, 1e-30
    %v697 = vmax.f32 %v433, 1e-30
    %v698 = vrsqrt.pop %v694
    %v699 = vrsqrt.pop %v695
    %v700 = vrsqrt.pop %v696
    %v701 = vrsqrt.pop %v697
    %v702 = vsel %vm690, %v698, 0.0
    %v703 = vsel %vm691, %v699, 0.0
    %v704 = vsel %vm692, %v700, 0.0
    %v705 = vsel %vm693, %v701, 0.0
    %v706 = vlaneseq
    %v707 = vshrl.u32 %v706, 7
    %v708 = vsub.s32 0, %v707
    %v709 = vrot.slane %v219, %v708
    %vm710 = vcmask 261120
    %v712 = vsel %vm710, %v143, 0
    %v715 = vsel %vm710, %v144, 0
    %v718 = vsel %vm710, %v145, 0
    %v721 = vsel %vm710, %v146, 0
    %v724 = vsel %vm710, %v147, 0
    %v727 = vsel %vm710, %v148, 0
    %v730 = vsel %vm710, %v149, 0
    %v733 = vsel %vm710, %v150, 0
    %v736 = vsel %vm710, %v151, 0
    %v739 = vsel %vm710, %v152, 0
    %v742 = vsel %vm710, %v153, 0
    %v745 = vsel %vm710, %v154, 0
    %v748 = vsel %vm710, %v155, 0
    %v751 = vsel %vm710, %v156, 0
    %v754 = vsel %vm710, %v157, 0
    %v757 = vsel %vm710, %v158, 0
    %v760 = vsel %vm710, %v159, 0
    %v763 = vsel %vm710, %v160, 0
    %v766 = vsel %vm710, %v161, 0
    %v769 = vsel %vm710, %v162, 0
    %v772 = vsel %vm710, %v163, 0
    %v775 = vsel %vm710, %v164, 0
    %v778 = vsel %vm710, %v165, 0
    %v781 = vsel %vm710, %v166, 0
    %v784 = vsel %vm710, %v167, 0
    %v787 = vsel %vm710, %v168, 0
    %v790 = vsel %vm710, %v169, 0
    %v793 = vsel %vm710, %v170, 0
    %v796 = vsel %vm710, %v171, 0
    %v799 = vsel %vm710, %v172, 0
    %v802 = vsel %vm710, %v173, 0
    %v805 = vsel %vm710, %v174, 0
    %v808 = vsel %vm710, %v175, 0
    %v811 = vsel %vm710, %v176, 0
    %v814 = vsel %vm710, %v177, 0
    %v817 = vsel %vm710, %v178, 0
    %v820 = vsel %vm710, %v179, 0
    %v823 = vsel %vm710, %v180, 0
    %v826 = vsel %vm710, %v181, 0
    %v829 = vsel %vm710, %v182, 0
    %v832 = vsel %vm710, %v183, 0
    %v835 = vsel %vm710, %v184, 0
    %v838 = vsel %vm710, %v185, 0
    %v841 = vsel %vm710, %v186, 0
    %v844 = vsel %vm710, %v187, 0
    %v847 = vsel %vm710, %v188, 0
    %v850 = vsel %vm710, %v189, 0
    %v853 = vsel %vm710, %v190, 0
    %v856 = vsel %vm710, %v191, 0
    %v859 = vsel %vm710, %v192, 0
    %v862 = vsel %vm710, %v193, 0
    %v865 = vsel %vm710, %v194, 0
    %v868 = vsel %vm710, %v195, 0
    %v871 = vsel %vm710, %v196, 0
    %v874 = vsel %vm710, %v197, 0
    %v877 = vsel %vm710, %v198, 0
    %v880 = vsel %vm710, %v199, 0
    %v883 = vsel %vm710, %v200, 0
    %v886 = vsel %vm710, %v201, 0
    %v889 = vsel %vm710, %v202, 0
    %v892 = vsel %vm710, %v203, 0
    %v895 = vsel %vm710, %v204, 0
    %v898 = vsel %vm710, %v205, 0
    %v901 = vsel %vm710, %v206, 0
    %903 = vmatprep.subr.mxu0 0.0
    %904 = vmatpush1.msra.mxu0 %v207
    %905 = vmatprep.subr.mxu0 0.0
    %906 = vmatpush1.msra.mxu0 %v208
    %907 = vmatprep.subr.mxu0 0.0
    %908 = vmatpush1.msra.mxu0 %v209
    %909 = vmatprep.subr.mxu0 0.0
    %910 = vmatpush1.msra.mxu0 %v210
    %911 = vmatprep.subr.mxu0 0.0
    %912 = vmatpush1.msra.mxu0 0.0
    %913 = vmatprep.subr.mxu0 0.0
    %914 = vmatpush1.msra.mxu0 0.0
    %915 = vmatprep.subr.mxu0 0.0
    %916 = vmatpush1.msra.mxu0 0.0
    %917 = vmatprep.subr.mxu0 0.0
    %918 = vmatpush1.msra.mxu0 0.0
    %919 = vmatprep.subr.mxu0 0.0
    %920 = vmatpush1.msra.mxu0 0.0
    %921 = vmatprep.subr.mxu0 0.0
    %922 = vmatpush1.msra.mxu0 0.0
    %923 = vmatprep.subr.mxu0 0.0
    %924 = vmatpush1.msra.mxu0 0.0
    %925 = vmatprep.subr.mxu0 0.0
    %926 = vmatpush1.msra.mxu0 0.0
    %927 = vmatprep.subr.mxu0 0.0
    %928 = vmatpush1.msra.mxu0 0.0
    %929 = vmatprep.subr.mxu0 0.0
    %930 = vmatpush1.msra.mxu0 0.0
    %931 = vmatprep.subr.mxu0 0.0
    %932 = vmatpush1.msra.mxu0 0.0
    %933 = vmatprep.subr.mxu0 0.0
    %934 = vmatpush1.msra.mxu0 0.0
    %935 = vmatprep.subr.mxu0 0.0
    %936 = vmatpush1.msra.mxu0 0.0
    %937 = vmatprep.subr.mxu0 0.0
    %938 = vmatpush1.msra.mxu0 0.0
    %939 = vmatprep.subr.mxu0 0.0
    %940 = vmatpush1.msra.mxu0 0.0
    %941 = vmatprep.subr.mxu0 0.0
    %942 = vmatpush1.msra.mxu0 0.0
    %943 = vmatprep.subr.mxu0 0.0
    %944 = vmatpush1.msra.mxu0 0.0
    %945 = vmatprep.subr.mxu0 0.0
    %946 = vmatpush1.msra.mxu0 0.0
    %947 = vmatprep.subr.mxu0 0.0
    %948 = vmatpush1.msra.mxu0 0.0
    %949 = vmatprep.subr.mxu0 0.0
    %950 = vmatpush1.msra.mxu0 0.0
    %951 = vmatprep.subr.mxu0 0.0
    %952 = vmatpush1.msra.mxu0 0.0
    %953 = vmatprep.subr.mxu0 0.0
    %954 = vmatpush1.msra.mxu0 0.0
    %955 = vmatprep.subr.mxu0 0.0
    %956 = vmatpush1.msra.mxu0 0.0
    %957 = vmatprep.subr.mxu0 0.0
    %958 = vmatpush1.msra.mxu0 0.0
    %959 = vmatprep.subr.mxu0 0.0
    %960 = vmatpush1.msra.mxu0 0.0
    %961 = vmatprep.subr.mxu0 0.0
    %962 = vmatpush1.msra.mxu0 0.0
    %963 = vmatprep.subr.mxu0 0.0
    %964 = vmatpush1.msra.mxu0 0.0
    %965 = vmatprep.subr.mxu0 0.0
    %966 = vmatpush1.msra.mxu0 0.0
    %967 = vmatprep.mubr.f32.mxu0 0.0
    %968 = vmatmul.mubr.f32.gmra.mrb[0].mxu0 %v712
    %v969 = vpop.f32.mrb[0].mxu0
    %v970 = vadd.f32 %v709, %v969
    %v971 = vpop.f32.mrb[0].mxu0
    %972 = vmatprep.mubr.f32.mxu0 0.0
    %973 = vmatmul.mubr.f32.gmra.mrb[0].mxu0 %v715
    %v974 = vpop.f32.mrb[0].mxu0
    %v975 = vadd.f32 %v709, %v974
    %v976 = vpop.f32.mrb[0].mxu0
    %977 = vmatprep.mubr.f32.mxu0 0.0
    %978 = vmatmul.mubr.f32.gmra.mrb[0].mxu0 %v718
    %v979 = vpop.f32.mrb[0].mxu0
    %v980 = vadd.f32 %v709, %v979
    %v981 = vpop.f32.mrb[0].mxu0
    %982 = vmatprep.mubr.f32.mxu0 0.0
    %983 = vmatmul.mubr.f32.gmra.mrb[0].mxu0 %v721
    %v984 = vpop.f32.mrb[0].mxu0
    %v985 = vadd.f32 %v709, %v984
    %v986 = vpop.f32.mrb[0].mxu0
    %987 = vmatprep.mubr.f32.mxu0 0.0
    %988 = vmatmul.mubr.f32.gmra.mrb[0].mxu0 %v724
    %v989 = vpop.f32.mrb[0].mxu0
    %v990 = vadd.f32 %v709, %v989
    %v991 = vpop.f32.mrb[0].mxu0
    %992 = vmatprep.mubr.f32.mxu0 0.0
    %993 = vmatmul.mubr.f32.gmra.mrb[0].mxu0 %v727
    %v994 = vpop.f32.mrb[0].mxu0
    %v995 = vadd.f32 %v709, %v994
    %v996 = vpop.f32.mrb[0].mxu0
    %997 = vmatprep.mubr.f32.mxu0 0.0
    %998 = vmatmul.mubr.f32.gmra.mrb[0].mxu0 %v730
    %v999 = vpop.f32.mrb[0].mxu0
    %v1000 = vadd.f32 %v709, %v999
    %v1001 = vpop.f32.mrb[0].mxu0
    %1002 = vmatprep.mubr.f32.mxu0 0.0
    %1003 = vmatmul.mubr.f32.gmra.mrb[0].mxu0 %v733
    %v1004 = vpop.f32.mrb[0].mxu0
    %v1005 = vadd.f32 %v709, %v1004
    %v1006 = vpop.f32.mrb[0].mxu0
    %1007 = vmatprep.mubr.f32.mxu0 0.0
    %1008 = vmatmul.mubr.f32.gmra.mrb[0].mxu0 %v736
    %v1009 = vpop.f32.mrb[0].mxu0
    %v1010 = vadd.f32 %v709, %v1009
    %v1011 = vpop.f32.mrb[0].mxu0
    %1012 = vmatprep.mubr.f32.mxu0 0.0
    %1013 = vmatmul.mubr.f32.gmra.mrb[0].mxu0 %v739
    %v1014 = vpop.f32.mrb[0].mxu0
    %v1015 = vadd.f32 %v709, %v1014
    %v1016 = vpop.f32.mrb[0].mxu0
    %1017 = vmatprep.mubr.f32.mxu0 0.0
    %1018 = vmatmul.mubr.f32.gmra.mrb[0].mxu0 %v742
    %v1019 = vpop.f32.mrb[0].mxu0
    %v1020 = vadd.f32 %v709, %v1019
    %v1021 = vpop.f32.mrb[0].mxu0
    %1022 = vmatprep.mubr.f32.mxu0 0.0
    %1023 = vmatmul.mubr.f32.gmra.mrb[0].mxu0 %v745
    %v1024 = vpop.f32.mrb[0].mxu0
    %v1025 = vadd.f32 %v709, %v1024
    %v1026 = vpop.f32.mrb[0].mxu0
    %1027 = vmatprep.mubr.f32.mxu0 0.0
    %1028 = vmatmul.mubr.f32.gmra.mrb[0].mxu0 %v748
    %v1029 = vpop.f32.mrb[0].mxu0
    %v1030 = vadd.f32 %v709, %v1029
    %v1031 = vpop.f32.mrb[0].mxu0
    %1032 = vmatprep.mubr.f32.mxu0 0.0
    %1033 = vmatmul.mubr.f32.gmra.mrb[0].mxu0 %v751
    %v1034 = vpop.f32.mrb[0].mxu0
    %v1035 = vadd.f32 %v709, %v1034
    %v1036 = vpop.f32.mrb[0].mxu0
    %1037 = vmatprep.mubr.f32.mxu0 0.0
    %1038 = vmatmul.mubr.f32.gmra.mrb[0].mxu0 %v754
    %v1039 = vpop.f32.mrb[0].mxu0
    %v1040 = vadd.f32 %v709, %v1039
    %v1041 = vpop.f32.mrb[0].mxu0
    %1042 = vmatprep.mubr.f32.mxu0 0.0
    %1043 = vmatmul.mubr.f32.gmra.mrb[0].mxu0 %v757
    %v1044 = vpop.f32.mrb[0].mxu0
    %v1045 = vadd.f32 %v709, %v1044
    %v1046 = vpop.f32.mrb[0].mxu0
    %1047 = vmatprep.mubr.f32.mxu0 0.0
    %1048 = vmatmul.mubr.f32.gmra.mrb[0].mxu0 %v760
    %v1049 = vpop.f32.mrb[0].mxu0
    %v1050 = vadd.f32 %v709, %v1049
    %v1051 = vpop.f32.mrb[0].mxu0
    %1052 = vmatprep.mubr.f32.mxu0 0.0
    %1053 = vmatmul.mubr.f32.gmra.mrb[0].mxu0 %v763
    %v1054 = vpop.f32.mrb[0].mxu0
    %v1055 = vadd.f32 %v709, %v1054
    %v1056 = vpop.f32.mrb[0].mxu0
    %1057 = vmatprep.mubr.f32.mxu0 0.0
    %1058 = vmatmul.mubr.f32.gmra.mrb[0].mxu0 %v766
    %v1059 = vpop.f32.mrb[0].mxu0
    %v1060 = vadd.f32 %v709, %v1059
    %v1061 = vpop.f32.mrb[0].mxu0
    %1062 = vmatprep.mubr.f32.mxu0 0.0
    %1063 = vmatmul.mubr.f32.gmra.mrb[0].mxu0 %v769
    %v1064 = vpop.f32.mrb[0].mxu0
    %v1065 = vadd.f32 %v709, %v1064
    %v1066 = vpop.f32.mrb[0].mxu0
    %1067 = vmatprep.mubr.f32.mxu0 0.0
    %1068 = vmatmul.mubr.f32.gmra.mrb[0].mxu0 %v772
    %v1069 = vpop.f32.mrb[0].mxu0
    %v1070 = vadd.f32 %v709, %v1069
    %v1071 = vpop.f32.mrb[0].mxu0
    %1072 = vmatprep.mubr.f32.mxu0 0.0
    %1073 = vmatmul.mubr.f32.gmra.mrb[0].mxu0 %v775
    %v1074 = vpop.f32.mrb[0].mxu0
    %v1075 = vadd.f32 %v709, %v1074
    %v1076 = vpop.f32.mrb[0].mxu0
    %1077 = vmatprep.mubr.f32.mxu0 0.0
    %1078 = vmatmul.mubr.f32.gmra.mrb[0].mxu0 %v778
    %v1079 = vpop.f32.mrb[0].mxu0
    %v1080 = vadd.f32 %v709, %v1079
    %v1081 = vpop.f32.mrb[0].mxu0
    %1082 = vmatprep.mubr.f32.mxu0 0.0
    %1083 = vmatmul.mubr.f32.gmra.mrb[0].mxu0 %v781
    %v1084 = vpop.f32.mrb[0].mxu0
    %v1085 = vadd.f32 %v709, %v1084
    %v1086 = vpop.f32.mrb[0].mxu0
    %1087 = vmatprep.mubr.f32.mxu0 0.0
    %1088 = vmatmul.mubr.f32.gmra.mrb[0].mxu0 %v784
    %v1089 = vpop.f32.mrb[0].mxu0
    %v1090 = vadd.f32 %v709, %v1089
    %v1091 = vpop.f32.mrb[0].mxu0
    %1092 = vmatprep.mubr.f32.mxu0 0.0
    %1093 = vmatmul.mubr.f32.gmra.mrb[0].mxu0 %v787
    %v1094 = vpop.f32.mrb[0].mxu0
    %v1095 = vadd.f32 %v709, %v1094
    %v1096 = vpop.f32.mrb[0].mxu0
    %1097 = vmatprep.mubr.f32.mxu0 0.0
    %1098 = vmatmul.mubr.f32.gmra.mrb[0].mxu0 %v790
    %v1099 = vpop.f32.mrb[0].mxu0
    %v1100 = vadd.f32 %v709, %v1099
    %v1101 = vpop.f32.mrb[0].mxu0
    %1102 = vmatprep.mubr.f32.mxu0 0.0
    %1103 = vmatmul.mubr.f32.gmra.mrb[0].mxu0 %v793
    %v1104 = vpop.f32.mrb[0].mxu0
    %v1105 = vadd.f32 %v709, %v1104
    %v1106 = vpop.f32.mrb[0].mxu0
    %1107 = vmatprep.mubr.f32.mxu0 0.0
    %1108 = vmatmul.mubr.f32.gmra.mrb[0].mxu0 %v796
    %v1109 = vpop.f32.mrb[0].mxu0
    %v1110 = vadd.f32 %v709, %v1109
    %v1111 = vpop.f32.mrb[0].mxu0
    %1112 = vmatprep.mubr.f32.mxu0 0.0
    %1113 = vmatmul.mubr.f32.gmra.mrb[0].mxu0 %v799
    %v1114 = vpop.f32.mrb[0].mxu0
    %v1115 = vadd.f32 %v709, %v1114
    %v1116 = vpop.f32.mrb[0].mxu0
    %1117 = vmatprep.mubr.f32.mxu0 0.0
    %1118 = vmatmul.mubr.f32.gmra.mrb[0].mxu0 %v802
    %v1119 = vpop.f32.mrb[0].mxu0
    %v1120 = vadd.f32 %v709, %v1119
    %v1121 = vpop.f32.mrb[0].mxu0
    %1122 = vmatprep.mubr.f32.mxu0 0.0
    %1123 = vmatmul.mubr.f32.gmra.mrb[0].mxu0 %v805
    %v1124 = vpop.f32.mrb[0].mxu0
    %v1125 = vadd.f32 %v709, %v1124
    %v1126 = vpop.f32.mrb[0].mxu0
    %1127 = vmatprep.mubr.f32.mxu0 0.0
    %1128 = vmatmul.mubr.f32.gmra.mrb[0].mxu0 %v808
    %v1129 = vpop.f32.mrb[0].mxu0
    %v1130 = vadd.f32 %v709, %v1129
    %v1131 = vpop.f32.mrb[0].mxu0
    %1132 = vmatprep.mubr.f32.mxu0 0.0
    %1133 = vmatmul.mubr.f32.gmra.mrb[0].mxu0 %v811
    %v1134 = vpop.f32.mrb[0].mxu0
    %v1135 = vadd.f32 %v709, %v1134
    %v1136 = vpop.f32.mrb[0].mxu0
    %1137 = vmatprep.mubr.f32.mxu0 0.0
    %1138 = vmatmul.mubr.f32.gmra.mrb[0].mxu0 %v814
    %v1139 = vpop.f32.mrb[0].mxu0
    %v1140 = vadd.f32 %v709, %v1139
    %v1141 = vpop.f32.mrb[0].mxu0
    %1142 = vmatprep.mubr.f32.mxu0 0.0
    %1143 = vmatmul.mubr.f32.gmra.mrb[0].mxu0 %v817
    %v1144 = vpop.f32.mrb[0].mxu0
    %v1145 = vadd.f32 %v709, %v1144
    %v1146 = vpop.f32.mrb[0].mxu0
    %1147 = vmatprep.mubr.f32.mxu0 0.0
    %1148 = vmatmul.mubr.f32.gmra.mrb[0].mxu0 %v820
    %v1149 = vpop.f32.mrb[0].mxu0
    %v1150 = vadd.f32 %v709, %v1149
    %v1151 = vpop.f32.mrb[0].mxu0
    %1152 = vmatprep.mubr.f32.mxu0 0.0
    %1153 = vmatmul.mubr.f32.gmra.mrb[0].mxu0 %v823
    %v1154 = vpop.f32.mrb[0].mxu0
    %v1155 = vadd.f32 %v709, %v1154
    %v1156 = vpop.f32.mrb[0].mxu0
    %1157 = vmatprep.mubr.f32.mxu0 0.0
    %1158 = vmatmul.mubr.f32.gmra.mrb[0].mxu0 %v826
    %v1159 = vpop.f32.mrb[0].mxu0
    %v1160 = vadd.f32 %v709, %v1159
    %v1161 = vpop.f32.mrb[0].mxu0
    %1162 = vmatprep.mubr.f32.mxu0 0.0
    %1163 = vmatmul.mubr.f32.gmra.mrb[0].mxu0 %v829
    %v1164 = vpop.f32.mrb[0].mxu0
    %v1165 = vadd.f32 %v709, %v1164
    %v1166 = vpop.f32.mrb[0].mxu0
    %1167 = vmatprep.mubr.f32.mxu0 0.0
    %1168 = vmatmul.mubr.f32.gmra.mrb[0].mxu0 %v832
    %v1169 = vpop.f32.mrb[0].mxu0
    %v1170 = vadd.f32 %v709, %v1169
    %v1171 = vpop.f32.mrb[0].mxu0
    %1172 = vmatprep.mubr.f32.mxu0 0.0
    %1173 = vmatmul.mubr.f32.gmra.mrb[0].mxu0 %v835
    %v1174 = vpop.f32.mrb[0].mxu0
    %v1175 = vadd.f32 %v709, %v1174
    %v1176 = vpop.f32.mrb[0].mxu0
    %1177 = vmatprep.mubr.f32.mxu0 0.0
    %1178 = vmatmul.mubr.f32.gmra.mrb[0].mxu0 %v838
    %v1179 = vpop.f32.mrb[0].mxu0
    %v1180 = vadd.f32 %v709, %v1179
    %v1181 = vpop.f32.mrb[0].mxu0
    %1182 = vmatprep.mubr.f32.mxu0 0.0
    %1183 = vmatmul.mubr.f32.gmra.mrb[0].mxu0 %v841
    %v1184 = vpop.f32.mrb[0].mxu0
    %v1185 = vadd.f32 %v709, %v1184
    %v1186 = vpop.f32.mrb[0].mxu0
    %1187 = vmatprep.mubr.f32.mxu0 0.0
    %1188 = vmatmul.mubr.f32.gmra.mrb[0].mxu0 %v844
    %v1189 = vpop.f32.mrb[0].mxu0
    %v1190 = vadd.f32 %v709, %v1189
    %v1191 = vpop.f32.mrb[0].mxu0
    %1192 = vmatprep.mubr.f32.mxu0 0.0
    %1193 = vmatmul.mubr.f32.gmra.mrb[0].mxu0 %v847
    %v1194 = vpop.f32.mrb[0].mxu0
    %v1195 = vadd.f32 %v709, %v1194
    %v1196 = vpop.f32.mrb[0].mxu0
    %1197 = vmatprep.mubr.f32.mxu0 0.0
    %1198 = vmatmul.mubr.f32.gmra.mrb[0].mxu0 %v850
    %v1199 = vpop.f32.mrb[0].mxu0
    %v1200 = vadd.f32 %v709, %v1199
    %v1201 = vpop.f32.mrb[0].mxu0
    %1202 = vmatprep.mubr.f32.mxu0 0.0
    %1203 = vmatmul.mubr.f32.gmra.mrb[0].mxu0 %v853
    %v1204 = vpop.f32.mrb[0].mxu0
    %v1205 = vadd.f32 %v709, %v1204
    %v1206 = vpop.f32.mrb[0].mxu0
    %1207 = vmatprep.mubr.f32.mxu0 0.0
    %1208 = vmatmul.mubr.f32.gmra.mrb[0].mxu0 %v856
    %v1209 = vpop.f32.mrb[0].mxu0
    %v1210 = vadd.f32 %v709, %v1209
    %v1211 = vpop.f32.mrb[0].mxu0
    %1212 = vmatprep.mubr.f32.mxu0 0.0
    %1213 = vmatmul.mubr.f32.gmra.mrb[0].mxu0 %v859
    %v1214 = vpop.f32.mrb[0].mxu0
    %v1215 = vadd.f32 %v709, %v1214
    %v1216 = vpop.f32.mrb[0].mxu0
    %1217 = vmatprep.mubr.f32.mxu0 0.0
    %1218 = vmatmul.mubr.f32.gmra.mrb[0].mxu0 %v862
    %v1219 = vpop.f32.mrb[0].mxu0
    %v1220 = vadd.f32 %v709, %v1219
    %v1221 = vpop.f32.mrb[0].mxu0
    %1222 = vmatprep.mubr.f32.mxu0 0.0
    %1223 = vmatmul.mubr.f32.gmra.mrb[0].mxu0 %v865
    %v1224 = vpop.f32.mrb[0].mxu0
    %v1225 = vadd.f32 %v709, %v1224
    %v1226 = vpop.f32.mrb[0].mxu0
    %1227 = vmatprep.mubr.f32.mxu0 0.0
    %1228 = vmatmul.mubr.f32.gmra.mrb[0].mxu0 %v868
    %v1229 = vpop.f32.mrb[0].mxu0
    %v1230 = vadd.f32 %v709, %v1229
    %v1231 = vpop.f32.mrb[0].mxu0
    %1232 = vmatprep.mubr.f32.mxu0 0.0
    %1233 = vmatmul.mubr.f32.gmra.mrb[0].mxu0 %v871
    %v1234 = vpop.f32.mrb[0].mxu0
    %v1235 = vadd.f32 %v709, %v1234
    %v1236 = vpop.f32.mrb[0].mxu0
    %1237 = vmatprep.mubr.f32.mxu0 0.0
    %1238 = vmatmul.mubr.f32.gmra.mrb[0].mxu0 %v874
    %v1239 = vpop.f32.mrb[0].mxu0
    %v1240 = vadd.f32 %v709, %v1239
    %v1241 = vpop.f32.mrb[0].mxu0
    %1242 = vmatprep.mubr.f32.mxu0 0.0
    %1243 = vmatmul.mubr.f32.gmra.mrb[0].mxu0 %v877
    %v1244 = vpop.f32.mrb[0].mxu0
    %v1245 = vadd.f32 %v709, %v1244
    %v1246 = vpop.f32.mrb[0].mxu0
    %1247 = vmatprep.mubr.f32.mxu0 0.0
    %1248 = vmatmul.mubr.f32.gmra.mrb[0].mxu0 %v880
    %v1249 = vpop.f32.mrb[0].mxu0
    %v1250 = vadd.f32 %v709, %v1249
    %v1251 = vpop.f32.mrb[0].mxu0
    %1252 = vmatprep.mubr.f32.mxu0 0.0
    %1253 = vmatmul.mubr.f32.gmra.mrb[0].mxu0 %v883
    %v1254 = vpop.f32.mrb[0].mxu0
    %v1255 = vadd.f32 %v709, %v1254
    %v1256 = vpop.f32.mrb[0].mxu0
    %1257 = vmatprep.mubr.f32.mxu0 0.0
    %1258 = vmatmul.mubr.f32.gmra.mrb[0].mxu0 %v886
    %v1259 = vpop.f32.mrb[0].mxu0
    %v1260 = vadd.f32 %v709, %v1259
    %v1261 = vpop.f32.mrb[0].mxu0
    %1262 = vmatprep.mubr.f32.mxu0 0.0
    %1263 = vmatmul.mubr.f32.gmra.mrb[0].mxu0 %v889
    %v1264 = vpop.f32.mrb[0].mxu0
    %v1265 = vadd.f32 %v709, %v1264
    %v1266 = vpop.f32.mrb[0].mxu0
    %1267 = vmatprep.mubr.f32.mxu0 0.0
    %1268 = vmatmul.mubr.f32.gmra.mrb[0].mxu0 %v892
    %v1269 = vpop.f32.mrb[0].mxu0
    %v1270 = vadd.f32 %v709, %v1269
    %v1271 = vpop.f32.mrb[0].mxu0
    %1272 = vmatprep.mubr.f32.mxu0 0.0
    %1273 = vmatmul.mubr.f32.gmra.mrb[0].mxu0 %v895
    %v1274 = vpop.f32.mrb[0].mxu0
    %v1275 = vadd.f32 %v709, %v1274
    %v1276 = vpop.f32.mrb[0].mxu0
    %1277 = vmatprep.mubr.f32.mxu0 0.0
    %1278 = vmatmul.mubr.f32.gmra.mrb[0].mxu0 %v898
    %v1279 = vpop.f32.mrb[0].mxu0
    %v1280 = vadd.f32 %v709, %v1279
    %v1281 = vpop.f32.mrb[0].mxu0
    %1282 = vmatprep.mubr.f32.mxu0 0.0
    %1283 = vmatmul.mubr.f32.gmra.mrb[0].mxu0 %v901
    %v1284 = vpop.f32.mrb[0].mxu0
    %v1285 = vadd.f32 %v709, %v1284
    %v1286 = vpop.f32.mrb[0].mxu0
    %1287 = vdwg.mxu0
    %v1288 = vmul.f32 %v626, %v970
    %v1289 = vmul.f32 %v627, %v975
    %v1290 = vmul.f32 %v628, %v980
    %v1291 = vmul.f32 %v629, %v985
    %v1292 = vmul.f32 %v630, %v990
    %v1293 = vmul.f32 %v631, %v995
    %v1294 = vmul.f32 %v632, %v1000
    %v1295 = vmul.f32 %v633, %v1005
    %v1296 = vmul.f32 %v634, %v1010
    %v1297 = vmul.f32 %v635, %v1015
    %v1298 = vmul.f32 %v636, %v1020
    %v1299 = vmul.f32 %v637, %v1025
    %v1300 = vmul.f32 %v638, %v1030
    %v1301 = vmul.f32 %v639, %v1035
    %v1302 = vmul.f32 %v640, %v1040
    %v1303 = vmul.f32 %v641, %v1045
    %v1304 = vmul.f32 %v642, %v1050
    %v1305 = vmul.f32 %v643, %v1055
    %v1306 = vmul.f32 %v644, %v1060
    %v1307 = vmul.f32 %v645, %v1065
    %v1308 = vmul.f32 %v646, %v1070
    %v1309 = vmul.f32 %v647, %v1075
    %v1310 = vmul.f32 %v648, %v1080
    %v1311 = vmul.f32 %v649, %v1085
    %v1312 = vmul.f32 %v650, %v1090
    %v1313 = vmul.f32 %v651, %v1095
    %v1314 = vmul.f32 %v652, %v1100
    %v1315 = vmul.f32 %v653, %v1105
    %v1316 = vmul.f32 %v654, %v1110
    %v1317 = vmul.f32 %v655, %v1115
    %v1318 = vmul.f32 %v656, %v1120
    %v1319 = vmul.f32 %v657, %v1125
    %v1320 = vmul.f32 %v658, %v1130
    %v1321 = vmul.f32 %v659, %v1135
    %v1322 = vmul.f32 %v660, %v1140
    %v1323 = vmul.f32 %v661, %v1145
    %v1324 = vmul.f32 %v662, %v1150
    %v1325 = vmul.f32 %v663, %v1155
    %v1326 = vmul.f32 %v664, %v1160
    %v1327 = vmul.f32 %v665, %v1165
    %v1328 = vmul.f32 %v666, %v1170
    %v1329 = vmul.f32 %v667, %v1175
    %v1330 = vmul.f32 %v668, %v1180
    %v1331 = vmul.f32 %v669, %v1185
    %v1332 = vmul.f32 %v670, %v1190
    %v1333 = vmul.f32 %v671, %v1195
    %v1334 = vmul.f32 %v672, %v1200
    %v1335 = vmul.f32 %v673, %v1205
    %v1336 = vmul.f32 %v674, %v1210
    %v1337 = vmul.f32 %v675, %v1215
    %v1338 = vmul.f32 %v676, %v1220
    %v1339 = vmul.f32 %v677, %v1225
    %v1340 = vmul.f32 %v678, %v1230
    %v1341 = vmul.f32 %v679, %v1235
    %v1342 = vmul.f32 %v680, %v1240
    %v1343 = vmul.f32 %v681, %v1245
    %v1344 = vmul.f32 %v682, %v1250
    %v1345 = vmul.f32 %v683, %v1255
    %v1346 = vmul.f32 %v684, %v1260
    %v1347 = vmul.f32 %v685, %v1265
    %v1348 = vmul.f32 %v686, %v1270
    %v1349 = vmul.f32 %v687, %v1275
    %v1350 = vmul.f32 %v688, %v1280
    %v1351 = vmul.f32 %v689, %v1285
    %1352 = vmatprep.subr.mxu0 0.0
    %1353 = vmatpush1.msra.mxu0 %v1288
    %1354 = vmatprep.subr.mxu0 0.0
    %1355 = vmatpush1.msra.mxu0 %v1289
    %1356 = vmatprep.subr.mxu0 0.0
    %1357 = vmatpush1.msra.mxu0 %v1290
    %1358 = vmatprep.subr.mxu0 0.0
    %1359 = vmatpush1.msra.mxu0 %v1291
    %1360 = vmatprep.subr.mxu0 0.0
    %1361 = vmatpush1.msra.mxu0 %v1292
    %1362 = vmatprep.subr.mxu0 0.0
    %1363 = vmatpush1.msra.mxu0 %v1293
    %1364 = vmatprep.subr.mxu0 0.0
    %1365 = vmatpush1.msra.mxu0 %v1294
    %1366 = vmatprep.subr.mxu0 0.0
    %1367 = vmatpush1.msra.mxu0 %v1295
    %1368 = vmatprep.subr.mxu0 0.0
    %1369 = vmatpush1.msra.mxu0 %v1296
    %1370 = vmatprep.subr.mxu0 0.0
    %1371 = vmatpush1.msra.mxu0 %v1297
    %1372 = vmatprep.subr.mxu0 0.0
    %1373 = vmatpush1.msra.mxu0 %v1298
    %1374 = vmatprep.subr.mxu0 0.0
    %1375 = vmatpush1.msra.mxu0 %v1299
    %1376 = vmatprep.subr.mxu0 0.0
    %1377 = vmatpush1.msra.mxu0 %v1300
    %1378 = vmatprep.subr.mxu0 0.0
    %1379 = vmatpush1.msra.mxu0 %v1301
    %1380 = vmatprep.subr.mxu0 0.0
    %1381 = vmatpush1.msra.mxu0 %v1302
    %1382 = vmatprep.subr.mxu0 0.0
    %1383 = vmatpush1.msra.mxu0 %v1303
    %1384 = vmatprep.subr.mxu0 0.0
    %1385 = vmatpush1.msra.mxu0 0.0
    %1386 = vmatprep.subr.mxu0 0.0
    %1387 = vmatpush1.msra.mxu0 0.0
    %1388 = vmatprep.subr.mxu0 0.0
    %1389 = vmatpush1.msra.mxu0 0.0
    %1390 = vmatprep.subr.mxu0 0.0
    %1391 = vmatpush1.msra.mxu0 0.0
    %1392 = vmatprep.subr.mxu0 0.0
    %1393 = vmatpush1.msra.mxu0 0.0
    %1394 = vmatprep.subr.mxu0 0.0
    %1395 = vmatpush1.msra.mxu0 0.0
    %1396 = vmatprep.subr.mxu0 0.0
    %1397 = vmatpush1.msra.mxu0 0.0
    %1398 = vmatprep.subr.mxu0 0.0
    %1399 = vmatpush1.msra.mxu0 0.0
    %1400 = vmatprep.subr.mxu0 0.0
    %1401 = vmatpush1.msra.mxu0 0.0
    %1402 = vmatprep.subr.mxu0 0.0
    %1403 = vmatpush1.msra.mxu0 0.0
    %1404 = vmatprep.subr.mxu0 0.0
    %1405 = vmatpush1.msra.mxu0 0.0
    %1406 = vmatprep.subr.mxu0 0.0
    %1407 = vmatpush1.msra.mxu0 0.0
    %1408 = vmatprep.subr.mxu0 0.0
    %1409 = vmatpush1.msra.mxu0 0.0
    %1410 = vmatprep.subr.mxu0 0.0
    %1411 = vmatpush1.msra.mxu0 0.0
    %1412 = vmatprep.subr.mxu0 0.0
    %1413 = vmatpush1.msra.mxu0 0.0
    %1414 = vmatprep.subr.mxu0 0.0
    %1415 = vmatpush1.msra.mxu0 0.0
    %1416 = vmatprep.mubr.f32.mxu0 0.0
    %1417 = vmatmul.mubr.f32.gmra.mrb[0].mxu0 %v79
    %v1418 = vpop.f32.mrb[0].mxu0
    %v1419 = vadd.f32 0.0, %v1418
    %v1420 = vpop.f32.mrb[0].mxu0
    %1421 = vmatprep.mubr.f32.mxu0 0.0
    %1422 = vmatmul.mubr.f32.gmra.mrb[0].mxu0 %v80
    %v1423 = vpop.f32.mrb[0].mxu0
    %v1424 = vadd.f32 0.0, %v1423
    %v1425 = vpop.f32.mrb[0].mxu0
    %1426 = vmatprep.mubr.f32.mxu0 0.0
    %1427 = vmatmul.mubr.f32.gmra.mrb[0].mxu0 %v81
    %v1428 = vpop.f32.mrb[0].mxu0
    %v1429 = vadd.f32 0.0, %v1428
    %v1430 = vpop.f32.mrb[0].mxu0
    %1431 = vmatprep.mubr.f32.mxu0 0.0
    %1432 = vmatmul.mubr.f32.gmra.mrb[0].mxu0 %v82
    %v1433 = vpop.f32.mrb[0].mxu0
    %v1434 = vadd.f32 0.0, %v1433
    %v1435 = vpop.f32.mrb[0].mxu0
    %1436 = vmatprep.mubr.f32.mxu0 0.0
    %1437 = vmatmul.mubr.f32.gmra.mrb[0].mxu0 %v83
    %v1438 = vpop.f32.mrb[0].mxu0
    %v1439 = vadd.f32 0.0, %v1438
    %v1440 = vpop.f32.mrb[0].mxu0
    %1441 = vmatprep.mubr.f32.mxu0 0.0
    %1442 = vmatmul.mubr.f32.gmra.mrb[0].mxu0 %v84
    %v1443 = vpop.f32.mrb[0].mxu0
    %v1444 = vadd.f32 0.0, %v1443
    %v1445 = vpop.f32.mrb[0].mxu0
    %1446 = vmatprep.mubr.f32.mxu0 0.0
    %1447 = vmatmul.mubr.f32.gmra.mrb[0].mxu0 %v85
    %v1448 = vpop.f32.mrb[0].mxu0
    %v1449 = vadd.f32 0.0, %v1448
    %v1450 = vpop.f32.mrb[0].mxu0
    %1451 = vmatprep.mubr.f32.mxu0 0.0
    %1452 = vmatmul.mubr.f32.gmra.mrb[0].mxu0 %v86
    %v1453 = vpop.f32.mrb[0].mxu0
    %v1454 = vadd.f32 0.0, %v1453
    %v1455 = vpop.f32.mrb[0].mxu0
    %1456 = vmatprep.mubr.f32.mxu0 0.0
    %1457 = vmatmul.mubr.f32.gmra.mrb[0].mxu0 %v87
    %v1458 = vpop.f32.mrb[0].mxu0
    %v1459 = vadd.f32 0.0, %v1458
    %v1460 = vpop.f32.mrb[0].mxu0
    %1461 = vmatprep.mubr.f32.mxu0 0.0
    %1462 = vmatmul.mubr.f32.gmra.mrb[0].mxu0 %v88
    %v1463 = vpop.f32.mrb[0].mxu0
    %v1464 = vadd.f32 0.0, %v1463
    %v1465 = vpop.f32.mrb[0].mxu0
    %1466 = vmatprep.mubr.f32.mxu0 0.0
    %1467 = vmatmul.mubr.f32.gmra.mrb[0].mxu0 %v89
    %v1468 = vpop.f32.mrb[0].mxu0
    %v1469 = vadd.f32 0.0, %v1468
    %v1470 = vpop.f32.mrb[0].mxu0
    %1471 = vmatprep.mubr.f32.mxu0 0.0
    %1472 = vmatmul.mubr.f32.gmra.mrb[0].mxu0 %v90
    %v1473 = vpop.f32.mrb[0].mxu0
    %v1474 = vadd.f32 0.0, %v1473
    %v1475 = vpop.f32.mrb[0].mxu0
    %1476 = vmatprep.mubr.f32.mxu0 0.0
    %1477 = vmatmul.mubr.f32.gmra.mrb[0].mxu0 %v91
    %v1478 = vpop.f32.mrb[0].mxu0
    %v1479 = vadd.f32 0.0, %v1478
    %v1480 = vpop.f32.mrb[0].mxu0
    %1481 = vmatprep.mubr.f32.mxu0 0.0
    %1482 = vmatmul.mubr.f32.gmra.mrb[0].mxu0 %v92
    %v1483 = vpop.f32.mrb[0].mxu0
    %v1484 = vadd.f32 0.0, %v1483
    %v1485 = vpop.f32.mrb[0].mxu0
    %1486 = vmatprep.mubr.f32.mxu0 0.0
    %1487 = vmatmul.mubr.f32.gmra.mrb[0].mxu0 %v93
    %v1488 = vpop.f32.mrb[0].mxu0
    %v1489 = vadd.f32 0.0, %v1488
    %v1490 = vpop.f32.mrb[0].mxu0
    %1491 = vmatprep.mubr.f32.mxu0 0.0
    %1492 = vmatmul.mubr.f32.gmra.mrb[0].mxu0 %v94
    %v1493 = vpop.f32.mrb[0].mxu0
    %v1494 = vadd.f32 0.0, %v1493
    %v1495 = vpop.f32.mrb[0].mxu0
    %1496 = vdwg.mxu0
    %1497 = vmatprep.subr.mxu0 0.0
    %1498 = vmatpush1.msra.mxu0 %v1304
    %1499 = vmatprep.subr.mxu0 0.0
    %1500 = vmatpush1.msra.mxu0 %v1305
    %1501 = vmatprep.subr.mxu0 0.0
    %1502 = vmatpush1.msra.mxu0 %v1306
    %1503 = vmatprep.subr.mxu0 0.0
    %1504 = vmatpush1.msra.mxu0 %v1307
    %1505 = vmatprep.subr.mxu0 0.0
    %1506 = vmatpush1.msra.mxu0 %v1308
    %1507 = vmatprep.subr.mxu0 0.0
    %1508 = vmatpush1.msra.mxu0 %v1309
    %1509 = vmatprep.subr.mxu0 0.0
    %1510 = vmatpush1.msra.mxu0 %v1310
    %1511 = vmatprep.subr.mxu0 0.0
    %1512 = vmatpush1.msra.mxu0 %v1311
    %1513 = vmatprep.subr.mxu0 0.0
    %1514 = vmatpush1.msra.mxu0 %v1312
    %1515 = vmatprep.subr.mxu0 0.0
    %1516 = vmatpush1.msra.mxu0 %v1313
    %1517 = vmatprep.subr.mxu0 0.0
    %1518 = vmatpush1.msra.mxu0 %v1314
    %1519 = vmatprep.subr.mxu0 0.0
    %1520 = vmatpush1.msra.mxu0 %v1315
    %1521 = vmatprep.subr.mxu0 0.0
    %1522 = vmatpush1.msra.mxu0 %v1316
    %1523 = vmatprep.subr.mxu0 0.0
    %1524 = vmatpush1.msra.mxu0 %v1317
    %1525 = vmatprep.subr.mxu0 0.0
    %1526 = vmatpush1.msra.mxu0 %v1318
    %1527 = vmatprep.subr.mxu0 0.0
    %1528 = vmatpush1.msra.mxu0 %v1319
    %1529 = vmatprep.subr.mxu0 0.0
    %1530 = vmatpush1.msra.mxu0 0.0
    %1531 = vmatprep.subr.mxu0 0.0
    %1532 = vmatpush1.msra.mxu0 0.0
    %1533 = vmatprep.subr.mxu0 0.0
    %1534 = vmatpush1.msra.mxu0 0.0
    %1535 = vmatprep.subr.mxu0 0.0
    %1536 = vmatpush1.msra.mxu0 0.0
    %1537 = vmatprep.subr.mxu0 0.0
    %1538 = vmatpush1.msra.mxu0 0.0
    %1539 = vmatprep.subr.mxu0 0.0
    %1540 = vmatpush1.msra.mxu0 0.0
    %1541 = vmatprep.subr.mxu0 0.0
    %1542 = vmatpush1.msra.mxu0 0.0
    %1543 = vmatprep.subr.mxu0 0.0
    %1544 = vmatpush1.msra.mxu0 0.0
    %1545 = vmatprep.subr.mxu0 0.0
    %1546 = vmatpush1.msra.mxu0 0.0
    %1547 = vmatprep.subr.mxu0 0.0
    %1548 = vmatpush1.msra.mxu0 0.0
    %1549 = vmatprep.subr.mxu0 0.0
    %1550 = vmatpush1.msra.mxu0 0.0
    %1551 = vmatprep.subr.mxu0 0.0
    %1552 = vmatpush1.msra.mxu0 0.0
    %1553 = vmatprep.subr.mxu0 0.0
    %1554 = vmatpush1.msra.mxu0 0.0
    %1555 = vmatprep.subr.mxu0 0.0
    %1556 = vmatpush1.msra.mxu0 0.0
    %1557 = vmatprep.subr.mxu0 0.0
    %1558 = vmatpush1.msra.mxu0 0.0
    %1559 = vmatprep.subr.mxu0 0.0
    %1560 = vmatpush1.msra.mxu0 0.0
    %1561 = vmatprep.mubr.f32.mxu0 0.0
    %1562 = vmatmul.mubr.f32.gmra.mrb[0].mxu0 %v95
    %v1563 = vpop.f32.mrb[0].mxu0
    %v1564 = vadd.f32 0.0, %v1563
    %v1565 = vpop.f32.mrb[0].mxu0
    %1566 = vmatprep.mubr.f32.mxu0 0.0
    %1567 = vmatmul.mubr.f32.gmra.mrb[0].mxu0 %v96
    %v1568 = vpop.f32.mrb[0].mxu0
    %v1569 = vadd.f32 0.0, %v1568
    %v1570 = vpop.f32.mrb[0].mxu0
    %1571 = vmatprep.mubr.f32.mxu0 0.0
    %1572 = vmatmul.mubr.f32.gmra.mrb[0].mxu0 %v97
    %v1573 = vpop.f32.mrb[0].mxu0
    %v1574 = vadd.f32 0.0, %v1573
    %v1575 = vpop.f32.mrb[0].mxu0
    %1576 = vmatprep.mubr.f32.mxu0 0.0
    %1577 = vmatmul.mubr.f32.gmra.mrb[0].mxu0 %v98
    %v1578 = vpop.f32.mrb[0].mxu0
    %v1579 = vadd.f32 0.0, %v1578
    %v1580 = vpop.f32.mrb[0].mxu0
    %1581 = vmatprep.mubr.f32.mxu0 0.0
    %1582 = vmatmul.mubr.f32.gmra.mrb[0].mxu0 %v99
    %v1583 = vpop.f32.mrb[0].mxu0
    %v1584 = vadd.f32 0.0, %v1583
    %v1585 = vpop.f32.mrb[0].mxu0
    %1586 = vmatprep.mubr.f32.mxu0 0.0
    %1587 = vmatmul.mubr.f32.gmra.mrb[0].mxu0 %v100
    %v1588 = vpop.f32.mrb[0].mxu0
    %v1589 = vadd.f32 0.0, %v1588
    %v1590 = vpop.f32.mrb[0].mxu0
    %1591 = vmatprep.mubr.f32.mxu0 0.0
    %1592 = vmatmul.mubr.f32.gmra.mrb[0].mxu0 %v101
    %v1593 = vpop.f32.mrb[0].mxu0
    %v1594 = vadd.f32 0.0, %v1593
    %v1595 = vpop.f32.mrb[0].mxu0
    %1596 = vmatprep.mubr.f32.mxu0 0.0
    %1597 = vmatmul.mubr.f32.gmra.mrb[0].mxu0 %v102
    %v1598 = vpop.f32.mrb[0].mxu0
    %v1599 = vadd.f32 0.0, %v1598
    %v1600 = vpop.f32.mrb[0].mxu0
    %1601 = vmatprep.mubr.f32.mxu0 0.0
    %1602 = vmatmul.mubr.f32.gmra.mrb[0].mxu0 %v103
    %v1603 = vpop.f32.mrb[0].mxu0
    %v1604 = vadd.f32 0.0, %v1603
    %v1605 = vpop.f32.mrb[0].mxu0
    %1606 = vmatprep.mubr.f32.mxu0 0.0
    %1607 = vmatmul.mubr.f32.gmra.mrb[0].mxu0 %v104
    %v1608 = vpop.f32.mrb[0].mxu0
    %v1609 = vadd.f32 0.0, %v1608
    %v1610 = vpop.f32.mrb[0].mxu0
    %1611 = vmatprep.mubr.f32.mxu0 0.0
    %1612 = vmatmul.mubr.f32.gmra.mrb[0].mxu0 %v105
    %v1613 = vpop.f32.mrb[0].mxu0
    %v1614 = vadd.f32 0.0, %v1613
    %v1615 = vpop.f32.mrb[0].mxu0
    %1616 = vmatprep.mubr.f32.mxu0 0.0
    %1617 = vmatmul.mubr.f32.gmra.mrb[0].mxu0 %v106
    %v1618 = vpop.f32.mrb[0].mxu0
    %v1619 = vadd.f32 0.0, %v1618
    %v1620 = vpop.f32.mrb[0].mxu0
    %1621 = vmatprep.mubr.f32.mxu0 0.0
    %1622 = vmatmul.mubr.f32.gmra.mrb[0].mxu0 %v107
    %v1623 = vpop.f32.mrb[0].mxu0
    %v1624 = vadd.f32 0.0, %v1623
    %v1625 = vpop.f32.mrb[0].mxu0
    %1626 = vmatprep.mubr.f32.mxu0 0.0
    %1627 = vmatmul.mubr.f32.gmra.mrb[0].mxu0 %v108
    %v1628 = vpop.f32.mrb[0].mxu0
    %v1629 = vadd.f32 0.0, %v1628
    %v1630 = vpop.f32.mrb[0].mxu0
    %1631 = vmatprep.mubr.f32.mxu0 0.0
    %1632 = vmatmul.mubr.f32.gmra.mrb[0].mxu0 %v109
    %v1633 = vpop.f32.mrb[0].mxu0
    %v1634 = vadd.f32 0.0, %v1633
    %v1635 = vpop.f32.mrb[0].mxu0
    %1636 = vmatprep.mubr.f32.mxu0 0.0
    %1637 = vmatmul.mubr.f32.gmra.mrb[0].mxu0 %v110
    %v1638 = vpop.f32.mrb[0].mxu0
    %v1639 = vadd.f32 0.0, %v1638
    %v1640 = vpop.f32.mrb[0].mxu0
    %1641 = vdwg.mxu0
    %1642 = vmatprep.subr.mxu0 0.0
    %1643 = vmatpush1.msra.mxu0 %v1320
    %1644 = vmatprep.subr.mxu0 0.0
    %1645 = vmatpush1.msra.mxu0 %v1321
    %1646 = vmatprep.subr.mxu0 0.0
    %1647 = vmatpush1.msra.mxu0 %v1322
    %1648 = vmatprep.subr.mxu0 0.0
    %1649 = vmatpush1.msra.mxu0 %v1323
    %1650 = vmatprep.subr.mxu0 0.0
    %1651 = vmatpush1.msra.mxu0 %v1324
    %1652 = vmatprep.subr.mxu0 0.0
    %1653 = vmatpush1.msra.mxu0 %v1325
    %1654 = vmatprep.subr.mxu0 0.0
    %1655 = vmatpush1.msra.mxu0 %v1326
    %1656 = vmatprep.subr.mxu0 0.0
    %1657 = vmatpush1.msra.mxu0 %v1327
    %1658 = vmatprep.subr.mxu0 0.0
    %1659 = vmatpush1.msra.mxu0 %v1328
    %1660 = vmatprep.subr.mxu0 0.0
    %1661 = vmatpush1.msra.mxu0 %v1329
    %1662 = vmatprep.subr.mxu0 0.0
    %1663 = vmatpush1.msra.mxu0 %v1330
    %1664 = vmatprep.subr.mxu0 0.0
    %1665 = vmatpush1.msra.mxu0 %v1331
    %1666 = vmatprep.subr.mxu0 0.0
    %1667 = vmatpush1.msra.mxu0 %v1332
    %1668 = vmatprep.subr.mxu0 0.0
    %1669 = vmatpush1.msra.mxu0 %v1333
    %1670 = vmatprep.subr.mxu0 0.0
    %1671 = vmatpush1.msra.mxu0 %v1334
    %1672 = vmatprep.subr.mxu0 0.0
    %1673 = vmatpush1.msra.mxu0 %v1335
    %1674 = vmatprep.subr.mxu0 0.0
    %1675 = vmatpush1.msra.mxu0 0.0
    %1676 = vmatprep.subr.mxu0 0.0
    %1677 = vmatpush1.msra.mxu0 0.0
    %1678 = vmatprep.subr.mxu0 0.0
    %1679 = vmatpush1.msra.mxu0 0.0
    %1680 = vmatprep.subr.mxu0 0.0
    %1681 = vmatpush1.msra.mxu0 0.0
    %1682 = vmatprep.subr.mxu0 0.0
    %1683 = vmatpush1.msra.mxu0 0.0
    %1684 = vmatprep.subr.mxu0 0.0
    %1685 = vmatpush1.msra.mxu0 0.0
    %1686 = vmatprep.subr.mxu0 0.0
    %1687 = vmatpush1.msra.mxu0 0.0
    %1688 = vmatprep.subr.mxu0 0.0
    %1689 = vmatpush1.msra.mxu0 0.0
    %1690 = vmatprep.subr.mxu0 0.0
    %1691 = vmatpush1.msra.mxu0 0.0
    %1692 = vmatprep.subr.mxu0 0.0
    %1693 = vmatpush1.msra.mxu0 0.0
    %1694 = vmatprep.subr.mxu0 0.0
    %1695 = vmatpush1.msra.mxu0 0.0
    %1696 = vmatprep.subr.mxu0 0.0
    %1697 = vmatpush1.msra.mxu0 0.0
    %1698 = vmatprep.subr.mxu0 0.0
    %1699 = vmatpush1.msra.mxu0 0.0
    %1700 = vmatprep.subr.mxu0 0.0
    %1701 = vmatpush1.msra.mxu0 0.0
    %1702 = vmatprep.subr.mxu0 0.0
    %1703 = vmatpush1.msra.mxu0 0.0
    %1704 = vmatprep.subr.mxu0 0.0
    %1705 = vmatpush1.msra.mxu0 0.0
    %1706 = vmatprep.mubr.f32.mxu0 0.0
    %1707 = vmatmul.mubr.f32.gmra.mrb[0].mxu0 %v111
    %v1708 = vpop.f32.mrb[0].mxu0
    %v1709 = vadd.f32 0.0, %v1708
    %v1710 = vpop.f32.mrb[0].mxu0
    %1711 = vmatprep.mubr.f32.mxu0 0.0
    %1712 = vmatmul.mubr.f32.gmra.mrb[0].mxu0 %v112
    %v1713 = vpop.f32.mrb[0].mxu0
    %v1714 = vadd.f32 0.0, %v1713
    %v1715 = vpop.f32.mrb[0].mxu0
    %1716 = vmatprep.mubr.f32.mxu0 0.0
    %1717 = vmatmul.mubr.f32.gmra.mrb[0].mxu0 %v113
    %v1718 = vpop.f32.mrb[0].mxu0
    %v1719 = vadd.f32 0.0, %v1718
    %v1720 = vpop.f32.mrb[0].mxu0
    %1721 = vmatprep.mubr.f32.mxu0 0.0
    %1722 = vmatmul.mubr.f32.gmra.mrb[0].mxu0 %v114
    %v1723 = vpop.f32.mrb[0].mxu0
    %v1724 = vadd.f32 0.0, %v1723
    %v1725 = vpop.f32.mrb[0].mxu0
    %1726 = vmatprep.mubr.f32.mxu0 0.0
    %1727 = vmatmul.mubr.f32.gmra.mrb[0].mxu0 %v115
    %v1728 = vpop.f32.mrb[0].mxu0
    %v1729 = vadd.f32 0.0, %v1728
    %v1730 = vpop.f32.mrb[0].mxu0
    %1731 = vmatprep.mubr.f32.mxu0 0.0
    %1732 = vmatmul.mubr.f32.gmra.mrb[0].mxu0 %v116
    %v1733 = vpop.f32.mrb[0].mxu0
    %v1734 = vadd.f32 0.0, %v1733
    %v1735 = vpop.f32.mrb[0].mxu0
    %1736 = vmatprep.mubr.f32.mxu0 0.0
    %1737 = vmatmul.mubr.f32.gmra.mrb[0].mxu0 %v117
    %v1738 = vpop.f32.mrb[0].mxu0
    %v1739 = vadd.f32 0.0, %v1738
    %v1740 = vpop.f32.mrb[0].mxu0
    %1741 = vmatprep.mubr.f32.mxu0 0.0
    %1742 = vmatmul.mubr.f32.gmra.mrb[0].mxu0 %v118
    %v1743 = vpop.f32.mrb[0].mxu0
    %v1744 = vadd.f32 0.0, %v1743
    %v1745 = vpop.f32.mrb[0].mxu0
    %1746 = vmatprep.mubr.f32.mxu0 0.0
    %1747 = vmatmul.mubr.f32.gmra.mrb[0].mxu0 %v119
    %v1748 = vpop.f32.mrb[0].mxu0
    %v1749 = vadd.f32 0.0, %v1748
    %v1750 = vpop.f32.mrb[0].mxu0
    %1751 = vmatprep.mubr.f32.mxu0 0.0
    %1752 = vmatmul.mubr.f32.gmra.mrb[0].mxu0 %v120
    %v1753 = vpop.f32.mrb[0].mxu0
    %v1754 = vadd.f32 0.0, %v1753
    %v1755 = vpop.f32.mrb[0].mxu0
    %1756 = vmatprep.mubr.f32.mxu0 0.0
    %1757 = vmatmul.mubr.f32.gmra.mrb[0].mxu0 %v121
    %v1758 = vpop.f32.mrb[0].mxu0
    %v1759 = vadd.f32 0.0, %v1758
    %v1760 = vpop.f32.mrb[0].mxu0
    %1761 = vmatprep.mubr.f32.mxu0 0.0
    %1762 = vmatmul.mubr.f32.gmra.mrb[0].mxu0 %v122
    %v1763 = vpop.f32.mrb[0].mxu0
    %v1764 = vadd.f32 0.0, %v1763
    %v1765 = vpop.f32.mrb[0].mxu0
    %1766 = vmatprep.mubr.f32.mxu0 0.0
    %1767 = vmatmul.mubr.f32.gmra.mrb[0].mxu0 %v123
    %v1768 = vpop.f32.mrb[0].mxu0
    %v1769 = vadd.f32 0.0, %v1768
    %v1770 = vpop.f32.mrb[0].mxu0
    %1771 = vmatprep.mubr.f32.mxu0 0.0
    %1772 = vmatmul.mubr.f32.gmra.mrb[0].mxu0 %v124
    %v1773 = vpop.f32.mrb[0].mxu0
    %v1774 = vadd.f32 0.0, %v1773
    %v1775 = vpop.f32.mrb[0].mxu0
    %1776 = vmatprep.mubr.f32.mxu0 0.0
    %1777 = vmatmul.mubr.f32.gmra.mrb[0].mxu0 %v125
    %v1778 = vpop.f32.mrb[0].mxu0
    %v1779 = vadd.f32 0.0, %v1778
    %v1780 = vpop.f32.mrb[0].mxu0
    %1781 = vmatprep.mubr.f32.mxu0 0.0
    %1782 = vmatmul.mubr.f32.gmra.mrb[0].mxu0 %v126
    %v1783 = vpop.f32.mrb[0].mxu0
    %v1784 = vadd.f32 0.0, %v1783
    %v1785 = vpop.f32.mrb[0].mxu0
    %1786 = vdwg.mxu0
    %1787 = vmatprep.subr.mxu0 0.0
    %1788 = vmatpush1.msra.mxu0 %v1336
    %1789 = vmatprep.subr.mxu0 0.0
    %1790 = vmatpush1.msra.mxu0 %v1337
    %1791 = vmatprep.subr.mxu0 0.0
    %1792 = vmatpush1.msra.mxu0 %v1338
    %1793 = vmatprep.subr.mxu0 0.0
    %1794 = vmatpush1.msra.mxu0 %v1339
    %1795 = vmatprep.subr.mxu0 0.0
    %1796 = vmatpush1.msra.mxu0 %v1340
    %1797 = vmatprep.subr.mxu0 0.0
    %1798 = vmatpush1.msra.mxu0 %v1341
    %1799 = vmatprep.subr.mxu0 0.0
    %1800 = vmatpush1.msra.mxu0 %v1342
    %1801 = vmatprep.subr.mxu0 0.0
    %1802 = vmatpush1.msra.mxu0 %v1343
    %1803 = vmatprep.subr.mxu0 0.0
    %1804 = vmatpush1.msra.mxu0 %v1344
    %1805 = vmatprep.subr.mxu0 0.0
    %1806 = vmatpush1.msra.mxu0 %v1345
    %1807 = vmatprep.subr.mxu0 0.0
    %1808 = vmatpush1.msra.mxu0 %v1346
    %1809 = vmatprep.subr.mxu0 0.0
    %1810 = vmatpush1.msra.mxu0 %v1347
    %1811 = vmatprep.subr.mxu0 0.0
    %1812 = vmatpush1.msra.mxu0 %v1348
    %1813 = vmatprep.subr.mxu0 0.0
    %1814 = vmatpush1.msra.mxu0 %v1349
    %1815 = vmatprep.subr.mxu0 0.0
    %1816 = vmatpush1.msra.mxu0 %v1350
    %1817 = vmatprep.subr.mxu0 0.0
    %1818 = vmatpush1.msra.mxu0 %v1351
    %1819 = vmatprep.subr.mxu0 0.0
    %1820 = vmatpush1.msra.mxu0 0.0
    %1821 = vmatprep.subr.mxu0 0.0
    %1822 = vmatpush1.msra.mxu0 0.0
    %1823 = vmatprep.subr.mxu0 0.0
    %1824 = vmatpush1.msra.mxu0 0.0
    %1825 = vmatprep.subr.mxu0 0.0
    %1826 = vmatpush1.msra.mxu0 0.0
    %1827 = vmatprep.subr.mxu0 0.0
    %1828 = vmatpush1.msra.mxu0 0.0
    %1829 = vmatprep.subr.mxu0 0.0
    %1830 = vmatpush1.msra.mxu0 0.0
    %1831 = vmatprep.subr.mxu0 0.0
    %1832 = vmatpush1.msra.mxu0 0.0
    %1833 = vmatprep.subr.mxu0 0.0
    %1834 = vmatpush1.msra.mxu0 0.0
    %1835 = vmatprep.subr.mxu0 0.0
    %1836 = vmatpush1.msra.mxu0 0.0
    %1837 = vmatprep.subr.mxu0 0.0
    %1838 = vmatpush1.msra.mxu0 0.0
    %1839 = vmatprep.subr.mxu0 0.0
    %1840 = vmatpush1.msra.mxu0 0.0
    %1841 = vmatprep.subr.mxu0 0.0
    %1842 = vmatpush1.msra.mxu0 0.0
    %1843 = vmatprep.subr.mxu0 0.0
    %1844 = vmatpush1.msra.mxu0 0.0
    %1845 = vmatprep.subr.mxu0 0.0
    %1846 = vmatpush1.msra.mxu0 0.0
    %1847 = vmatprep.subr.mxu0 0.0
    %1848 = vmatpush1.msra.mxu0 0.0
    %1849 = vmatprep.subr.mxu0 0.0
    %1850 = vmatpush1.msra.mxu0 0.0
    %1851 = vmatprep.mubr.f32.mxu0 0.0
    %1852 = vmatmul.mubr.f32.gmra.mrb[0].mxu0 %v127
    %v1853 = vpop.f32.mrb[0].mxu0
    %v1854 = vadd.f32 0.0, %v1853
    %v1855 = vpop.f32.mrb[0].mxu0
    %1856 = vmatprep.mubr.f32.mxu0 0.0
    %1857 = vmatmul.mubr.f32.gmra.mrb[0].mxu0 %v128
    %v1858 = vpop.f32.mrb[0].mxu0
    %v1859 = vadd.f32 0.0, %v1858
    %v1860 = vpop.f32.mrb[0].mxu0
    %1861 = vmatprep.mubr.f32.mxu0 0.0
    %1862 = vmatmul.mubr.f32.gmra.mrb[0].mxu0 %v129
    %v1863 = vpop.f32.mrb[0].mxu0
    %v1864 = vadd.f32 0.0, %v1863
    %v1865 = vpop.f32.mrb[0].mxu0
    %1866 = vmatprep.mubr.f32.mxu0 0.0
    %1867 = vmatmul.mubr.f32.gmra.mrb[0].mxu0 %v130
    %v1868 = vpop.f32.mrb[0].mxu0
    %v1869 = vadd.f32 0.0, %v1868
    %v1870 = vpop.f32.mrb[0].mxu0
    %1871 = vmatprep.mubr.f32.mxu0 0.0
    %1872 = vmatmul.mubr.f32.gmra.mrb[0].mxu0 %v131
    %v1873 = vpop.f32.mrb[0].mxu0
    %v1874 = vadd.f32 0.0, %v1873
    %v1875 = vpop.f32.mrb[0].mxu0
    %1876 = vmatprep.mubr.f32.mxu0 0.0
    %1877 = vmatmul.mubr.f32.gmra.mrb[0].mxu0 %v132
    %v1878 = vpop.f32.mrb[0].mxu0
    %v1879 = vadd.f32 0.0, %v1878
    %v1880 = vpop.f32.mrb[0].mxu0
    %1881 = vmatprep.mubr.f32.mxu0 0.0
    %1882 = vmatmul.mubr.f32.gmra.mrb[0].mxu0 %v133
    %v1883 = vpop.f32.mrb[0].mxu0
    %v1884 = vadd.f32 0.0, %v1883
    %v1885 = vpop.f32.mrb[0].mxu0
    %1886 = vmatprep.mubr.f32.mxu0 0.0
    %1887 = vmatmul.mubr.f32.gmra.mrb[0].mxu0 %v134
    %v1888 = vpop.f32.mrb[0].mxu0
    %v1889 = vadd.f32 0.0, %v1888
    %v1890 = vpop.f32.mrb[0].mxu0
    %1891 = vmatprep.mubr.f32.mxu0 0.0
    %1892 = vmatmul.mubr.f32.gmra.mrb[0].mxu0 %v135
    %v1893 = vpop.f32.mrb[0].mxu0
    %v1894 = vadd.f32 0.0, %v1893
    %v1895 = vpop.f32.mrb[0].mxu0
    %1896 = vmatprep.mubr.f32.mxu0 0.0
    %1897 = vmatmul.mubr.f32.gmra.mrb[0].mxu0 %v136
    %v1898 = vpop.f32.mrb[0].mxu0
    %v1899 = vadd.f32 0.0, %v1898
    %v1900 = vpop.f32.mrb[0].mxu0
    %1901 = vmatprep.mubr.f32.mxu0 0.0
    %1902 = vmatmul.mubr.f32.gmra.mrb[0].mxu0 %v137
    %v1903 = vpop.f32.mrb[0].mxu0
    %v1904 = vadd.f32 0.0, %v1903
    %v1905 = vpop.f32.mrb[0].mxu0
    %1906 = vmatprep.mubr.f32.mxu0 0.0
    %1907 = vmatmul.mubr.f32.gmra.mrb[0].mxu0 %v138
    %v1908 = vpop.f32.mrb[0].mxu0
    %v1909 = vadd.f32 0.0, %v1908
    %v1910 = vpop.f32.mrb[0].mxu0
    %1911 = vmatprep.mubr.f32.mxu0 0.0
    %1912 = vmatmul.mubr.f32.gmra.mrb[0].mxu0 %v139
    %v1913 = vpop.f32.mrb[0].mxu0
    %v1914 = vadd.f32 0.0, %v1913
    %v1915 = vpop.f32.mrb[0].mxu0
    %1916 = vmatprep.mubr.f32.mxu0 0.0
    %1917 = vmatmul.mubr.f32.gmra.mrb[0].mxu0 %v140
    %v1918 = vpop.f32.mrb[0].mxu0
    %v1919 = vadd.f32 0.0, %v1918
    %v1920 = vpop.f32.mrb[0].mxu0
    %1921 = vmatprep.mubr.f32.mxu0 0.0
    %1922 = vmatmul.mubr.f32.gmra.mrb[0].mxu0 %v141
    %v1923 = vpop.f32.mrb[0].mxu0
    %v1924 = vadd.f32 0.0, %v1923
    %v1925 = vpop.f32.mrb[0].mxu0
    %1926 = vmatprep.mubr.f32.mxu0 0.0
    %1927 = vmatmul.mubr.f32.gmra.mrb[0].mxu0 %v142
    %v1928 = vpop.f32.mrb[0].mxu0
    %v1929 = vadd.f32 0.0, %v1928
    %v1930 = vpop.f32.mrb[0].mxu0
    %1931 = vdwg.mxu0
    %v1932 = vmul.f32 %v626, %v1419
    %v1933 = vmul.f32 %v627, %v1424
    %v1934 = vmul.f32 %v628, %v1429
    %v1935 = vmul.f32 %v629, %v1434
    %v1936 = vmul.f32 %v630, %v1439
    %v1937 = vmul.f32 %v631, %v1444
    %v1938 = vmul.f32 %v632, %v1449
    %v1939 = vmul.f32 %v633, %v1454
    %v1940 = vmul.f32 %v634, %v1459
    %v1941 = vmul.f32 %v635, %v1464
    %v1942 = vmul.f32 %v636, %v1469
    %v1943 = vmul.f32 %v637, %v1474
    %v1944 = vmul.f32 %v638, %v1479
    %v1945 = vmul.f32 %v639, %v1484
    %v1946 = vmul.f32 %v640, %v1489
    %v1947 = vmul.f32 %v641, %v1494
    %v1948 = vmul.f32 %v642, %v1564
    %v1949 = vmul.f32 %v643, %v1569
    %v1950 = vmul.f32 %v644, %v1574
    %v1951 = vmul.f32 %v645, %v1579
    %v1952 = vmul.f32 %v646, %v1584
    %v1953 = vmul.f32 %v647, %v1589
    %v1954 = vmul.f32 %v648, %v1594
    %v1955 = vmul.f32 %v649, %v1599
    %v1956 = vmul.f32 %v650, %v1604
    %v1957 = vmul.f32 %v651, %v1609
    %v1958 = vmul.f32 %v652, %v1614
    %v1959 = vmul.f32 %v653, %v1619
    %v1960 = vmul.f32 %v654, %v1624
    %v1961 = vmul.f32 %v655, %v1629
    %v1962 = vmul.f32 %v656, %v1634
    %v1963 = vmul.f32 %v657, %v1639
    %v1964 = vmul.f32 %v658, %v1709
    %v1965 = vmul.f32 %v659, %v1714
    %v1966 = vmul.f32 %v660, %v1719
    %v1967 = vmul.f32 %v661, %v1724
    %v1968 = vmul.f32 %v662, %v1729
    %v1969 = vmul.f32 %v663, %v1734
    %v1970 = vmul.f32 %v664, %v1739
    %v1971 = vmul.f32 %v665, %v1744
    %v1972 = vmul.f32 %v666, %v1749
    %v1973 = vmul.f32 %v667, %v1754
    %v1974 = vmul.f32 %v668, %v1759
    %v1975 = vmul.f32 %v669, %v1764
    %v1976 = vmul.f32 %v670, %v1769
    %v1977 = vmul.f32 %v671, %v1774
    %v1978 = vmul.f32 %v672, %v1779
    %v1979 = vmul.f32 %v673, %v1784
    %v1980 = vmul.f32 %v674, %v1854
    %v1981 = vmul.f32 %v675, %v1859
    %v1982 = vmul.f32 %v676, %v1864
    %v1983 = vmul.f32 %v677, %v1869
    %v1984 = vmul.f32 %v678, %v1874
    %v1985 = vmul.f32 %v679, %v1879
    %v1986 = vmul.f32 %v680, %v1884
    %v1987 = vmul.f32 %v681, %v1889
    %v1988 = vmul.f32 %v682, %v1894
    %v1989 = vmul.f32 %v683, %v1899
    %v1990 = vmul.f32 %v684, %v1904
    %v1991 = vmul.f32 %v685, %v1909
    %v1992 = vmul.f32 %v686, %v1914
    %v1993 = vmul.f32 %v687, %v1919
    %v1994 = vmul.f32 %v688, %v1924
    %v1995 = vmul.f32 %v689, %v1929
    %v1996 = vlaneseq
    %v1997 = vshrl.u32 %v1996, 7
    %v1998 = vsub.s32 0, %v1997
    %v1999 = vrot.slane %v220, %v1998
    %v2000 = vadd.f32 %v1932, %v1999
    %v2001 = vadd.f32 %v1933, %v1999
    %v2002 = vadd.f32 %v1934, %v1999
    %v2003 = vadd.f32 %v1935, %v1999
    %v2004 = vadd.f32 %v1936, %v1999
    %v2005 = vadd.f32 %v1937, %v1999
    %v2006 = vadd.f32 %v1938, %v1999
    %v2007 = vadd.f32 %v1939, %v1999
    %v2008 = vadd.f32 %v1940, %v1999
    %v2009 = vadd.f32 %v1941, %v1999
    %v2010 = vadd.f32 %v1942, %v1999
    %v2011 = vadd.f32 %v1943, %v1999
    %v2012 = vadd.f32 %v1944, %v1999
    %v2013 = vadd.f32 %v1945, %v1999
    %v2014 = vadd.f32 %v1946, %v1999
    %v2015 = vadd.f32 %v1947, %v1999
    %v2016 = vadd.f32 %v1948, %v1999
    %v2017 = vadd.f32 %v1949, %v1999
    %v2018 = vadd.f32 %v1950, %v1999
    %v2019 = vadd.f32 %v1951, %v1999
    %v2020 = vadd.f32 %v1952, %v1999
    %v2021 = vadd.f32 %v1953, %v1999
    %v2022 = vadd.f32 %v1954, %v1999
    %v2023 = vadd.f32 %v1955, %v1999
    %v2024 = vadd.f32 %v1956, %v1999
    %v2025 = vadd.f32 %v1957, %v1999
    %v2026 = vadd.f32 %v1958, %v1999
    %v2027 = vadd.f32 %v1959, %v1999
    %v2028 = vadd.f32 %v1960, %v1999
    %v2029 = vadd.f32 %v1961, %v1999
    %v2030 = vadd.f32 %v1962, %v1999
    %v2031 = vadd.f32 %v1963, %v1999
    %v2032 = vadd.f32 %v1964, %v1999
    %v2033 = vadd.f32 %v1965, %v1999
    %v2034 = vadd.f32 %v1966, %v1999
    %v2035 = vadd.f32 %v1967, %v1999
    %v2036 = vadd.f32 %v1968, %v1999
    %v2037 = vadd.f32 %v1969, %v1999
    %v2038 = vadd.f32 %v1970, %v1999
    %v2039 = vadd.f32 %v1971, %v1999
    %v2040 = vadd.f32 %v1972, %v1999
    %v2041 = vadd.f32 %v1973, %v1999
    %v2042 = vadd.f32 %v1974, %v1999
    %v2043 = vadd.f32 %v1975, %v1999
    %v2044 = vadd.f32 %v1976, %v1999
    %v2045 = vadd.f32 %v1977, %v1999
    %v2046 = vadd.f32 %v1978, %v1999
    %v2047 = vadd.f32 %v1979, %v1999
    %v2048 = vadd.f32 %v1980, %v1999
    %v2049 = vadd.f32 %v1981, %v1999
    %v2050 = vadd.f32 %v1982, %v1999
    %v2051 = vadd.f32 %v1983, %v1999
    %v2052 = vadd.f32 %v1984, %v1999
    %v2053 = vadd.f32 %v1985, %v1999
    %v2054 = vadd.f32 %v1986, %v1999
    %v2055 = vadd.f32 %v1987, %v1999
    %v2056 = vadd.f32 %v1988, %v1999
    %v2057 = vadd.f32 %v1989, %v1999
    %v2058 = vadd.f32 %v1990, %v1999
    %v2059 = vadd.f32 %v1991, %v1999
    %v2060 = vadd.f32 %v1992, %v1999
    %v2061 = vadd.f32 %v1993, %v1999
    %v2062 = vadd.f32 %v1994, %v1999
    %v2063 = vadd.f32 %v1995, %v1999
    %v2064 = vmax.f32 %v2000, 0.0
    %v2065 = vmax.f32 %v2001, 0.0
    %v2066 = vmax.f32 %v2002, 0.0
    %v2067 = vmax.f32 %v2003, 0.0
    %v2068 = vmax.f32 %v2004, 0.0
    %v2069 = vmax.f32 %v2005, 0.0
    %v2070 = vmax.f32 %v2006, 0.0
    %v2071 = vmax.f32 %v2007, 0.0
    %v2072 = vmax.f32 %v2008, 0.0
    %v2073 = vmax.f32 %v2009, 0.0
    %v2074 = vmax.f32 %v2010, 0.0
    %v2075 = vmax.f32 %v2011, 0.0
    %v2076 = vmax.f32 %v2012, 0.0
    %v2077 = vmax.f32 %v2013, 0.0
    %v2078 = vmax.f32 %v2014, 0.0
    %v2079 = vmax.f32 %v2015, 0.0
    %v2080 = vmax.f32 %v2016, 0.0
    %v2081 = vmax.f32 %v2017, 0.0
    %v2082 = vmax.f32 %v2018, 0.0
    %v2083 = vmax.f32 %v2019, 0.0
    %v2084 = vmax.f32 %v2020, 0.0
    %v2085 = vmax.f32 %v2021, 0.0
    %v2086 = vmax.f32 %v2022, 0.0
    %v2087 = vmax.f32 %v2023, 0.0
    %v2088 = vmax.f32 %v2024, 0.0
    %v2089 = vmax.f32 %v2025, 0.0
    %v2090 = vmax.f32 %v2026, 0.0
    %v2091 = vmax.f32 %v2027, 0.0
    %v2092 = vmax.f32 %v2028, 0.0
    %v2093 = vmax.f32 %v2029, 0.0
    %v2094 = vmax.f32 %v2030, 0.0
    %v2095 = vmax.f32 %v2031, 0.0
    %v2096 = vmax.f32 %v2032, 0.0
    %v2097 = vmax.f32 %v2033, 0.0
    %v2098 = vmax.f32 %v2034, 0.0
    %v2099 = vmax.f32 %v2035, 0.0
    %v2100 = vmax.f32 %v2036, 0.0
    %v2101 = vmax.f32 %v2037, 0.0
    %v2102 = vmax.f32 %v2038, 0.0
    %v2103 = vmax.f32 %v2039, 0.0
    %v2104 = vmax.f32 %v2040, 0.0
    %v2105 = vmax.f32 %v2041, 0.0
    %v2106 = vmax.f32 %v2042, 0.0
    %v2107 = vmax.f32 %v2043, 0.0
    %v2108 = vmax.f32 %v2044, 0.0
    %v2109 = vmax.f32 %v2045, 0.0
    %v2110 = vmax.f32 %v2046, 0.0
    %v2111 = vmax.f32 %v2047, 0.0
    %v2112 = vmax.f32 %v2048, 0.0
    %v2113 = vmax.f32 %v2049, 0.0
    %v2114 = vmax.f32 %v2050, 0.0
    %v2115 = vmax.f32 %v2051, 0.0
    %v2116 = vmax.f32 %v2052, 0.0
    %v2117 = vmax.f32 %v2053, 0.0
    %v2118 = vmax.f32 %v2054, 0.0
    %v2119 = vmax.f32 %v2055, 0.0
    %v2120 = vmax.f32 %v2056, 0.0
    %v2121 = vmax.f32 %v2057, 0.0
    %v2122 = vmax.f32 %v2058, 0.0
    %v2123 = vmax.f32 %v2059, 0.0
    %v2124 = vmax.f32 %v2060, 0.0
    %v2125 = vmax.f32 %v2061, 0.0
    %v2126 = vmax.f32 %v2062, 0.0
    %v2127 = vmax.f32 %v2063, 0.0
    %vm2128 = vcmask 523264
    %v2130 = vsel %vm2128, %v2064, 0
    %v2133 = vsel %vm2128, %v2065, 0
    %v2136 = vsel %vm2128, %v2066, 0
    %v2139 = vsel %vm2128, %v2067, 0
    %v2142 = vsel %vm2128, %v2068, 0
    %v2145 = vsel %vm2128, %v2069, 0
    %v2148 = vsel %vm2128, %v2070, 0
    %v2151 = vsel %vm2128, %v2071, 0
    %v2154 = vsel %vm2128, %v2072, 0
    %v2157 = vsel %vm2128, %v2073, 0
    %v2160 = vsel %vm2128, %v2074, 0
    %v2163 = vsel %vm2128, %v2075, 0
    %v2166 = vsel %vm2128, %v2076, 0
    %v2169 = vsel %vm2128, %v2077, 0
    %v2172 = vsel %vm2128, %v2078, 0
    %v2175 = vsel %vm2128, %v2079, 0
    %v2178 = vsel %vm2128, %v2080, 0
    %v2181 = vsel %vm2128, %v2081, 0
    %v2184 = vsel %vm2128, %v2082, 0
    %v2187 = vsel %vm2128, %v2083, 0
    %v2190 = vsel %vm2128, %v2084, 0
    %v2193 = vsel %vm2128, %v2085, 0
    %v2196 = vsel %vm2128, %v2086, 0
    %v2199 = vsel %vm2128, %v2087, 0
    %v2202 = vsel %vm2128, %v2088, 0
    %v2205 = vsel %vm2128, %v2089, 0
    %v2208 = vsel %vm2128, %v2090, 0
    %v2211 = vsel %vm2128, %v2091, 0
    %v2214 = vsel %vm2128, %v2092, 0
    %v2217 = vsel %vm2128, %v2093, 0
    %v2220 = vsel %vm2128, %v2094, 0
    %v2223 = vsel %vm2128, %v2095, 0
    %v2226 = vsel %vm2128, %v2096, 0
    %v2229 = vsel %vm2128, %v2097, 0
    %v2232 = vsel %vm2128, %v2098, 0
    %v2235 = vsel %vm2128, %v2099, 0
    %v2238 = vsel %vm2128, %v2100, 0
    %v2241 = vsel %vm2128, %v2101, 0
    %v2244 = vsel %vm2128, %v2102, 0
    %v2247 = vsel %vm2128, %v2103, 0
    %v2250 = vsel %vm2128, %v2104, 0
    %v2253 = vsel %vm2128, %v2105, 0
    %v2256 = vsel %vm2128, %v2106, 0
    %v2259 = vsel %vm2128, %v2107, 0
    %v2262 = vsel %vm2128, %v2108, 0
    %v2265 = vsel %vm2128, %v2109, 0
    %v2268 = vsel %vm2128, %v2110, 0
    %v2271 = vsel %vm2128, %v2111, 0
    %v2274 = vsel %vm2128, %v2112, 0
    %v2277 = vsel %vm2128, %v2113, 0
    %v2280 = vsel %vm2128, %v2114, 0
    %v2283 = vsel %vm2128, %v2115, 0
    %v2286 = vsel %vm2128, %v2116, 0
    %v2289 = vsel %vm2128, %v2117, 0
    %v2292 = vsel %vm2128, %v2118, 0
    %v2295 = vsel %vm2128, %v2119, 0
    %v2298 = vsel %vm2128, %v2120, 0
    %v2301 = vsel %vm2128, %v2121, 0
    %v2304 = vsel %vm2128, %v2122, 0
    %v2307 = vsel %vm2128, %v2123, 0
    %v2310 = vsel %vm2128, %v2124, 0
    %v2313 = vsel %vm2128, %v2125, 0
    %v2316 = vsel %vm2128, %v2126, 0
    %v2319 = vsel %vm2128, %v2127, 0
    %2321 = vmatprep.subr.mxu0 0.0
    %2322 = vmatpush1.msra.mxu0 %v211
    %2323 = vmatprep.subr.mxu0 0.0
    %2324 = vmatpush1.msra.mxu0 %v212
    %2325 = vmatprep.subr.mxu0 0.0
    %2326 = vmatpush1.msra.mxu0 %v213
    %2327 = vmatprep.subr.mxu0 0.0
    %2328 = vmatpush1.msra.mxu0 %v214
    %2329 = vmatprep.subr.mxu0 0.0
    %2330 = vmatpush1.msra.mxu0 %v215
    %2331 = vmatprep.subr.mxu0 0.0
    %2332 = vmatpush1.msra.mxu0 %v216
    %2333 = vmatprep.subr.mxu0 0.0
    %2334 = vmatpush1.msra.mxu0 %v217
    %2335 = vmatprep.subr.mxu0 0.0
    %2336 = vmatpush1.msra.mxu0 %v218
    %2337 = vmatprep.subr.mxu0 0.0
    %2338 = vmatpush1.msra.mxu0 0.0
    %2339 = vmatprep.subr.mxu0 0.0
    %2340 = vmatpush1.msra.mxu0 0.0
    %2341 = vmatprep.subr.mxu0 0.0
    %2342 = vmatpush1.msra.mxu0 0.0
    %2343 = vmatprep.subr.mxu0 0.0
    %2344 = vmatpush1.msra.mxu0 0.0
    %2345 = vmatprep.subr.mxu0 0.0
    %2346 = vmatpush1.msra.mxu0 0.0
    %2347 = vmatprep.subr.mxu0 0.0
    %2348 = vmatpush1.msra.mxu0 0.0
    %2349 = vmatprep.subr.mxu0 0.0
    %2350 = vmatpush1.msra.mxu0 0.0
    %2351 = vmatprep.subr.mxu0 0.0
    %2352 = vmatpush1.msra.mxu0 0.0
    %2353 = vmatprep.subr.mxu0 0.0
    %2354 = vmatpush1.msra.mxu0 0.0
    %2355 = vmatprep.subr.mxu0 0.0
    %2356 = vmatpush1.msra.mxu0 0.0
    %2357 = vmatprep.subr.mxu0 0.0
    %2358 = vmatpush1.msra.mxu0 0.0
    %2359 = vmatprep.subr.mxu0 0.0
    %2360 = vmatpush1.msra.mxu0 0.0
    %2361 = vmatprep.subr.mxu0 0.0
    %2362 = vmatpush1.msra.mxu0 0.0
    %2363 = vmatprep.subr.mxu0 0.0
    %2364 = vmatpush1.msra.mxu0 0.0
    %2365 = vmatprep.subr.mxu0 0.0
    %2366 = vmatpush1.msra.mxu0 0.0
    %2367 = vmatprep.subr.mxu0 0.0
    %2368 = vmatpush1.msra.mxu0 0.0
    %2369 = vmatprep.subr.mxu0 0.0
    %2370 = vmatpush1.msra.mxu0 0.0
    %2371 = vmatprep.subr.mxu0 0.0
    %2372 = vmatpush1.msra.mxu0 0.0
    %2373 = vmatprep.subr.mxu0 0.0
    %2374 = vmatpush1.msra.mxu0 0.0
    %2375 = vmatprep.subr.mxu0 0.0
    %2376 = vmatpush1.msra.mxu0 0.0
    %2377 = vmatprep.subr.mxu0 0.0
    %2378 = vmatpush1.msra.mxu0 0.0
    %2379 = vmatprep.subr.mxu0 0.0
    %2380 = vmatpush1.msra.mxu0 0.0
    %2381 = vmatprep.subr.mxu0 0.0
    %2382 = vmatpush1.msra.mxu0 0.0
    %2383 = vmatprep.subr.mxu0 0.0
    %2384 = vmatpush1.msra.mxu0 0.0
    %2385 = vmatprep.mubr.f32.mxu0 0.0
    %2386 = vmatmul.mubr.f32.gmra.mrb[0].mxu0 %v2130
    %v2387 = vpop.f32.mrb[0].mxu0
    %v2388 = vadd.f32 0.0, %v2387
    %v2389 = vpop.f32.mrb[0].mxu0
    %2390 = vmatprep.mubr.f32.mxu0 0.0
    %2391 = vmatmul.mubr.f32.gmra.mrb[0].mxu0 %v2133
    %v2392 = vpop.f32.mrb[0].mxu0
    %v2393 = vadd.f32 0.0, %v2392
    %v2394 = vpop.f32.mrb[0].mxu0
    %2395 = vmatprep.mubr.f32.mxu0 0.0
    %2396 = vmatmul.mubr.f32.gmra.mrb[0].mxu0 %v2136
    %v2397 = vpop.f32.mrb[0].mxu0
    %v2398 = vadd.f32 0.0, %v2397
    %v2399 = vpop.f32.mrb[0].mxu0
    %2400 = vmatprep.mubr.f32.mxu0 0.0
    %2401 = vmatmul.mubr.f32.gmra.mrb[0].mxu0 %v2139
    %v2402 = vpop.f32.mrb[0].mxu0
    %v2403 = vadd.f32 0.0, %v2402
    %v2404 = vpop.f32.mrb[0].mxu0
    %2405 = vmatprep.mubr.f32.mxu0 0.0
    %2406 = vmatmul.mubr.f32.gmra.mrb[0].mxu0 %v2142
    %v2407 = vpop.f32.mrb[0].mxu0
    %v2408 = vadd.f32 0.0, %v2407
    %v2409 = vpop.f32.mrb[0].mxu0
    %2410 = vmatprep.mubr.f32.mxu0 0.0
    %2411 = vmatmul.mubr.f32.gmra.mrb[0].mxu0 %v2145
    %v2412 = vpop.f32.mrb[0].mxu0
    %v2413 = vadd.f32 0.0, %v2412
    %v2414 = vpop.f32.mrb[0].mxu0
    %2415 = vmatprep.mubr.f32.mxu0 0.0
    %2416 = vmatmul.mubr.f32.gmra.mrb[0].mxu0 %v2148
    %v2417 = vpop.f32.mrb[0].mxu0
    %v2418 = vadd.f32 0.0, %v2417
    %v2419 = vpop.f32.mrb[0].mxu0
    %2420 = vmatprep.mubr.f32.mxu0 0.0
    %2421 = vmatmul.mubr.f32.gmra.mrb[0].mxu0 %v2151
    %v2422 = vpop.f32.mrb[0].mxu0
    %v2423 = vadd.f32 0.0, %v2422
    %v2424 = vpop.f32.mrb[0].mxu0
    %2425 = vmatprep.mubr.f32.mxu0 0.0
    %2426 = vmatmul.mubr.f32.gmra.mrb[0].mxu0 %v2154
    %v2427 = vpop.f32.mrb[0].mxu0
    %v2428 = vadd.f32 0.0, %v2427
    %v2429 = vpop.f32.mrb[0].mxu0
    %2430 = vmatprep.mubr.f32.mxu0 0.0
    %2431 = vmatmul.mubr.f32.gmra.mrb[0].mxu0 %v2157
    %v2432 = vpop.f32.mrb[0].mxu0
    %v2433 = vadd.f32 0.0, %v2432
    %v2434 = vpop.f32.mrb[0].mxu0
    %2435 = vmatprep.mubr.f32.mxu0 0.0
    %2436 = vmatmul.mubr.f32.gmra.mrb[0].mxu0 %v2160
    %v2437 = vpop.f32.mrb[0].mxu0
    %v2438 = vadd.f32 0.0, %v2437
    %v2439 = vpop.f32.mrb[0].mxu0
    %2440 = vmatprep.mubr.f32.mxu0 0.0
    %2441 = vmatmul.mubr.f32.gmra.mrb[0].mxu0 %v2163
    %v2442 = vpop.f32.mrb[0].mxu0
    %v2443 = vadd.f32 0.0, %v2442
    %v2444 = vpop.f32.mrb[0].mxu0
    %2445 = vmatprep.mubr.f32.mxu0 0.0
    %2446 = vmatmul.mubr.f32.gmra.mrb[0].mxu0 %v2166
    %v2447 = vpop.f32.mrb[0].mxu0
    %v2448 = vadd.f32 0.0, %v2447
    %v2449 = vpop.f32.mrb[0].mxu0
    %2450 = vmatprep.mubr.f32.mxu0 0.0
    %2451 = vmatmul.mubr.f32.gmra.mrb[0].mxu0 %v2169
    %v2452 = vpop.f32.mrb[0].mxu0
    %v2453 = vadd.f32 0.0, %v2452
    %v2454 = vpop.f32.mrb[0].mxu0
    %2455 = vmatprep.mubr.f32.mxu0 0.0
    %2456 = vmatmul.mubr.f32.gmra.mrb[0].mxu0 %v2172
    %v2457 = vpop.f32.mrb[0].mxu0
    %v2458 = vadd.f32 0.0, %v2457
    %v2459 = vpop.f32.mrb[0].mxu0
    %2460 = vmatprep.mubr.f32.mxu0 0.0
    %2461 = vmatmul.mubr.f32.gmra.mrb[0].mxu0 %v2175
    %v2462 = vpop.f32.mrb[0].mxu0
    %v2463 = vadd.f32 0.0, %v2462
    %v2464 = vpop.f32.mrb[0].mxu0
    %2465 = vmatprep.mubr.f32.mxu0 0.0
    %2466 = vmatmul.mubr.f32.gmra.mrb[0].mxu0 %v2178
    %v2467 = vpop.f32.mrb[0].mxu0
    %v2468 = vadd.f32 0.0, %v2467
    %v2469 = vpop.f32.mrb[0].mxu0
    %2470 = vmatprep.mubr.f32.mxu0 0.0
    %2471 = vmatmul.mubr.f32.gmra.mrb[0].mxu0 %v2181
    %v2472 = vpop.f32.mrb[0].mxu0
    %v2473 = vadd.f32 0.0, %v2472
    %v2474 = vpop.f32.mrb[0].mxu0
    %2475 = vmatprep.mubr.f32.mxu0 0.0
    %2476 = vmatmul.mubr.f32.gmra.mrb[0].mxu0 %v2184
    %v2477 = vpop.f32.mrb[0].mxu0
    %v2478 = vadd.f32 0.0, %v2477
    %v2479 = vpop.f32.mrb[0].mxu0
    %2480 = vmatprep.mubr.f32.mxu0 0.0
    %2481 = vmatmul.mubr.f32.gmra.mrb[0].mxu0 %v2187
    %v2482 = vpop.f32.mrb[0].mxu0
    %v2483 = vadd.f32 0.0, %v2482
    %v2484 = vpop.f32.mrb[0].mxu0
    %2485 = vmatprep.mubr.f32.mxu0 0.0
    %2486 = vmatmul.mubr.f32.gmra.mrb[0].mxu0 %v2190
    %v2487 = vpop.f32.mrb[0].mxu0
    %v2488 = vadd.f32 0.0, %v2487
    %v2489 = vpop.f32.mrb[0].mxu0
    %2490 = vmatprep.mubr.f32.mxu0 0.0
    %2491 = vmatmul.mubr.f32.gmra.mrb[0].mxu0 %v2193
    %v2492 = vpop.f32.mrb[0].mxu0
    %v2493 = vadd.f32 0.0, %v2492
    %v2494 = vpop.f32.mrb[0].mxu0
    %2495 = vmatprep.mubr.f32.mxu0 0.0
    %2496 = vmatmul.mubr.f32.gmra.mrb[0].mxu0 %v2196
    %v2497 = vpop.f32.mrb[0].mxu0
    %v2498 = vadd.f32 0.0, %v2497
    %v2499 = vpop.f32.mrb[0].mxu0
    %2500 = vmatprep.mubr.f32.mxu0 0.0
    %2501 = vmatmul.mubr.f32.gmra.mrb[0].mxu0 %v2199
    %v2502 = vpop.f32.mrb[0].mxu0
    %v2503 = vadd.f32 0.0, %v2502
    %v2504 = vpop.f32.mrb[0].mxu0
    %2505 = vmatprep.mubr.f32.mxu0 0.0
    %2506 = vmatmul.mubr.f32.gmra.mrb[0].mxu0 %v2202
    %v2507 = vpop.f32.mrb[0].mxu0
    %v2508 = vadd.f32 0.0, %v2507
    %v2509 = vpop.f32.mrb[0].mxu0
    %2510 = vmatprep.mubr.f32.mxu0 0.0
    %2511 = vmatmul.mubr.f32.gmra.mrb[0].mxu0 %v2205
    %v2512 = vpop.f32.mrb[0].mxu0
    %v2513 = vadd.f32 0.0, %v2512
    %v2514 = vpop.f32.mrb[0].mxu0
    %2515 = vmatprep.mubr.f32.mxu0 0.0
    %2516 = vmatmul.mubr.f32.gmra.mrb[0].mxu0 %v2208
    %v2517 = vpop.f32.mrb[0].mxu0
    %v2518 = vadd.f32 0.0, %v2517
    %v2519 = vpop.f32.mrb[0].mxu0
    %2520 = vmatprep.mubr.f32.mxu0 0.0
    %2521 = vmatmul.mubr.f32.gmra.mrb[0].mxu0 %v2211
    %v2522 = vpop.f32.mrb[0].mxu0
    %v2523 = vadd.f32 0.0, %v2522
    %v2524 = vpop.f32.mrb[0].mxu0
    %2525 = vmatprep.mubr.f32.mxu0 0.0
    %2526 = vmatmul.mubr.f32.gmra.mrb[0].mxu0 %v2214
    %v2527 = vpop.f32.mrb[0].mxu0
    %v2528 = vadd.f32 0.0, %v2527
    %v2529 = vpop.f32.mrb[0].mxu0
    %2530 = vmatprep.mubr.f32.mxu0 0.0
    %2531 = vmatmul.mubr.f32.gmra.mrb[0].mxu0 %v2217
    %v2532 = vpop.f32.mrb[0].mxu0
    %v2533 = vadd.f32 0.0, %v2532
    %v2534 = vpop.f32.mrb[0].mxu0
    %2535 = vmatprep.mubr.f32.mxu0 0.0
    %2536 = vmatmul.mubr.f32.gmra.mrb[0].mxu0 %v2220
    %v2537 = vpop.f32.mrb[0].mxu0
    %v2538 = vadd.f32 0.0, %v2537
    %v2539 = vpop.f32.mrb[0].mxu0
    %2540 = vmatprep.mubr.f32.mxu0 0.0
    %2541 = vmatmul.mubr.f32.gmra.mrb[0].mxu0 %v2223
    %v2542 = vpop.f32.mrb[0].mxu0
    %v2543 = vadd.f32 0.0, %v2542
    %v2544 = vpop.f32.mrb[0].mxu0
    %2545 = vmatprep.mubr.f32.mxu0 0.0
    %2546 = vmatmul.mubr.f32.gmra.mrb[0].mxu0 %v2226
    %v2547 = vpop.f32.mrb[0].mxu0
    %v2548 = vadd.f32 0.0, %v2547
    %v2549 = vpop.f32.mrb[0].mxu0
    %2550 = vmatprep.mubr.f32.mxu0 0.0
    %2551 = vmatmul.mubr.f32.gmra.mrb[0].mxu0 %v2229
    %v2552 = vpop.f32.mrb[0].mxu0
    %v2553 = vadd.f32 0.0, %v2552
    %v2554 = vpop.f32.mrb[0].mxu0
    %2555 = vmatprep.mubr.f32.mxu0 0.0
    %2556 = vmatmul.mubr.f32.gmra.mrb[0].mxu0 %v2232
    %v2557 = vpop.f32.mrb[0].mxu0
    %v2558 = vadd.f32 0.0, %v2557
    %v2559 = vpop.f32.mrb[0].mxu0
    %2560 = vmatprep.mubr.f32.mxu0 0.0
    %2561 = vmatmul.mubr.f32.gmra.mrb[0].mxu0 %v2235
    %v2562 = vpop.f32.mrb[0].mxu0
    %v2563 = vadd.f32 0.0, %v2562
    %v2564 = vpop.f32.mrb[0].mxu0
    %2565 = vmatprep.mubr.f32.mxu0 0.0
    %2566 = vmatmul.mubr.f32.gmra.mrb[0].mxu0 %v2238
    %v2567 = vpop.f32.mrb[0].mxu0
    %v2568 = vadd.f32 0.0, %v2567
    %v2569 = vpop.f32.mrb[0].mxu0
    %2570 = vmatprep.mubr.f32.mxu0 0.0
    %2571 = vmatmul.mubr.f32.gmra.mrb[0].mxu0 %v2241
    %v2572 = vpop.f32.mrb[0].mxu0
    %v2573 = vadd.f32 0.0, %v2572
    %v2574 = vpop.f32.mrb[0].mxu0
    %2575 = vmatprep.mubr.f32.mxu0 0.0
    %2576 = vmatmul.mubr.f32.gmra.mrb[0].mxu0 %v2244
    %v2577 = vpop.f32.mrb[0].mxu0
    %v2578 = vadd.f32 0.0, %v2577
    %v2579 = vpop.f32.mrb[0].mxu0
    %2580 = vmatprep.mubr.f32.mxu0 0.0
    %2581 = vmatmul.mubr.f32.gmra.mrb[0].mxu0 %v2247
    %v2582 = vpop.f32.mrb[0].mxu0
    %v2583 = vadd.f32 0.0, %v2582
    %v2584 = vpop.f32.mrb[0].mxu0
    %2585 = vmatprep.mubr.f32.mxu0 0.0
    %2586 = vmatmul.mubr.f32.gmra.mrb[0].mxu0 %v2250
    %v2587 = vpop.f32.mrb[0].mxu0
    %v2588 = vadd.f32 0.0, %v2587
    %v2589 = vpop.f32.mrb[0].mxu0
    %2590 = vmatprep.mubr.f32.mxu0 0.0
    %2591 = vmatmul.mubr.f32.gmra.mrb[0].mxu0 %v2253
    %v2592 = vpop.f32.mrb[0].mxu0
    %v2593 = vadd.f32 0.0, %v2592
    %v2594 = vpop.f32.mrb[0].mxu0
    %2595 = vmatprep.mubr.f32.mxu0 0.0
    %2596 = vmatmul.mubr.f32.gmra.mrb[0].mxu0 %v2256
    %v2597 = vpop.f32.mrb[0].mxu0
    %v2598 = vadd.f32 0.0, %v2597
    %v2599 = vpop.f32.mrb[0].mxu0
    %2600 = vmatprep.mubr.f32.mxu0 0.0
    %2601 = vmatmul.mubr.f32.gmra.mrb[0].mxu0 %v2259
    %v2602 = vpop.f32.mrb[0].mxu0
    %v2603 = vadd.f32 0.0, %v2602
    %v2604 = vpop.f32.mrb[0].mxu0
    %2605 = vmatprep.mubr.f32.mxu0 0.0
    %2606 = vmatmul.mubr.f32.gmra.mrb[0].mxu0 %v2262
    %v2607 = vpop.f32.mrb[0].mxu0
    %v2608 = vadd.f32 0.0, %v2607
    %v2609 = vpop.f32.mrb[0].mxu0
    %2610 = vmatprep.mubr.f32.mxu0 0.0
    %2611 = vmatmul.mubr.f32.gmra.mrb[0].mxu0 %v2265
    %v2612 = vpop.f32.mrb[0].mxu0
    %v2613 = vadd.f32 0.0, %v2612
    %v2614 = vpop.f32.mrb[0].mxu0
    %2615 = vmatprep.mubr.f32.mxu0 0.0
    %2616 = vmatmul.mubr.f32.gmra.mrb[0].mxu0 %v2268
    %v2617 = vpop.f32.mrb[0].mxu0
    %v2618 = vadd.f32 0.0, %v2617
    %v2619 = vpop.f32.mrb[0].mxu0
    %2620 = vmatprep.mubr.f32.mxu0 0.0
    %2621 = vmatmul.mubr.f32.gmra.mrb[0].mxu0 %v2271
    %v2622 = vpop.f32.mrb[0].mxu0
    %v2623 = vadd.f32 0.0, %v2622
    %v2624 = vpop.f32.mrb[0].mxu0
    %2625 = vmatprep.mubr.f32.mxu0 0.0
    %2626 = vmatmul.mubr.f32.gmra.mrb[0].mxu0 %v2274
    %v2627 = vpop.f32.mrb[0].mxu0
    %v2628 = vadd.f32 0.0, %v2627
    %v2629 = vpop.f32.mrb[0].mxu0
    %2630 = vmatprep.mubr.f32.mxu0 0.0
    %2631 = vmatmul.mubr.f32.gmra.mrb[0].mxu0 %v2277
    %v2632 = vpop.f32.mrb[0].mxu0
    %v2633 = vadd.f32 0.0, %v2632
    %v2634 = vpop.f32.mrb[0].mxu0
    %2635 = vmatprep.mubr.f32.mxu0 0.0
    %2636 = vmatmul.mubr.f32.gmra.mrb[0].mxu0 %v2280
    %v2637 = vpop.f32.mrb[0].mxu0
    %v2638 = vadd.f32 0.0, %v2637
    %v2639 = vpop.f32.mrb[0].mxu0
    %2640 = vmatprep.mubr.f32.mxu0 0.0
    %2641 = vmatmul.mubr.f32.gmra.mrb[0].mxu0 %v2283
    %v2642 = vpop.f32.mrb[0].mxu0
    %v2643 = vadd.f32 0.0, %v2642
    %v2644 = vpop.f32.mrb[0].mxu0
    %2645 = vmatprep.mubr.f32.mxu0 0.0
    %2646 = vmatmul.mubr.f32.gmra.mrb[0].mxu0 %v2286
    %v2647 = vpop.f32.mrb[0].mxu0
    %v2648 = vadd.f32 0.0, %v2647
    %v2649 = vpop.f32.mrb[0].mxu0
    %2650 = vmatprep.mubr.f32.mxu0 0.0
    %2651 = vmatmul.mubr.f32.gmra.mrb[0].mxu0 %v2289
    %v2652 = vpop.f32.mrb[0].mxu0
    %v2653 = vadd.f32 0.0, %v2652
    %v2654 = vpop.f32.mrb[0].mxu0
    %2655 = vmatprep.mubr.f32.mxu0 0.0
    %2656 = vmatmul.mubr.f32.gmra.mrb[0].mxu0 %v2292
    %v2657 = vpop.f32.mrb[0].mxu0
    %v2658 = vadd.f32 0.0, %v2657
    %v2659 = vpop.f32.mrb[0].mxu0
    %2660 = vmatprep.mubr.f32.mxu0 0.0
    %2661 = vmatmul.mubr.f32.gmra.mrb[0].mxu0 %v2295
    %v2662 = vpop.f32.mrb[0].mxu0
    %v2663 = vadd.f32 0.0, %v2662
    %v2664 = vpop.f32.mrb[0].mxu0
    %2665 = vmatprep.mubr.f32.mxu0 0.0
    %2666 = vmatmul.mubr.f32.gmra.mrb[0].mxu0 %v2298
    %v2667 = vpop.f32.mrb[0].mxu0
    %v2668 = vadd.f32 0.0, %v2667
    %v2669 = vpop.f32.mrb[0].mxu0
    %2670 = vmatprep.mubr.f32.mxu0 0.0
    %2671 = vmatmul.mubr.f32.gmra.mrb[0].mxu0 %v2301
    %v2672 = vpop.f32.mrb[0].mxu0
    %v2673 = vadd.f32 0.0, %v2672
    %v2674 = vpop.f32.mrb[0].mxu0
    %2675 = vmatprep.mubr.f32.mxu0 0.0
    %2676 = vmatmul.mubr.f32.gmra.mrb[0].mxu0 %v2304
    %v2677 = vpop.f32.mrb[0].mxu0
    %v2678 = vadd.f32 0.0, %v2677
    %v2679 = vpop.f32.mrb[0].mxu0
    %2680 = vmatprep.mubr.f32.mxu0 0.0
    %2681 = vmatmul.mubr.f32.gmra.mrb[0].mxu0 %v2307
    %v2682 = vpop.f32.mrb[0].mxu0
    %v2683 = vadd.f32 0.0, %v2682
    %v2684 = vpop.f32.mrb[0].mxu0
    %2685 = vmatprep.mubr.f32.mxu0 0.0
    %2686 = vmatmul.mubr.f32.gmra.mrb[0].mxu0 %v2310
    %v2687 = vpop.f32.mrb[0].mxu0
    %v2688 = vadd.f32 0.0, %v2687
    %v2689 = vpop.f32.mrb[0].mxu0
    %2690 = vmatprep.mubr.f32.mxu0 0.0
    %2691 = vmatmul.mubr.f32.gmra.mrb[0].mxu0 %v2313
    %v2692 = vpop.f32.mrb[0].mxu0
    %v2693 = vadd.f32 0.0, %v2692
    %v2694 = vpop.f32.mrb[0].mxu0
    %2695 = vmatprep.mubr.f32.mxu0 0.0
    %2696 = vmatmul.mubr.f32.gmra.mrb[0].mxu0 %v2316
    %v2697 = vpop.f32.mrb[0].mxu0
    %v2698 = vadd.f32 0.0, %v2697
    %v2699 = vpop.f32.mrb[0].mxu0
    %2700 = vmatprep.mubr.f32.mxu0 0.0
    %2701 = vmatmul.mubr.f32.gmra.mrb[0].mxu0 %v2319
    %v2702 = vpop.f32.mrb[0].mxu0
    %v2703 = vadd.f32 0.0, %v2702
    %v2704 = vpop.f32.mrb[0].mxu0
    %2705 = vdwg.mxu0
    %v2706 = vmul.f32 %v626, %v2388
    %v2707 = vmul.f32 %v627, %v2393
    %v2708 = vmul.f32 %v628, %v2398
    %v2709 = vmul.f32 %v629, %v2403
    %v2710 = vmul.f32 %v630, %v2408
    %v2711 = vmul.f32 %v631, %v2413
    %v2712 = vmul.f32 %v632, %v2418
    %v2713 = vmul.f32 %v633, %v2423
    %v2714 = vmul.f32 %v634, %v2428
    %v2715 = vmul.f32 %v635, %v2433
    %v2716 = vmul.f32 %v636, %v2438
    %v2717 = vmul.f32 %v637, %v2443
    %v2718 = vmul.f32 %v638, %v2448
    %v2719 = vmul.f32 %v639, %v2453
    %v2720 = vmul.f32 %v640, %v2458
    %v2721 = vmul.f32 %v641, %v2463
    %v2722 = vmul.f32 %v642, %v2468
    %v2723 = vmul.f32 %v643, %v2473
    %v2724 = vmul.f32 %v644, %v2478
    %v2725 = vmul.f32 %v645, %v2483
    %v2726 = vmul.f32 %v646, %v2488
    %v2727 = vmul.f32 %v647, %v2493
    %v2728 = vmul.f32 %v648, %v2498
    %v2729 = vmul.f32 %v649, %v2503
    %v2730 = vmul.f32 %v650, %v2508
    %v2731 = vmul.f32 %v651, %v2513
    %v2732 = vmul.f32 %v652, %v2518
    %v2733 = vmul.f32 %v653, %v2523
    %v2734 = vmul.f32 %v654, %v2528
    %v2735 = vmul.f32 %v655, %v2533
    %v2736 = vmul.f32 %v656, %v2538
    %v2737 = vmul.f32 %v657, %v2543
    %v2738 = vmul.f32 %v658, %v2548
    %v2739 = vmul.f32 %v659, %v2553
    %v2740 = vmul.f32 %v660, %v2558
    %v2741 = vmul.f32 %v661, %v2563
    %v2742 = vmul.f32 %v662, %v2568
    %v2743 = vmul.f32 %v663, %v2573
    %v2744 = vmul.f32 %v664, %v2578
    %v2745 = vmul.f32 %v665, %v2583
    %v2746 = vmul.f32 %v666, %v2588
    %v2747 = vmul.f32 %v667, %v2593
    %v2748 = vmul.f32 %v668, %v2598
    %v2749 = vmul.f32 %v669, %v2603
    %v2750 = vmul.f32 %v670, %v2608
    %v2751 = vmul.f32 %v671, %v2613
    %v2752 = vmul.f32 %v672, %v2618
    %v2753 = vmul.f32 %v673, %v2623
    %v2754 = vmul.f32 %v674, %v2628
    %v2755 = vmul.f32 %v675, %v2633
    %v2756 = vmul.f32 %v676, %v2638
    %v2757 = vmul.f32 %v677, %v2643
    %v2758 = vmul.f32 %v678, %v2648
    %v2759 = vmul.f32 %v679, %v2653
    %v2760 = vmul.f32 %v680, %v2658
    %v2761 = vmul.f32 %v681, %v2663
    %v2762 = vmul.f32 %v682, %v2668
    %v2763 = vmul.f32 %v683, %v2673
    %v2764 = vmul.f32 %v684, %v2678
    %v2765 = vmul.f32 %v685, %v2683
    %v2766 = vmul.f32 %v686, %v2688
    %v2767 = vmul.f32 %v687, %v2693
    %v2768 = vmul.f32 %v688, %v2698
    %v2769 = vmul.f32 %v689, %v2703
    %2786 = vset.pattern.permute.xlu0 0
    %2787 = vperm.xlu0 %2786, %v2706
    %v2788 = vpop.permute.xlu0 %2787
    %2789 = vset.pattern.permute.xlu0 0
    %2790 = vperm.xlu0 %2789, %v2707
    %v2791 = vpop.permute.xlu0 %2790
    %2792 = vset.pattern.permute.xlu0 0
    %2793 = vperm.xlu0 %2792, %v2708
    %v2794 = vpop.permute.xlu0 %2793
    %2795 = vset.pattern.permute.xlu0 0
    %2796 = vperm.xlu0 %2795, %v2709
    %v2797 = vpop.permute.xlu0 %2796
    %2798 = vset.pattern.permute.xlu0 0
    %2799 = vperm.xlu0 %2798, %v2710
    %v2800 = vpop.permute.xlu0 %2799
    %2801 = vset.pattern.permute.xlu0 0
    %2802 = vperm.xlu0 %2801, %v2711
    %v2803 = vpop.permute.xlu0 %2802
    %2804 = vset.pattern.permute.xlu0 0
    %2805 = vperm.xlu0 %2804, %v2712
    %v2806 = vpop.permute.xlu0 %2805
    %2807 = vset.pattern.permute.xlu0 0
    %2808 = vperm.xlu0 %2807, %v2713
    %v2809 = vpop.permute.xlu0 %2808
    %2810 = vset.pattern.permute.xlu0 0
    %2811 = vperm.xlu0 %2810, %v2714
    %v2812 = vpop.permute.xlu0 %2811
    %2813 = vset.pattern.permute.xlu0 0
    %2814 = vperm.xlu0 %2813, %v2715
    %v2815 = vpop.permute.xlu0 %2814
    %2816 = vset.pattern.permute.xlu0 0
    %2817 = vperm.xlu0 %2816, %v2716
    %v2818 = vpop.permute.xlu0 %2817
    %2819 = vset.pattern.permute.xlu0 0
    %2820 = vperm.xlu0 %2819, %v2717
    %v2821 = vpop.permute.xlu0 %2820
    %2822 = vset.pattern.permute.xlu0 0
    %2823 = vperm.xlu0 %2822, %v2718
    %v2824 = vpop.permute.xlu0 %2823
    %2825 = vset.pattern.permute.xlu0 0
    %2826 = vperm.xlu0 %2825, %v2719
    %v2827 = vpop.permute.xlu0 %2826
    %2828 = vset.pattern.permute.xlu0 0
    %2829 = vperm.xlu0 %2828, %v2720
    %v2830 = vpop.permute.xlu0 %2829
    %2831 = vset.pattern.permute.xlu0 0
    %2832 = vperm.xlu0 %2831, %v2721
    %v2833 = vpop.permute.xlu0 %2832
    %v2834 = vlaneseq
    %v2835 = vand.u32 %v2834, 127
    %v2836 = vlaneseq
    %v2837 = vshrl.u32 %v2836, 7
    %v2838 = vsub.s32 %v2835, %v2837
    %v2839 = vrot.slane %v2788, %v2838
    %v2840 = vadd.s32 %v2835, 4294967288
    %v2841 = vlaneseq
    %v2842 = vshrl.u32 %v2841, 7
    %v2843 = vsub.s32 %v2840, %v2842
    %v2844 = vrot.slane %v2791, %v2843
    %vm2845 = vcmask 130112
    %v2846 = vsel %vm2845, %v2844, %v2839
    %v2847 = vadd.s32 %v2835, 4294967280
    %v2848 = vlaneseq
    %v2849 = vshrl.u32 %v2848, 7
    %v2850 = vsub.s32 %v2847, %v2849
    %v2851 = vrot.slane %v2794, %v2850
    %vm2852 = vcmask 195712
    %v2853 = vsel %vm2852, %v2851, %v2846
    %v2854 = vadd.s32 %v2835, 4294967272
    %v2855 = vlaneseq
    %v2856 = vshrl.u32 %v2855, 7
    %v2857 = vsub.s32 %v2854, %v2856
    %v2858 = vrot.slane %v2797, %v2857
    %vm2859 = vcmask 261312
    %v2860 = vsel %vm2859, %v2858, %v2853
    %v2861 = vadd.s32 %v2835, 4294967264
    %v2862 = vlaneseq
    %v2863 = vshrl.u32 %v2862, 7
    %v2864 = vsub.s32 %v2861, %v2863
    %v2865 = vrot.slane %v2800, %v2864
    %vm2866 = vcmask 326912
    %v2867 = vsel %vm2866, %v2865, %v2860
    %v2868 = vadd.s32 %v2835, 4294967256
    %v2869 = vlaneseq
    %v2870 = vshrl.u32 %v2869, 7
    %v2871 = vsub.s32 %v2868, %v2870
    %v2872 = vrot.slane %v2803, %v2871
    %vm2873 = vcmask 392512
    %v2874 = vsel %vm2873, %v2872, %v2867
    %v2875 = vadd.s32 %v2835, 4294967248
    %v2876 = vlaneseq
    %v2877 = vshrl.u32 %v2876, 7
    %v2878 = vsub.s32 %v2875, %v2877
    %v2879 = vrot.slane %v2806, %v2878
    %vm2880 = vcmask 458112
    %v2881 = vsel %vm2880, %v2879, %v2874
    %v2882 = vadd.s32 %v2835, 4294967240
    %v2883 = vlaneseq
    %v2884 = vshrl.u32 %v2883, 7
    %v2885 = vsub.s32 %v2882, %v2884
    %v2886 = vrot.slane %v2809, %v2885
    %vm2887 = vcmask 523712
    %v2888 = vsel %vm2887, %v2886, %v2881
    %v2889 = vadd.s32 %v2835, 4294967232
    %v2890 = vlaneseq
    %v2891 = vshrl.u32 %v2890, 7
    %v2892 = vsub.s32 %v2889, %v2891
    %v2893 = vrot.slane %v2812, %v2892
    %vm2894 = vcmask 589312
    %v2895 = vsel %vm2894, %v2893, %v2888
    %v2896 = vadd.s32 %v2835, 4294967224
    %v2897 = vlaneseq
    %v2898 = vshrl.u32 %v2897, 7
    %v2899 = vsub.s32 %v2896, %v2898
    %v2900 = vrot.slane %v2815, %v2899
    %vm2901 = vcmask 654912
    %v2902 = vsel %vm2901, %v2900, %v2895
    %v2903 = vadd.s32 %v2835, 4294967216
    %v2904 = vlaneseq
    %v2905 = vshrl.u32 %v2904, 7
    %v2906 = vsub.s32 %v2903, %v2905
    %v2907 = vrot.slane %v2818, %v2906
    %vm2908 = vcmask 720512
    %v2909 = vsel %vm2908, %v2907, %v2902
    %v2910 = vadd.s32 %v2835, 4294967208
    %v2911 = vlaneseq
    %v2912 = vshrl.u32 %v2911, 7
    %v2913 = vsub.s32 %v2910, %v2912
    %v2914 = vrot.slane %v2821, %v2913
    %vm2915 = vcmask 786112
    %v2916 = vsel %vm2915, %v2914, %v2909
    %v2917 = vadd.s32 %v2835, 4294967200
    %v2918 = vlaneseq
    %v2919 = vshrl.u32 %v2918, 7
    %v2920 = vsub.s32 %v2917, %v2919
    %v2921 = vrot.slane %v2824, %v2920
    %vm2922 = vcmask 851712
    %v2923 = vsel %vm2922, %v2921, %v2916
    %v2924 = vadd.s32 %v2835, 4294967192
    %v2925 = vlaneseq
    %v2926 = vshrl.u32 %v2925, 7
    %v2927 = vsub.s32 %v2924, %v2926
    %v2928 = vrot.slane %v2827, %v2927
    %vm2929 = vcmask 917312
    %v2930 = vsel %vm2929, %v2928, %v2923
    %v2931 = vadd.s32 %v2835, 4294967184
    %v2932 = vlaneseq
    %v2933 = vshrl.u32 %v2932, 7
    %v2934 = vsub.s32 %v2931, %v2933
    %v2935 = vrot.slane %v2830, %v2934
    %vm2936 = vcmask 982912
    %v2937 = vsel %vm2936, %v2935, %v2930
    %v2938 = vadd.s32 %v2835, 4294967176
    %v2939 = vlaneseq
    %v2940 = vshrl.u32 %v2939, 7
    %v2941 = vsub.s32 %v2938, %v2940
    %v2942 = vrot.slane %v2833, %v2941
    %vm2943 = vcmask 1048512
    %v2944 = vsel %vm2943, %v2942, %v2937
    %2946 = vmatprep.subr.mxu0 0.0
    %2947 = vmatpush1.msra.mxu0 %v79
    %2948 = vmatprep.subr.mxu0 0.0
    %2949 = vmatpush1.msra.mxu0 %v80
    %2950 = vmatprep.subr.mxu0 0.0
    %2951 = vmatpush1.msra.mxu0 %v81
    %2952 = vmatprep.subr.mxu0 0.0
    %2953 = vmatpush1.msra.mxu0 %v82
    %2954 = vmatprep.subr.mxu0 0.0
    %2955 = vmatpush1.msra.mxu0 %v83
    %2956 = vmatprep.subr.mxu0 0.0
    %2957 = vmatpush1.msra.mxu0 %v84
    %2958 = vmatprep.subr.mxu0 0.0
    %2959 = vmatpush1.msra.mxu0 %v85
    %2960 = vmatprep.subr.mxu0 0.0
    %2961 = vmatpush1.msra.mxu0 %v86
    %2962 = vmatprep.subr.mxu0 0.0
    %2963 = vmatpush1.msra.mxu0 %v87
    %2964 = vmatprep.subr.mxu0 0.0
    %2965 = vmatpush1.msra.mxu0 %v88
    %2966 = vmatprep.subr.mxu0 0.0
    %2967 = vmatpush1.msra.mxu0 %v89
    %2968 = vmatprep.subr.mxu0 0.0
    %2969 = vmatpush1.msra.mxu0 %v90
    %2970 = vmatprep.subr.mxu0 0.0
    %2971 = vmatpush1.msra.mxu0 %v91
    %2972 = vmatprep.subr.mxu0 0.0
    %2973 = vmatpush1.msra.mxu0 %v92
    %2974 = vmatprep.subr.mxu0 0.0
    %2975 = vmatpush1.msra.mxu0 %v93
    %2976 = vmatprep.subr.mxu0 0.0
    %2977 = vmatpush1.msra.mxu0 %v94
    %2978 = vmatprep.subr.mxu0 0.0
    %2979 = vmatpush1.msra.mxu0 0.0
    %2980 = vmatprep.subr.mxu0 0.0
    %2981 = vmatpush1.msra.mxu0 0.0
    %2982 = vmatprep.subr.mxu0 0.0
    %2983 = vmatpush1.msra.mxu0 0.0
    %2984 = vmatprep.subr.mxu0 0.0
    %2985 = vmatpush1.msra.mxu0 0.0
    %2986 = vmatprep.subr.mxu0 0.0
    %2987 = vmatpush1.msra.mxu0 0.0
    %2988 = vmatprep.subr.mxu0 0.0
    %2989 = vmatpush1.msra.mxu0 0.0
    %2990 = vmatprep.subr.mxu0 0.0
    %2991 = vmatpush1.msra.mxu0 0.0
    %2992 = vmatprep.subr.mxu0 0.0
    %2993 = vmatpush1.msra.mxu0 0.0
    %2994 = vmatprep.subr.mxu0 0.0
    %2995 = vmatpush1.msra.mxu0 0.0
    %2996 = vmatprep.subr.mxu0 0.0
    %2997 = vmatpush1.msra.mxu0 0.0
    %2998 = vmatprep.subr.mxu0 0.0
    %2999 = vmatpush1.msra.mxu0 0.0
    %3000 = vmatprep.subr.mxu0 0.0
    %3001 = vmatpush1.msra.mxu0 0.0
    %3002 = vmatprep.subr.mxu0 0.0
    %3003 = vmatpush1.msra.mxu0 0.0
    %3004 = vmatprep.subr.mxu0 0.0
    %3005 = vmatpush1.msra.mxu0 0.0
    %3006 = vmatprep.subr.mxu0 0.0
    %3007 = vmatpush1.msra.mxu0 0.0
    %3008 = vmatprep.subr.mxu0 0.0
    %3009 = vmatpush1.msra.mxu0 0.0
    %3010 = vmatprep.mubr.f32.mxu0 0.0
    %3011 = vmatmul.mubr.f32.gmra.mrb[0].mxu0 %v2944
    %v3012 = vpop.f32.mrb[0].mxu0
    %v3013 = vadd.f32 0.0, %v3012
    %v3014 = vpop.f32.mrb[0].mxu0
    %3015 = vdwg.mxu0
    %3032 = vset.pattern.permute.xlu0 0
    %3033 = vperm.xlu0 %3032, %v2722
    %v3034 = vpop.permute.xlu0 %3033
    %3035 = vset.pattern.permute.xlu0 0
    %3036 = vperm.xlu0 %3035, %v2723
    %v3037 = vpop.permute.xlu0 %3036
    %3038 = vset.pattern.permute.xlu0 0
    %3039 = vperm.xlu0 %3038, %v2724
    %v3040 = vpop.permute.xlu0 %3039
    %3041 = vset.pattern.permute.xlu0 0
    %3042 = vperm.xlu0 %3041, %v2725
    %v3043 = vpop.permute.xlu0 %3042
    %3044 = vset.pattern.permute.xlu0 0
    %3045 = vperm.xlu0 %3044, %v2726
    %v3046 = vpop.permute.xlu0 %3045
    %3047 = vset.pattern.permute.xlu0 0
    %3048 = vperm.xlu0 %3047, %v2727
    %v3049 = vpop.permute.xlu0 %3048
    %3050 = vset.pattern.permute.xlu0 0
    %3051 = vperm.xlu0 %3050, %v2728
    %v3052 = vpop.permute.xlu0 %3051
    %3053 = vset.pattern.permute.xlu0 0
    %3054 = vperm.xlu0 %3053, %v2729
    %v3055 = vpop.permute.xlu0 %3054
    %3056 = vset.pattern.permute.xlu0 0
    %3057 = vperm.xlu0 %3056, %v2730
    %v3058 = vpop.permute.xlu0 %3057
    %3059 = vset.pattern.permute.xlu0 0
    %3060 = vperm.xlu0 %3059, %v2731
    %v3061 = vpop.permute.xlu0 %3060
    %3062 = vset.pattern.permute.xlu0 0
    %3063 = vperm.xlu0 %3062, %v2732
    %v3064 = vpop.permute.xlu0 %3063
    %3065 = vset.pattern.permute.xlu0 0
    %3066 = vperm.xlu0 %3065, %v2733
    %v3067 = vpop.permute.xlu0 %3066
    %3068 = vset.pattern.permute.xlu0 0
    %3069 = vperm.xlu0 %3068, %v2734
    %v3070 = vpop.permute.xlu0 %3069
    %3071 = vset.pattern.permute.xlu0 0
    %3072 = vperm.xlu0 %3071, %v2735
    %v3073 = vpop.permute.xlu0 %3072
    %3074 = vset.pattern.permute.xlu0 0
    %3075 = vperm.xlu0 %3074, %v2736
    %v3076 = vpop.permute.xlu0 %3075
    %3077 = vset.pattern.permute.xlu0 0
    %3078 = vperm.xlu0 %3077, %v2737
    %v3079 = vpop.permute.xlu0 %3078
    %v3080 = vlaneseq
    %v3081 = vshrl.u32 %v3080, 7
    %v3082 = vsub.s32 %v2835, %v3081
    %v3083 = vrot.slane %v3034, %v3082
    %v3084 = vlaneseq
    %v3085 = vshrl.u32 %v3084, 7
    %v3086 = vsub.s32 %v2840, %v3085
    %v3087 = vrot.slane %v3037, %v3086
    %v3088 = vsel %vm2845, %v3087, %v3083
    %v3089 = vlaneseq
    %v3090 = vshrl.u32 %v3089, 7
    %v3091 = vsub.s32 %v2847, %v3090
    %v3092 = vrot.slane %v3040, %v3091
    %v3093 = vsel %vm2852, %v3092, %v3088
    %v3094 = vlaneseq
    %v3095 = vshrl.u32 %v3094, 7
    %v3096 = vsub.s32 %v2854, %v3095
    %v3097 = vrot.slane %v3043, %v3096
    %v3098 = vsel %vm2859, %v3097, %v3093
    %v3099 = vlaneseq
    %v3100 = vshrl.u32 %v3099, 7
    %v3101 = vsub.s32 %v2861, %v3100
    %v3102 = vrot.slane %v3046, %v3101
    %v3103 = vsel %vm2866, %v3102, %v3098
    %v3104 = vlaneseq
    %v3105 = vshrl.u32 %v3104, 7
    %v3106 = vsub.s32 %v2868, %v3105
    %v3107 = vrot.slane %v3049, %v3106
    %v3108 = vsel %vm2873, %v3107, %v3103
    %v3109 = vlaneseq
    %v3110 = vshrl.u32 %v3109, 7
    %v3111 = vsub.s32 %v2875, %v3110
    %v3112 = vrot.slane %v3052, %v3111
    %v3113 = vsel %vm2880, %v3112, %v3108
    %v3114 = vlaneseq
    %v3115 = vshrl.u32 %v3114, 7
    %v3116 = vsub.s32 %v2882, %v3115
    %v3117 = vrot.slane %v3055, %v3116
    %v3118 = vsel %vm2887, %v3117, %v3113
    %v3119 = vlaneseq
    %v3120 = vshrl.u32 %v3119, 7
    %v3121 = vsub.s32 %v2889, %v3120
    %v3122 = vrot.slane %v3058, %v3121
    %v3123 = vsel %vm2894, %v3122, %v3118
    %v3124 = vlaneseq
    %v3125 = vshrl.u32 %v3124, 7
    %v3126 = vsub.s32 %v2896, %v3125
    %v3127 = vrot.slane %v3061, %v3126
    %v3128 = vsel %vm2901, %v3127, %v3123
    %v3129 = vlaneseq
    %v3130 = vshrl.u32 %v3129, 7
    %v3131 = vsub.s32 %v2903, %v3130
    %v3132 = vrot.slane %v3064, %v3131
    %v3133 = vsel %vm2908, %v3132, %v3128
    %v3134 = vlaneseq
    %v3135 = vshrl.u32 %v3134, 7
    %v3136 = vsub.s32 %v2910, %v3135
    %v3137 = vrot.slane %v3067, %v3136
    %v3138 = vsel %vm2915, %v3137, %v3133
    %v3139 = vlaneseq
    %v3140 = vshrl.u32 %v3139, 7
    %v3141 = vsub.s32 %v2917, %v3140
    %v3142 = vrot.slane %v3070, %v3141
    %v3143 = vsel %vm2922, %v3142, %v3138
    %v3144 = vlaneseq
    %v3145 = vshrl.u32 %v3144, 7
    %v3146 = vsub.s32 %v2924, %v3145
    %v3147 = vrot.slane %v3073, %v3146
    %v3148 = vsel %vm2929, %v3147, %v3143
    %v3149 = vlaneseq
    %v3150 = vshrl.u32 %v3149, 7
    %v3151 = vsub.s32 %v2931, %v3150
    %v3152 = vrot.slane %v3076, %v3151
    %v3153 = vsel %vm2936, %v3152, %v3148
    %v3154 = vlaneseq
    %v3155 = vshrl.u32 %v3154, 7
    %v3156 = vsub.s32 %v2938, %v3155
    %v3157 = vrot.slane %v3079, %v3156
    %v3158 = vsel %vm2943, %v3157, %v3153
    %3160 = vmatprep.subr.mxu0 0.0
    %3161 = vmatpush1.msra.mxu0 %v95
    %3162 = vmatprep.subr.mxu0 0.0
    %3163 = vmatpush1.msra.mxu0 %v96
    %3164 = vmatprep.subr.mxu0 0.0
    %3165 = vmatpush1.msra.mxu0 %v97
    %3166 = vmatprep.subr.mxu0 0.0
    %3167 = vmatpush1.msra.mxu0 %v98
    %3168 = vmatprep.subr.mxu0 0.0
    %3169 = vmatpush1.msra.mxu0 %v99
    %3170 = vmatprep.subr.mxu0 0.0
    %3171 = vmatpush1.msra.mxu0 %v100
    %3172 = vmatprep.subr.mxu0 0.0
    %3173 = vmatpush1.msra.mxu0 %v101
    %3174 = vmatprep.subr.mxu0 0.0
    %3175 = vmatpush1.msra.mxu0 %v102
    %3176 = vmatprep.subr.mxu0 0.0
    %3177 = vmatpush1.msra.mxu0 %v103
    %3178 = vmatprep.subr.mxu0 0.0
    %3179 = vmatpush1.msra.mxu0 %v104
    %3180 = vmatprep.subr.mxu0 0.0
    %3181 = vmatpush1.msra.mxu0 %v105
    %3182 = vmatprep.subr.mxu0 0.0
    %3183 = vmatpush1.msra.mxu0 %v106
    %3184 = vmatprep.subr.mxu0 0.0
    %3185 = vmatpush1.msra.mxu0 %v107
    %3186 = vmatprep.subr.mxu0 0.0
    %3187 = vmatpush1.msra.mxu0 %v108
    %3188 = vmatprep.subr.mxu0 0.0
    %3189 = vmatpush1.msra.mxu0 %v109
    %3190 = vmatprep.subr.mxu0 0.0
    %3191 = vmatpush1.msra.mxu0 %v110
    %3192 = vmatprep.subr.mxu0 0.0
    %3193 = vmatpush1.msra.mxu0 0.0
    %3194 = vmatprep.subr.mxu0 0.0
    %3195 = vmatpush1.msra.mxu0 0.0
    %3196 = vmatprep.subr.mxu0 0.0
    %3197 = vmatpush1.msra.mxu0 0.0
    %3198 = vmatprep.subr.mxu0 0.0
    %3199 = vmatpush1.msra.mxu0 0.0
    %3200 = vmatprep.subr.mxu0 0.0
    %3201 = vmatpush1.msra.mxu0 0.0
    %3202 = vmatprep.subr.mxu0 0.0
    %3203 = vmatpush1.msra.mxu0 0.0
    %3204 = vmatprep.subr.mxu0 0.0
    %3205 = vmatpush1.msra.mxu0 0.0
    %3206 = vmatprep.subr.mxu0 0.0
    %3207 = vmatpush1.msra.mxu0 0.0
    %3208 = vmatprep.subr.mxu0 0.0
    %3209 = vmatpush1.msra.mxu0 0.0
    %3210 = vmatprep.subr.mxu0 0.0
    %3211 = vmatpush1.msra.mxu0 0.0
    %3212 = vmatprep.subr.mxu0 0.0
    %3213 = vmatpush1.msra.mxu0 0.0
    %3214 = vmatprep.subr.mxu0 0.0
    %3215 = vmatpush1.msra.mxu0 0.0
    %3216 = vmatprep.subr.mxu0 0.0
    %3217 = vmatpush1.msra.mxu0 0.0
    %3218 = vmatprep.subr.mxu0 0.0
    %3219 = vmatpush1.msra.mxu0 0.0
    %3220 = vmatprep.subr.mxu0 0.0
    %3221 = vmatpush1.msra.mxu0 0.0
    %3222 = vmatprep.subr.mxu0 0.0
    %3223 = vmatpush1.msra.mxu0 0.0
    %3224 = vmatprep.mubr.f32.mxu0 0.0
    %3225 = vmatmul.mubr.f32.gmra.mrb[0].mxu0 %v3158
    %v3226 = vpop.f32.mrb[0].mxu0
    %v3227 = vadd.f32 0.0, %v3226
    %v3228 = vpop.f32.mrb[0].mxu0
    %3229 = vdwg.mxu0
    %3246 = vset.pattern.permute.xlu0 0
    %3247 = vperm.xlu0 %3246, %v2738
    %v3248 = vpop.permute.xlu0 %3247
    %3249 = vset.pattern.permute.xlu0 0
    %3250 = vperm.xlu0 %3249, %v2739
    %v3251 = vpop.permute.xlu0 %3250
    %3252 = vset.pattern.permute.xlu0 0
    %3253 = vperm.xlu0 %3252, %v2740
    %v3254 = vpop.permute.xlu0 %3253
    %3255 = vset.pattern.permute.xlu0 0
    %3256 = vperm.xlu0 %3255, %v2741
    %v3257 = vpop.permute.xlu0 %3256
    %3258 = vset.pattern.permute.xlu0 0
    %3259 = vperm.xlu0 %3258, %v2742
    %v3260 = vpop.permute.xlu0 %3259
    %3261 = vset.pattern.permute.xlu0 0
    %3262 = vperm.xlu0 %3261, %v2743
    %v3263 = vpop.permute.xlu0 %3262
    %3264 = vset.pattern.permute.xlu0 0
    %3265 = vperm.xlu0 %3264, %v2744
    %v3266 = vpop.permute.xlu0 %3265
    %3267 = vset.pattern.permute.xlu0 0
    %3268 = vperm.xlu0 %3267, %v2745
    %v3269 = vpop.permute.xlu0 %3268
    %3270 = vset.pattern.permute.xlu0 0
    %3271 = vperm.xlu0 %3270, %v2746
    %v3272 = vpop.permute.xlu0 %3271
    %3273 = vset.pattern.permute.xlu0 0
    %3274 = vperm.xlu0 %3273, %v2747
    %v3275 = vpop.permute.xlu0 %3274
    %3276 = vset.pattern.permute.xlu0 0
    %3277 = vperm.xlu0 %3276, %v2748
    %v3278 = vpop.permute.xlu0 %3277
    %3279 = vset.pattern.permute.xlu0 0
    %3280 = vperm.xlu0 %3279, %v2749
    %v3281 = vpop.permute.xlu0 %3280
    %3282 = vset.pattern.permute.xlu0 0
    %3283 = vperm.xlu0 %3282, %v2750
    %v3284 = vpop.permute.xlu0 %3283
    %3285 = vset.pattern.permute.xlu0 0
    %3286 = vperm.xlu0 %3285, %v2751
    %v3287 = vpop.permute.xlu0 %3286
    %3288 = vset.pattern.permute.xlu0 0
    %3289 = vperm.xlu0 %3288, %v2752
    %v3290 = vpop.permute.xlu0 %3289
    %3291 = vset.pattern.permute.xlu0 0
    %3292 = vperm.xlu0 %3291, %v2753
    %v3293 = vpop.permute.xlu0 %3292
    %v3294 = vlaneseq
    %v3295 = vshrl.u32 %v3294, 7
    %v3296 = vsub.s32 %v2835, %v3295
    %v3297 = vrot.slane %v3248, %v3296
    %v3298 = vlaneseq
    %v3299 = vshrl.u32 %v3298, 7
    %v3300 = vsub.s32 %v2840, %v3299
    %v3301 = vrot.slane %v3251, %v3300
    %v3302 = vsel %vm2845, %v3301, %v3297
    %v3303 = vlaneseq
    %v3304 = vshrl.u32 %v3303, 7
    %v3305 = vsub.s32 %v2847, %v3304
    %v3306 = vrot.slane %v3254, %v3305
    %v3307 = vsel %vm2852, %v3306, %v3302
    %v3308 = vlaneseq
    %v3309 = vshrl.u32 %v3308, 7
    %v3310 = vsub.s32 %v2854, %v3309
    %v3311 = vrot.slane %v3257, %v3310
    %v3312 = vsel %vm2859, %v3311, %v3307
    %v3313 = vlaneseq
    %v3314 = vshrl.u32 %v3313, 7
    %v3315 = vsub.s32 %v2861, %v3314
    %v3316 = vrot.slane %v3260, %v3315
    %v3317 = vsel %vm2866, %v3316, %v3312
    %v3318 = vlaneseq
    %v3319 = vshrl.u32 %v3318, 7
    %v3320 = vsub.s32 %v2868, %v3319
    %v3321 = vrot.slane %v3263, %v3320
    %v3322 = vsel %vm2873, %v3321, %v3317
    %v3323 = vlaneseq
    %v3324 = vshrl.u32 %v3323, 7
    %v3325 = vsub.s32 %v2875, %v3324
    %v3326 = vrot.slane %v3266, %v3325
    %v3327 = vsel %vm2880, %v3326, %v3322
    %v3328 = vlaneseq
    %v3329 = vshrl.u32 %v3328, 7
    %v3330 = vsub.s32 %v2882, %v3329
    %v3331 = vrot.slane %v3269, %v3330
    %v3332 = vsel %vm2887, %v3331, %v3327
    %v3333 = vlaneseq
    %v3334 = vshrl.u32 %v3333, 7
    %v3335 = vsub.s32 %v2889, %v3334
    %v3336 = vrot.slane %v3272, %v3335
    %v3337 = vsel %vm2894, %v3336, %v3332
    %v3338 = vlaneseq
    %v3339 = vshrl.u32 %v3338, 7
    %v3340 = vsub.s32 %v2896, %v3339
    %v3341 = vrot.slane %v3275, %v3340
    %v3342 = vsel %vm2901, %v3341, %v3337
    %v3343 = vlaneseq
    %v3344 = vshrl.u32 %v3343, 7
    %v3345 = vsub.s32 %v2903, %v3344
    %v3346 = vrot.slane %v3278, %v3345
    %v3347 = vsel %vm2908, %v3346, %v3342
    %v3348 = vlaneseq
    %v3349 = vshrl.u32 %v3348, 7
    %v3350 = vsub.s32 %v2910, %v3349
    %v3351 = vrot.slane %v3281, %v3350
    %v3352 = vsel %vm2915, %v3351, %v3347
    %v3353 = vlaneseq
    %v3354 = vshrl.u32 %v3353, 7
    %v3355 = vsub.s32 %v2917, %v3354
    %v3356 = vrot.slane %v3284, %v3355
    %v3357 = vsel %vm2922, %v3356, %v3352
    %v3358 = vlaneseq
    %v3359 = vshrl.u32 %v3358, 7
    %v3360 = vsub.s32 %v2924, %v3359
    %v3361 = vrot.slane %v3287, %v3360
    %v3362 = vsel %vm2929, %v3361, %v3357
    %v3363 = vlaneseq
    %v3364 = vshrl.u32 %v3363, 7
    %v3365 = vsub.s32 %v2931, %v3364
    %v3366 = vrot.slane %v3290, %v3365
    %v3367 = vsel %vm2936, %v3366, %v3362
    %v3368 = vlaneseq
    %v3369 = vshrl.u32 %v3368, 7
    %v3370 = vsub.s32 %v2938, %v3369
    %v3371 = vrot.slane %v3293, %v3370
    %v3372 = vsel %vm2943, %v3371, %v3367
    %3374 = vmatprep.subr.mxu0 0.0
    %3375 = vmatpush1.msra.mxu0 %v111
    %3376 = vmatprep.subr.mxu0 0.0
    %3377 = vmatpush1.msra.mxu0 %v112
    %3378 = vmatprep.subr.mxu0 0.0
    %3379 = vmatpush1.msra.mxu0 %v113
    %3380 = vmatprep.subr.mxu0 0.0
    %3381 = vmatpush1.msra.mxu0 %v114
    %3382 = vmatprep.subr.mxu0 0.0
    %3383 = vmatpush1.msra.mxu0 %v115
    %3384 = vmatprep.subr.mxu0 0.0
    %3385 = vmatpush1.msra.mxu0 %v116
    %3386 = vmatprep.subr.mxu0 0.0
    %3387 = vmatpush1.msra.mxu0 %v117
    %3388 = vmatprep.subr.mxu0 0.0
    %3389 = vmatpush1.msra.mxu0 %v118
    %3390 = vmatprep.subr.mxu0 0.0
    %3391 = vmatpush1.msra.mxu0 %v119
    %3392 = vmatprep.subr.mxu0 0.0
    %3393 = vmatpush1.msra.mxu0 %v120
    %3394 = vmatprep.subr.mxu0 0.0
    %3395 = vmatpush1.msra.mxu0 %v121
    %3396 = vmatprep.subr.mxu0 0.0
    %3397 = vmatpush1.msra.mxu0 %v122
    %3398 = vmatprep.subr.mxu0 0.0
    %3399 = vmatpush1.msra.mxu0 %v123
    %3400 = vmatprep.subr.mxu0 0.0
    %3401 = vmatpush1.msra.mxu0 %v124
    %3402 = vmatprep.subr.mxu0 0.0
    %3403 = vmatpush1.msra.mxu0 %v125
    %3404 = vmatprep.subr.mxu0 0.0
    %3405 = vmatpush1.msra.mxu0 %v126
    %3406 = vmatprep.subr.mxu0 0.0
    %3407 = vmatpush1.msra.mxu0 0.0
    %3408 = vmatprep.subr.mxu0 0.0
    %3409 = vmatpush1.msra.mxu0 0.0
    %3410 = vmatprep.subr.mxu0 0.0
    %3411 = vmatpush1.msra.mxu0 0.0
    %3412 = vmatprep.subr.mxu0 0.0
    %3413 = vmatpush1.msra.mxu0 0.0
    %3414 = vmatprep.subr.mxu0 0.0
    %3415 = vmatpush1.msra.mxu0 0.0
    %3416 = vmatprep.subr.mxu0 0.0
    %3417 = vmatpush1.msra.mxu0 0.0
    %3418 = vmatprep.subr.mxu0 0.0
    %3419 = vmatpush1.msra.mxu0 0.0
    %3420 = vmatprep.subr.mxu0 0.0
    %3421 = vmatpush1.msra.mxu0 0.0
    %3422 = vmatprep.subr.mxu0 0.0
    %3423 = vmatpush1.msra.mxu0 0.0
    %3424 = vmatprep.subr.mxu0 0.0
    %3425 = vmatpush1.msra.mxu0 0.0
    %3426 = vmatprep.subr.mxu0 0.0
    %3427 = vmatpush1.msra.mxu0 0.0
    %3428 = vmatprep.subr.mxu0 0.0
    %3429 = vmatpush1.msra.mxu0 0.0
    %3430 = vmatprep.subr.mxu0 0.0
    %3431 = vmatpush1.msra.mxu0 0.0
    %3432 = vmatprep.subr.mxu0 0.0
    %3433 = vmatpush1.msra.mxu0 0.0
    %3434 = vmatprep.subr.mxu0 0.0
    %3435 = vmatpush1.msra.mxu0 0.0
    %3436 = vmatprep.subr.mxu0 0.0
    %3437 = vmatpush1.msra.mxu0 0.0
    %3438 = vmatprep.mubr.f32.mxu0 0.0
    %3439 = vmatmul.mubr.f32.gmra.mrb[0].mxu0 %v3372
    %v3440 = vpop.f32.mrb[0].mxu0
    %v3441 = vadd.f32 0.0, %v3440
    %v3442 = vpop.f32.mrb[0].mxu0
    %3443 = vdwg.mxu0
    %3460 = vset.pattern.permute.xlu0 0
    %3461 = vperm.xlu0 %3460, %v2754
    %v3462 = vpop.permute.xlu0 %3461
    %3463 = vset.pattern.permute.xlu0 0
    %3464 = vperm.xlu0 %3463, %v2755
    %v3465 = vpop.permute.xlu0 %3464
    %3466 = vset.pattern.permute.xlu0 0
    %3467 = vperm.xlu0 %3466, %v2756
    %v3468 = vpop.permute.xlu0 %3467
    %3469 = vset.pattern.permute.xlu0 0
    %3470 = vperm.xlu0 %3469, %v2757
    %v3471 = vpop.permute.xlu0 %3470
    %3472 = vset.pattern.permute.xlu0 0
    %3473 = vperm.xlu0 %3472, %v2758
    %v3474 = vpop.permute.xlu0 %3473
    %3475 = vset.pattern.permute.xlu0 0
    %3476 = vperm.xlu0 %3475, %v2759
    %v3477 = vpop.permute.xlu0 %3476
    %3478 = vset.pattern.permute.xlu0 0
    %3479 = vperm.xlu0 %3478, %v2760
    %v3480 = vpop.permute.xlu0 %3479
    %3481 = vset.pattern.permute.xlu0 0
    %3482 = vperm.xlu0 %3481, %v2761
    %v3483 = vpop.permute.xlu0 %3482
    %3484 = vset.pattern.permute.xlu0 0
    %3485 = vperm.xlu0 %3484, %v2762
    %v3486 = vpop.permute.xlu0 %3485
    %3487 = vset.pattern.permute.xlu0 0
    %3488 = vperm.xlu0 %3487, %v2763
    %v3489 = vpop.permute.xlu0 %3488
    %3490 = vset.pattern.permute.xlu0 0
    %3491 = vperm.xlu0 %3490, %v2764
    %v3492 = vpop.permute.xlu0 %3491
    %3493 = vset.pattern.permute.xlu0 0
    %3494 = vperm.xlu0 %3493, %v2765
    %v3495 = vpop.permute.xlu0 %3494
    %3496 = vset.pattern.permute.xlu0 0
    %3497 = vperm.xlu0 %3496, %v2766
    %v3498 = vpop.permute.xlu0 %3497
    %3499 = vset.pattern.permute.xlu0 0
    %3500 = vperm.xlu0 %3499, %v2767
    %v3501 = vpop.permute.xlu0 %3500
    %3502 = vset.pattern.permute.xlu0 0
    %3503 = vperm.xlu0 %3502, %v2768
    %v3504 = vpop.permute.xlu0 %3503
    %3505 = vset.pattern.permute.xlu0 0
    %3506 = vperm.xlu0 %3505, %v2769
    %v3507 = vpop.permute.xlu0 %3506
    %v3508 = vlaneseq
    %v3509 = vshrl.u32 %v3508, 7
    %v3510 = vsub.s32 %v2835, %v3509
    %v3511 = vrot.slane %v3462, %v3510
    %v3512 = vlaneseq
    %v3513 = vshrl.u32 %v3512, 7
    %v3514 = vsub.s32 %v2840, %v3513
    %v3515 = vrot.slane %v3465, %v3514
    %v3516 = vsel %vm2845, %v3515, %v3511
    %v3517 = vlaneseq
    %v3518 = vshrl.u32 %v3517, 7
    %v3519 = vsub.s32 %v2847, %v3518
    %v3520 = vrot.slane %v3468, %v3519
    %v3521 = vsel %vm2852, %v3520, %v3516
    %v3522 = vlaneseq
    %v3523 = vshrl.u32 %v3522, 7
    %v3524 = vsub.s32 %v2854, %v3523
    %v3525 = vrot.slane %v3471, %v3524
    %v3526 = vsel %vm2859, %v3525, %v3521
    %v3527 = vlaneseq
    %v3528 = vshrl.u32 %v3527, 7
    %v3529 = vsub.s32 %v2861, %v3528
    %v3530 = vrot.slane %v3474, %v3529
    %v3531 = vsel %vm2866, %v3530, %v3526
    %v3532 = vlaneseq
    %v3533 = vshrl.u32 %v3532, 7
    %v3534 = vsub.s32 %v2868, %v3533
    %v3535 = vrot.slane %v3477, %v3534
    %v3536 = vsel %vm2873, %v3535, %v3531
    %v3537 = vlaneseq
    %v3538 = vshrl.u32 %v3537, 7
    %v3539 = vsub.s32 %v2875, %v3538
    %v3540 = vrot.slane %v3480, %v3539
    %v3541 = vsel %vm2880, %v3540, %v3536
    %v3542 = vlaneseq
    %v3543 = vshrl.u32 %v3542, 7
    %v3544 = vsub.s32 %v2882, %v3543
    %v3545 = vrot.slane %v3483, %v3544
    %v3546 = vsel %vm2887, %v3545, %v3541
    %v3547 = vlaneseq
    %v3548 = vshrl.u32 %v3547, 7
    %v3549 = vsub.s32 %v2889, %v3548
    %v3550 = vrot.slane %v3486, %v3549
    %v3551 = vsel %vm2894, %v3550, %v3546
    %v3552 = vlaneseq
    %v3553 = vshrl.u32 %v3552, 7
    %v3554 = vsub.s32 %v2896, %v3553
    %v3555 = vrot.slane %v3489, %v3554
    %v3556 = vsel %vm2901, %v3555, %v3551
    %v3557 = vlaneseq
    %v3558 = vshrl.u32 %v3557, 7
    %v3559 = vsub.s32 %v2903, %v3558
    %v3560 = vrot.slane %v3492, %v3559
    %v3561 = vsel %vm2908, %v3560, %v3556
    %v3562 = vlaneseq
    %v3563 = vshrl.u32 %v3562, 7
    %v3564 = vsub.s32 %v2910, %v3563
    %v3565 = vrot.slane %v3495, %v3564
    %v3566 = vsel %vm2915, %v3565, %v3561
    %v3567 = vlaneseq
    %v3568 = vshrl.u32 %v3567, 7
    %v3569 = vsub.s32 %v2917, %v3568
    %v3570 = vrot.slane %v3498, %v3569
    %v3571 = vsel %vm2922, %v3570, %v3566
    %v3572 = vlaneseq
    %v3573 = vshrl.u32 %v3572, 7
    %v3574 = vsub.s32 %v2924, %v3573
    %v3575 = vrot.slane %v3501, %v3574
    %v3576 = vsel %vm2929, %v3575, %v3571
    %v3577 = vlaneseq
    %v3578 = vshrl.u32 %v3577, 7
    %v3579 = vsub.s32 %v2931, %v3578
    %v3580 = vrot.slane %v3504, %v3579
    %v3581 = vsel %vm2936, %v3580, %v3576
    %v3582 = vlaneseq
    %v3583 = vshrl.u32 %v3582, 7
    %v3584 = vsub.s32 %v2938, %v3583
    %v3585 = vrot.slane %v3507, %v3584
    %v3586 = vsel %vm2943, %v3585, %v3581
    %3588 = vmatprep.subr.mxu0 0.0
    %3589 = vmatpush1.msra.mxu0 %v127
    %3590 = vmatprep.subr.mxu0 0.0
    %3591 = vmatpush1.msra.mxu0 %v128
    %3592 = vmatprep.subr.mxu0 0.0
    %3593 = vmatpush1.msra.mxu0 %v129
    %3594 = vmatprep.subr.mxu0 0.0
    %3595 = vmatpush1.msra.mxu0 %v130
    %3596 = vmatprep.subr.mxu0 0.0
    %3597 = vmatpush1.msra.mxu0 %v131
    %3598 = vmatprep.subr.mxu0 0.0
    %3599 = vmatpush1.msra.mxu0 %v132
    %3600 = vmatprep.subr.mxu0 0.0
    %3601 = vmatpush1.msra.mxu0 %v133
    %3602 = vmatprep.subr.mxu0 0.0
    %3603 = vmatpush1.msra.mxu0 %v134
    %3604 = vmatprep.subr.mxu0 0.0
    %3605 = vmatpush1.msra.mxu0 %v135
    %3606 = vmatprep.subr.mxu0 0.0
    %3607 = vmatpush1.msra.mxu0 %v136
    %3608 = vmatprep.subr.mxu0 0.0
    %3609 = vmatpush1.msra.mxu0 %v137
    %3610 = vmatprep.subr.mxu0 0.0
    %3611 = vmatpush1.msra.mxu0 %v138
    %3612 = vmatprep.subr.mxu0 0.0
    %3613 = vmatpush1.msra.mxu0 %v139
    %3614 = vmatprep.subr.mxu0 0.0
    %3615 = vmatpush1.msra.mxu0 %v140
    %3616 = vmatprep.subr.mxu0 0.0
    %3617 = vmatpush1.msra.mxu0 %v141
    %3618 = vmatprep.subr.mxu0 0.0
    %3619 = vmatpush1.msra.mxu0 %v142
    %3620 = vmatprep.subr.mxu0 0.0
    %3621 = vmatpush1.msra.mxu0 0.0
    %3622 = vmatprep.subr.mxu0 0.0
    %3623 = vmatpush1.msra.mxu0 0.0
    %3624 = vmatprep.subr.mxu0 0.0
    %3625 = vmatpush1.msra.mxu0 0.0
    %3626 = vmatprep.subr.mxu0 0.0
    %3627 = vmatpush1.msra.mxu0 0.0
    %3628 = vmatprep.subr.mxu0 0.0
    %3629 = vmatpush1.msra.mxu0 0.0
    %3630 = vmatprep.subr.mxu0 0.0
    %3631 = vmatpush1.msra.mxu0 0.0
    %3632 = vmatprep.subr.mxu0 0.0
    %3633 = vmatpush1.msra.mxu0 0.0
    %3634 = vmatprep.subr.mxu0 0.0
    %3635 = vmatpush1.msra.mxu0 0.0
    %3636 = vmatprep.subr.mxu0 0.0
    %3637 = vmatpush1.msra.mxu0 0.0
    %3638 = vmatprep.subr.mxu0 0.0
    %3639 = vmatpush1.msra.mxu0 0.0
    %3640 = vmatprep.subr.mxu0 0.0
    %3641 = vmatpush1.msra.mxu0 0.0
    %3642 = vmatprep.subr.mxu0 0.0
    %3643 = vmatpush1.msra.mxu0 0.0
    %3644 = vmatprep.subr.mxu0 0.0
    %3645 = vmatpush1.msra.mxu0 0.0
    %3646 = vmatprep.subr.mxu0 0.0
    %3647 = vmatpush1.msra.mxu0 0.0
    %3648 = vmatprep.subr.mxu0 0.0
    %3649 = vmatpush1.msra.mxu0 0.0
    %3650 = vmatprep.subr.mxu0 0.0
    %3651 = vmatpush1.msra.mxu0 0.0
    %3652 = vmatprep.mubr.f32.mxu0 0.0
    %3653 = vmatmul.mubr.f32.gmra.mrb[0].mxu0 %v3586
    %v3654 = vpop.f32.mrb[0].mxu0
    %v3655 = vadd.f32 0.0, %v3654
    %v3656 = vpop.f32.mrb[0].mxu0
    %3657 = vdwg.mxu0
    %v3658 = vmul.f32 %v3013, %v702
    %v3659 = vmul.f32 %v3227, %v703
    %v3660 = vmul.f32 %v3441, %v704
    %v3661 = vmul.f32 %v3655, %v705
    %3663 = vset.pattern.permute.xlu0 0
    %3664 = vperm.xlu0 %3663, %v221
    %v3665 = vpop.permute.xlu0 %3664
    %v3667 = vadd.f32 %v3658, %v3665
    %v3668 = vadd.f32 %v3659, %v3665
    %v3669 = vadd.f32 %v3660, %v3665
    %v3670 = vadd.f32 %v3661, %v3665
    %3671 = vst [vmem:[#allocation2] sm:$0x1] %v3667
    %3672 = vst [vmem:[#allocation2 + $0x1] sm:$0x1] %v3668
    %3673 = vst [vmem:[#allocation2 + $0x2] sm:$0x1] %v3669
    %3674 = vst [vmem:[#allocation2 + $0x3] sm:$0x1] %v3670
    // Predicated region
    $region14: #{tpu_custom_call.1} parent=1 // pred_check
      _
    $region15: #{tpu_custom_call.1} parent=1 // pred_check_branch
      %3676 = sbr.rel (0) target = $region17
    $region16: #{tpu_custom_call.1} parent=1 // pred_region
      %s3678 = ssub.s32 64, 64
      %3679 = vsyncadd [#allocation3], %s3678
      %s3680 = sshll.u32 [#allocation2], 4
      %s3681 = int_to_ptr.vmem [resolvable:$true] %s3680
      %3686 = dma.vmem_to_hbm [thread:$0]  %s3681, 64, %s3, [#allocation3], 16, 16, 1
    $region17: #{tpu_custom_call.1} parent=1 // pred_fallthru
      _
    // Predicated region
    $region18: #{tpu_custom_call.1} parent=1 // pred_check
      _
    $region19: #{tpu_custom_call.1} parent=1 // pred_check_branch
      %3688 = sbr.rel (0) target = $region21
    $region20: #{tpu_custom_call.1} parent=1 // pred_region
      %3689 = dma.done [#allocation3], 64
    $region21: #{tpu_custom_call.1} parent=1 // pred_fallthru
      _
    %3690 = vsyncpa [#allocation3], 1

</llo_original>
